<compile_context>
chip_gen: v6e
topology: v6e:2x2x1
jax: 0.10.0
libtpu: 0.0.40
codegen_flags: <defaults>
</compile_context>

<pallas_src>
import functools

import jax
import jax.numpy as jnp
from jax.experimental import pallas as pl
from jax.experimental.pallas import tpu as pltpu


def _round_up(x: int, m: int) -> int:
    return ((x + m - 1) // m) * m


def vae_decoder_kernel(z_ref, w1_ref, b1_ref, w2_ref, b2_ref, o_ref):
    # z_ref : (TB, z_dim) f32     w1_ref: (z_dim, H) f32     b1_ref: (1, H)     f32
    # w2_ref: (H, x_dim)  bf16    b2_ref: (1, x_dim) f32     o_ref : (TB, x_dim) f32
    # hidden = ReLU(z @ W1 + b1)  -- tiny K (=z_dim), kept in f32 for accuracy.
    h = jnp.dot(z_ref[...], w1_ref[...], preferred_element_type=jnp.float32)
    h = jnp.maximum(h + b1_ref[...], 0.0)
    # out = Sigmoid(hidden @ W2 + b2)  -- bf16 MXU inputs, f32 accumulate + epilogue.
    y = jnp.dot(h.astype(jnp.bfloat16), w2_ref[...],
                preferred_element_type=jnp.float32)
    o_ref[...] = jax.nn.sigmoid(y + b2_ref[...]).astype(o_ref.dtype)


def prepare_params(w1, b1, w2, b2):
    """One-time parameter prep, hoisted out of the per-call path.

    Only W2 (the dominant DMA, ~400 KB in bf16) is down-cast; W1 and the biases
    stay f32. Biases are reshaped to (1, dim) for broadcast inside the kernel.
    """
    return (jnp.asarray(w1, jnp.float32),
            jnp.asarray(b1, jnp.float32).reshape(1, -1),
            jnp.asarray(w2, jnp.bfloat16),
            jnp.asarray(b2, jnp.float32).reshape(1, -1))


def _pick_block_b(batch: int) -> int:
    """Per-generation batch tile: fewest grid steps on v5e/v6e, even split on v7x."""
    bp8 = max(8, _round_up(batch, 8))
    try:
        kind = jax.devices()[0].device_kind.lower()
    except Exception:
        kind = ""
    if "v7" in kind:
        # 2 TensorCores/chip: keep the grid length (a multiple of) 2.
        return min(512, max(8, _round_up((bp8 + 1) // 2, 8)))
    # v5e / v6e: a single TensorCore -> one big tile beats a multi-step grid.
    return min(512, bp8)


@functools.partial(jax.jit, static_argnames=("block_b",))
def _vae_decoder_call(z, w1, b1, w2, b2, *, block_b: int):
    BP, z_dim = z.shape
    hidden = w1.shape[1]
    x_dim = w2.shape[1]
    grid = (BP // block_b,)

    cost = pl.CostEstimate(
        flops=2 * BP * z_dim * hidden + 2 * BP * hidden * x_dim,
        transcendentals=BP * x_dim,
        bytes_accessed=(z.size * 4 + w1.size * 4 + b1.size * 4
                        + w2.size * 2 + b2.size * 4 + BP * x_dim * 4),
    )

    return pl.pallas_call(
        vae_decoder_kernel,
        out_shape=jax.ShapeDtypeStruct((BP, x_dim), jnp.float32),
        grid_spec=pltpu.PrefetchScalarGridSpec(
            num_scalar_prefetch=0,
            grid=grid,
            in_specs=[
                pl.BlockSpec((block_b, z_dim), lambda i: (i, 0)),  # z: streamed row-tiles
                pl.BlockSpec((z_dim, hidden), lambda i: (0, 0)),   # W1: VMEM-resident
                pl.BlockSpec((1, hidden), lambda i: (0, 0)),       # b1: VMEM-resident
                pl.BlockSpec((hidden, x_dim), lambda i: (0, 0)),   # W2: VMEM-resident
                pl.BlockSpec((1, x_dim), lambda i: (0, 0)),        # b2: VMEM-resident
            ],
            out_specs=pl.BlockSpec((block_b, x_dim), lambda i: (i, 0)),
        ),
        compiler_params=pltpu.CompilerParams(
            dimension_semantics=("parallel",),   # splits batch across TCs on v7x
            vmem_limit_bytes=32 * 1024 * 1024,   # headroom for 512-row tiles on v5e
        ),
        cost_estimate=cost,
    )(z, w1, b1, w2, b2)


def vae_decoder(z, params, *, block_b=None):
    """z: (B, z_dim) f32, params from prepare_params -> (B, x_dim) f32."""
    w1, b1, w2, b2 = params
    z = jnp.asarray(z, jnp.float32)
    B = z.shape[0]
    if block_b is None:
        block_b = _pick_block_b(B)
    BP = _round_up(max(B, 8), block_b)
    if BP != B:  # pad batch rows only (zeros); sliced off below. No feature padding.
        z = jnp.pad(z, ((0, BP - B), (0, 0)))
    out = _vae_decoder_call(z, w1, b1, w2, b2, block_b=block_b)
    return out if BP == B else out[:B]


def init_params(key, z_dim, hidden_size, x_dim):
    """Deterministic param init (uniform +-1/sqrt(fan_in), like torch Linear)."""
    k1, k2, k3, k4 = jax.random.split(key, 4)
    lim1 = 1.0 / jnp.sqrt(z_dim)
    lim2 = 1.0 / jnp.sqrt(hidden_size)
    w1 = jax.random.uniform(k1, (z_dim, hidden_size), jnp.float32, -lim1, lim1)
    b1 = jax.random.uniform(k2, (hidden_size,), jnp.float32, -lim1, lim1)
    w2 = jax.random.uniform(k3, (hidden_size, x_dim), jnp.float32, -lim2, lim2)
    b2 = jax.random.uniform(k4, (x_dim,), jnp.float32, -lim2, lim2)
    return w1, b1, w2, b2


if __name__ == "__main__":
    # Module-implied dims: z_dim=10, hidden=256, x_dim=28*28. Batch 256 keeps the
    # kernel small but still exercises the row grid (2 tiles on v7x, 1 elsewhere).
    B, z_dim, hidden_size, x_dim = 256, 10, 256, 28 * 28

    key = jax.random.PRNGKey(0)
    kz, kp = jax.random.split(key)
    z = jax.random.normal(kz, (B, z_dim), dtype=jnp.float32)
    w1, b1, w2, b2 = init_params(kp, z_dim, hidden_size, x_dim)

    params = prepare_params(w1, b1, w2, b2)   # one-time cast, off the decode path
    out = vae_decoder(z, params)
    jax.block_until_ready(out)
    assert out.shape == (B, x_dim), out.shape

    hi = jax.lax.Precision.HIGHEST
    # Reference 1: mirror the kernel's mixed-precision path (f32 GEMM #1, bf16 W2).
    h_ref = jnp.maximum(jnp.dot(z, w1, precision=hi) + b1[None, :], 0.0)
    ref_mixed = jax.nn.sigmoid(
        jnp.dot(h_ref.astype(jnp.bfloat16), w2.astype(jnp.bfloat16),
                preferred_element_type=jnp.float32) + b2[None, :])
    assert jnp.allclose(out, ref_mixed, atol=5e-3, rtol=5e-3)

    # Reference 2: full-f32 semantics of the torch nn.Sequential (loose: bf16 W2).
    ref_f32 = jax.nn.sigmoid(
        jnp.dot(h_ref, w2, precision=hi) + b2[None, :])
    assert jnp.allclose(out, ref_f32, atol=2e-2)

    print("KERNEL_OK")
</pallas_src>

<mosaic_0001>
module attributes {stable_mosaic.version = 11 : i64} {
  func.func @vae_decoder_kernel(%arg0: i32, %arg1: memref<256x10xf32, #tpu.memory_space<vmem>>, %arg2: memref<10x256xf32, #tpu.memory_space<vmem>>, %arg3: memref<1x256xf32, #tpu.memory_space<vmem>>, %arg4: memref<256x784xbf16, #tpu.memory_space<vmem>>, %arg5: memref<1x784xf32, #tpu.memory_space<vmem>>, %arg6: memref<256x784xf32, #tpu.memory_space<vmem>>) attributes {dimension_semantics = [#tpu.dimension_semantics<parallel>], iteration_bounds = array<i64: 1>, scalar_prefetch = 0 : i64, scratch_operands = 0 : i64, tpu.core_type = #tpu.core_type<tc>, window_params = [{transform_indices = @transform_0, window_bounds = array<i64: 256, 10>}, {pipeline_mode = #tpu.pipeline_mode<synchronous>, transform_indices = @transform_1, window_bounds = array<i64: 10, 256>}, {pipeline_mode = #tpu.pipeline_mode<synchronous>, transform_indices = @transform_2, window_bounds = array<i64: 1, 256>}, {pipeline_mode = #tpu.pipeline_mode<synchronous>, transform_indices = @transform_3, window_bounds = array<i64: 256, 784>}, {pipeline_mode = #tpu.pipeline_mode<synchronous>, transform_indices = @transform_4, window_bounds = array<i64: 1, 784>}, {transform_indices = @transform_5, window_bounds = array<i64: 256, 784>}]} {
    %c0 = arith.constant 0 : index
    %c0_0 = arith.constant 0 : index
    %0 = vector.load %arg1[%c0, %c0_0] : memref<256x10xf32, #tpu.memory_space<vmem>>, vector<256x10xf32>
    %c0_1 = arith.constant 0 : index
    %c0_2 = arith.constant 0 : index
    %1 = vector.load %arg2[%c0_1, %c0_2] : memref<10x256xf32, #tpu.memory_space<vmem>>, vector<10x256xf32>
    %cst = arith.constant dense<0.000000e+00> : vector<256x256xf32>
    %2 = tpu.matmul %0, %1, %cst {dimension_numbers = #tpu.dot_dimension_numbers<[1], [0], [0], [1], [0, 0, 1, 1], [], []>} : vector<256x10xf32>, vector<10x256xf32>, vector<256x256xf32> -> vector<256x256xf32>
    %c0_3 = arith.constant 0 : index
    %c0_4 = arith.constant 0 : index
    %3 = vector.load %arg3[%c0_3, %c0_4] : memref<1x256xf32, #tpu.memory_space<vmem>>, vector<1x256xf32>
    %4 = vector.broadcast %3 : vector<1x256xf32> to vector<256x256xf32>
    %5 = arith.addf %2, %4 : vector<256x256xf32>
    %cst_5 = arith.constant 0.000000e+00 : f32
    %6 = vector.broadcast %cst_5 : f32 to vector<256x256xf32>
    %7 = arith.maximumf %5, %6 : vector<256x256xf32>
    %8 = arith.truncf %7 : vector<256x256xf32> to vector<256x256xbf16>
    %c0_6 = arith.constant 0 : index
    %c0_7 = arith.constant 0 : index
    %9 = vector.load %arg4[%c0_6, %c0_7] : memref<256x784xbf16, #tpu.memory_space<vmem>>, vector<256x784xbf16>
    %cst_8 = arith.constant dense<0.000000e+00> : vector<256x784xf32>
    %10 = tpu.matmul %8, %9, %cst_8 {dimension_numbers = #tpu.dot_dimension_numbers<[1], [0], [0], [1], [0, 0, 1, 1], [], []>} : vector<256x256xbf16>, vector<256x784xbf16>, vector<256x784xf32> -> vector<256x784xf32>
    %c0_9 = arith.constant 0 : index
    %c0_10 = arith.constant 0 : index
    %11 = vector.load %arg5[%c0_9, %c0_10] : memref<1x784xf32, #tpu.memory_space<vmem>>, vector<1x784xf32>
    %12 = vector.broadcast %11 : vector<1x784xf32> to vector<256x784xf32>
    %13 = arith.addf %10, %12 : vector<256x784xf32>
    %14 = arith.negf %13 : vector<256x784xf32>
    %15 = math.exp %14 : vector<256x784xf32>
    %cst_11 = arith.constant 1.000000e+00 : f32
    %16 = vector.broadcast %cst_11 : f32 to vector<256x784xf32>
    %17 = arith.addf %16, %15 : vector<256x784xf32>
    %18 = arith.divf %16, %17 : vector<256x784xf32>
    %c0_12 = arith.constant 0 : index
    %c0_13 = arith.constant 0 : index
    %19 = vector.load %arg6[%c0_12, %c0_13] : memref<256x784xf32, #tpu.memory_space<vmem>>, vector<256x784xf32>
    tpu.vector_store %arg6[%c0_12, %c0_13], %18 {strides = array<i32>} : memref<256x784xf32, #tpu.memory_space<vmem>>, vector<256x784xf32>,
    return
  }
  func.func @transform_0(%arg0: i32) -> (i32, i32) {
    %c0_i32 = arith.constant 0 : i32
    %c0_i32_0 = arith.constant 0 : i32
    return %arg0, %c0_i32 : i32, i32
  }
  func.func @transform_1(%arg0: i32) -> (i32, i32) {
    %c0_i32 = arith.constant 0 : i32
    %c0_i32_0 = arith.constant 0 : i32
    %c0_i32_1 = arith.constant 0 : i32
    return %c0_i32, %c0_i32_0 : i32, i32
  }
  func.func @transform_2(%arg0: i32) -> (i32, i32) {
    %c0_i32 = arith.constant 0 : i32
    %c0_i32_0 = arith.constant 0 : i32
    %c0_i32_1 = arith.constant 0 : i32
    return %c0_i32, %c0_i32_0 : i32, i32
  }
  func.func @transform_3(%arg0: i32) -> (i32, i32) {
    %c0_i32 = arith.constant 0 : i32
    %c0_i32_0 = arith.constant 0 : i32
    %c0_i32_1 = arith.constant 0 : i32
    return %c0_i32, %c0_i32_0 : i32, i32
  }
  func.func @transform_4(%arg0: i32) -> (i32, i32) {
    %c0_i32 = arith.constant 0 : i32
    %c0_i32_0 = arith.constant 0 : i32
    %c0_i32_1 = arith.constant 0 : i32
    return %c0_i32, %c0_i32_0 : i32, i32
  }
  func.func @transform_5(%arg0: i32) -> (i32, i32) {
    %c0_i32 = arith.constant 0 : i32
    %c0_i32_0 = arith.constant 0 : i32
    return %arg0, %c0_i32 : i32, i32
  }
}

</mosaic_0001>

<llo_original>
// kernel: _vae_decoder_call.1
$region0: #{_vae_decoder_call.1}
  #allocation0 [shape = 'u32[]', space=smem, size = 0x4, offset = 0x4, fixed_abs, tag = 'smem constant byte address 0x4 - core index']
  #allocation1 [shape = 'u32[144,128]{1,0:T(1,128)}', space=vmem, size = 0x12000, scoped, tag = 'internal scratch']
  %s0 = inlined_call_operand.vmem [shape: f32[256,10], index: 0, kind: input, shape index: {}]
  %s1 = inlined_call_operand.vmem [shape: f32[10,256], index: 1, kind: input, shape index: {}]
  %s2 = inlined_call_operand.vmem [shape: f32[1,256], index: 2, kind: input, shape index: {}]
  %s3 = inlined_call_operand.vmem [shape: bf16[256,784], index: 3, kind: input, shape index: {}]
  %s4 = inlined_call_operand.vmem [shape: f32[1,784], index: 4, kind: input, shape index: {}]
  %s5 = inlined_call_operand.vmem [shape: f32[256,784], index: 5, kind: output, shape index: {}]
  %s6 = sld [smem:[#allocation0]]
  $region30: #{_vae_decoder_call.1} parent=0
    _
  %s8 = ssub.s32 1, %s6
  %s9 = scalar_select 0, %s8, %s6
  // Predicated region
  $region2: #{_vae_decoder_call.1} parent=0 // pred_check
    _
  $region3: #{_vae_decoder_call.1} parent=0 // pred_check_branch
    %11 = sbr.rel (0) target = $region5
  $region4: #{_vae_decoder_call.1} parent=0 // pred_region
    _
  $region5: #{_vae_decoder_call.1} parent=0 // pred_fallthru
    _
  // Predicated region
  $region6: #{_vae_decoder_call.1} parent=0 // pred_check
    _
  $region7: #{_vae_decoder_call.1} parent=0 // pred_check_branch
    %13 = sbr.rel (0) target = $region9
  $region8: #{_vae_decoder_call.1} parent=0 // pred_region
    _
  $region9: #{_vae_decoder_call.1} parent=0 // pred_fallthru
    _
  // Predicated region
  $region10: #{_vae_decoder_call.1} parent=0 // pred_check
    _
  $region11: #{_vae_decoder_call.1} parent=0 // pred_check_branch
    %15 = sbr.rel (0) target = $region13
  $region12: #{_vae_decoder_call.1} parent=0 // pred_region
    _
  $region13: #{_vae_decoder_call.1} parent=0 // pred_fallthru
    _
  // Predicated region
  $region14: #{_vae_decoder_call.1} parent=0 // pred_check
    _
  $region15: #{_vae_decoder_call.1} parent=0 // pred_check_branch
    %17 = sbr.rel (0) target = $region17
  $region16: #{_vae_decoder_call.1} parent=0 // pred_region
    _
  $region17: #{_vae_decoder_call.1} parent=0 // pred_fallthru
    _
  // Predicated region
  $region18: #{_vae_decoder_call.1} parent=0 // pred_check
    _
  $region19: #{_vae_decoder_call.1} parent=0 // pred_check_branch
    %19 = sbr.rel (0) target = $region21
  $region20: #{_vae_decoder_call.1} parent=0 // pred_region
    _
  $region21: #{_vae_decoder_call.1} parent=0 // pred_fallthru
    _
  %v21 = vld [vmem:[%s0] sm:$0xff]
  %v22 = vld [vmem:[%s0 + $0x8] sm:$0xff]
  %v23 = vld [vmem:[%s0 + $0x10] sm:$0xff]
  %v24 = vld [vmem:[%s0 + $0x18] sm:$0xff]
  %v25 = vld [vmem:[%s0 + $0x20] sm:$0xff]
  %v26 = vld [vmem:[%s0 + $0x28] sm:$0xff]
  %v27 = vld [vmem:[%s0 + $0x30] sm:$0xff]
  %v28 = vld [vmem:[%s0 + $0x38] sm:$0xff]
  %v29 = vld [vmem:[%s0 + $0x40] sm:$0xff]
  %v30 = vld [vmem:[%s0 + $0x48] sm:$0xff]
  %v31 = vld [vmem:[%s0 + $0x50] sm:$0xff]
  %v32 = vld [vmem:[%s0 + $0x58] sm:$0xff]
  %v33 = vld [vmem:[%s0 + $0x60] sm:$0xff]
  %v34 = vld [vmem:[%s0 + $0x68] sm:$0xff]
  %v35 = vld [vmem:[%s0 + $0x70] sm:$0xff]
  %v36 = vld [vmem:[%s0 + $0x78] sm:$0xff]
  %v37 = vld [vmem:[%s0 + $0x80] sm:$0xff]
  %v38 = vld [vmem:[%s0 + $0x88] sm:$0xff]
  %v39 = vld [vmem:[%s0 + $0x90] sm:$0xff]
  %v40 = vld [vmem:[%s0 + $0x98] sm:$0xff]
  %v41 = vld [vmem:[%s0 + $0xa0] sm:$0xff]
  %v42 = vld [vmem:[%s0 + $0xa8] sm:$0xff]
  %v43 = vld [vmem:[%s0 + $0xb0] sm:$0xff]
  %v44 = vld [vmem:[%s0 + $0xb8] sm:$0xff]
  %v45 = vld [vmem:[%s0 + $0xc0] sm:$0xff]
  %v46 = vld [vmem:[%s0 + $0xc8] sm:$0xff]
  %v47 = vld [vmem:[%s0 + $0xd0] sm:$0xff]
  %v48 = vld [vmem:[%s0 + $0xd8] sm:$0xff]
  %v49 = vld [vmem:[%s0 + $0xe0] sm:$0xff]
  %v50 = vld [vmem:[%s0 + $0xe8] sm:$0xff]
  %v51 = vld [vmem:[%s0 + $0xf0] sm:$0xff]
  %v52 = vld [vmem:[%s0 + $0xf8] sm:$0xff]
  %v53 = vld [vmem:[%s1] sm:$0xff]
  %v54 = vld [vmem:[%s1 + $0x8] sm:$0xff]
  %v55 = vld [vmem:[%s1 + $0x10] sm:$0x3]
  %v56 = vld [vmem:[%s1 + $0x18] sm:$0x3]
  %v57 = vld [vmem:[%s2] sm:$0x3]
  %v59 = vlaneseq
  %v60 = vshrl.u32 %v59, 7
  %v61 = vsub.s32 0, %v60
  %v62 = vrot.slane %v57, %v61
  %v63 = vlaneseq
  %v64 = vshrl.u32 %v63, 7
  %v65 = vsub.s32 1, %v64
  %v66 = vrot.slane %v57, %v65
  %vm69 = vcmask 80896
  %v71 = vsel %vm69, %v21, 0
  %v74 = vsel %vm69, %v22, 0
  %v77 = vsel %vm69, %v23, 0
  %v80 = vsel %vm69, %v24, 0
  %v83 = vsel %vm69, %v25, 0
  %v86 = vsel %vm69, %v26, 0
  %v89 = vsel %vm69, %v27, 0
  %v92 = vsel %vm69, %v28, 0
  %v95 = vsel %vm69, %v29, 0
  %v98 = vsel %vm69, %v30, 0
  %v101 = vsel %vm69, %v31, 0
  %v104 = vsel %vm69, %v32, 0
  %v107 = vsel %vm69, %v33, 0
  %v110 = vsel %vm69, %v34, 0
  %v113 = vsel %vm69, %v35, 0
  %v116 = vsel %vm69, %v36, 0
  %v119 = vsel %vm69, %v37, 0
  %v122 = vsel %vm69, %v38, 0
  %v125 = vsel %vm69, %v39, 0
  %v128 = vsel %vm69, %v40, 0
  %v131 = vsel %vm69, %v41, 0
  %v134 = vsel %vm69, %v42, 0
  %v137 = vsel %vm69, %v43, 0
  %v140 = vsel %vm69, %v44, 0
  %v143 = vsel %vm69, %v45, 0
  %v146 = vsel %vm69, %v46, 0
  %v149 = vsel %vm69, %v47, 0
  %v152 = vsel %vm69, %v48, 0
  %v155 = vsel %vm69, %v49, 0
  %v158 = vsel %vm69, %v50, 0
  %v161 = vsel %vm69, %v51, 0
  %v164 = vsel %vm69, %v52, 0
  %vm166 = vcmask 1041408
  %v168 = vsel %vm166, %v55, 0
  %v171 = vsel %vm166, %v56, 0
  %173 = vmatprep.subr.mxu0 0.0
  %174 = vmatpush1.msra.mxu0 0.0
  %175 = vmatprep.subr.mxu0 0.0
  %176 = vmatpush1.msra.mxu0 0.0
  %177 = vmatprep.subr.mxu0 0.0
  %178 = vmatpush1.msra.mxu0 0.0
  %179 = vmatprep.subr.mxu0 0.0
  %180 = vmatpush1.msra.mxu0 0.0
  %181 = vmatprep.subr.mxu0 0.0
  %182 = vmatpush1.msra.mxu0 0.0
  %183 = vmatprep.subr.mxu0 0.0
  %184 = vmatpush1.msra.mxu0 0.0
  %185 = vmatprep.subr.mxu0 0.0
  %186 = vmatpush1.msra.mxu0 0.0
  %187 = vmatprep.subr.mxu0 0.0
  %188 = vmatpush1.msra.mxu0 0.0
  %189 = vmatprep.subr.mxu0 0.0
  %190 = vmatpush1.msra.mxu0 0.0
  %191 = vmatprep.subr.mxu0 0.0
  %192 = vmatpush1.msra.mxu0 0.0
  %193 = vmatprep.subr.mxu0 0.0
  %194 = vmatpush1.msra.mxu0 0.0
  %195 = vmatprep.subr.mxu0 0.0
  %196 = vmatpush1.msra.mxu0 0.0
  %197 = vmatprep.subr.mxu0 0.0
  %198 = vmatpush1.msra.mxu0 0.0
  %199 = vmatprep.subr.mxu0 0.0
  %200 = vmatpush1.msra.mxu0 0.0
  %201 = vmatprep.subr.mxu0 %v171
  %202 = vmatpush1.msra.mxu0 %v168
  %203 = vmatprep.subr.mxu0 %v54
  %204 = vmatpush1.msra.mxu0 %v53
  %205 = vmatprep.subr.mxu0 0.0
  %206 = vmatpush2.msra.mxu0 0.0
  %207 = vmatprep.subr.mxu0 0.0
  %208 = vmatpush2.msra.mxu0 0.0
  %209 = vmatprep.subr.mxu0 0.0
  %210 = vmatpush2.msra.mxu0 0.0
  %211 = vmatprep.subr.mxu0 0.0
  %212 = vmatpush2.msra.mxu0 0.0
  %213 = vmatprep.subr.mxu0 0.0
  %214 = vmatpush2.msra.mxu0 0.0
  %215 = vmatprep.subr.mxu0 0.0
  %216 = vmatpush2.msra.mxu0 0.0
  %217 = vmatprep.subr.mxu0 0.0
  %218 = vmatpush2.msra.mxu0 0.0
  %219 = vmatprep.subr.mxu0 0.0
  %220 = vmatpush2.msra.mxu0 0.0
  %221 = vmatprep.subr.mxu0 0.0
  %222 = vmatpush2.msra.mxu0 0.0
  %223 = vmatprep.subr.mxu0 0.0
  %224 = vmatpush2.msra.mxu0 0.0
  %225 = vmatprep.subr.mxu0 0.0
  %226 = vmatpush2.msra.mxu0 0.0
  %227 = vmatprep.subr.mxu0 0.0
  %228 = vmatpush2.msra.mxu0 0.0
  %229 = vmatprep.subr.mxu0 0.0
  %230 = vmatpush2.msra.mxu0 0.0
  %231 = vmatprep.subr.mxu0 0.0
  %232 = vmatpush2.msra.mxu0 0.0
  %233 = vmatprep.subr.mxu0 0.0
  %234 = vmatpush2.msra.mxu0 0.0
  %235 = vmatprep.subr.mxu0 0.0
  %236 = vmatpush2.msra.mxu0 0.0
  %237 = vmatprep.mubr.f32.mxu0 0.0
  %238 = vmatmul.mubr.f32.gmra.mxu0 %v71
  %v239 = vpop.f32.mrf.mxu0
  %v240 = vadd.f32 %v62, %v239
  %v241 = vpop.f32.mrf.mxu0
  %v242 = vadd.f32 %v66, %v241
  %243 = vmatprep.mubr.f32.mxu0 0.0
  %244 = vmatmul.mubr.f32.gmra.mxu0 %v74
  %v245 = vpop.f32.mrf.mxu0
  %v246 = vadd.f32 %v62, %v245
  %v247 = vpop.f32.mrf.mxu0
  %v248 = vadd.f32 %v66, %v247
  %249 = vmatprep.mubr.f32.mxu0 0.0
  %250 = vmatmul.mubr.f32.gmra.mxu0 %v77
  %v251 = vpop.f32.mrf.mxu0
  %v252 = vadd.f32 %v62, %v251
  %v253 = vpop.f32.mrf.mxu0
  %v254 = vadd.f32 %v66, %v253
  %255 = vmatprep.mubr.f32.mxu0 0.0
  %256 = vmatmul.mubr.f32.gmra.mxu0 %v80
  %v257 = vpop.f32.mrf.mxu0
  %v258 = vadd.f32 %v62, %v257
  %v259 = vpop.f32.mrf.mxu0
  %v260 = vadd.f32 %v66, %v259
  %261 = vmatprep.mubr.f32.mxu0 0.0
  %262 = vmatmul.mubr.f32.gmra.mxu0 %v83
  %v263 = vpop.f32.mrf.mxu0
  %v264 = vadd.f32 %v62, %v263
  %v265 = vpop.f32.mrf.mxu0
  %v266 = vadd.f32 %v66, %v265
  %267 = vmatprep.mubr.f32.mxu0 0.0
  %268 = vmatmul.mubr.f32.gmra.mxu0 %v86
  %v269 = vpop.f32.mrf.mxu0
  %v270 = vadd.f32 %v62, %v269
  %v271 = vpop.f32.mrf.mxu0
  %v272 = vadd.f32 %v66, %v271
  %273 = vmatprep.mubr.f32.mxu0 0.0
  %274 = vmatmul.mubr.f32.gmra.mxu0 %v89
  %v275 = vpop.f32.mrf.mxu0
  %v276 = vadd.f32 %v62, %v275
  %v277 = vpop.f32.mrf.mxu0
  %v278 = vadd.f32 %v66, %v277
  %279 = vmatprep.mubr.f32.mxu0 0.0
  %280 = vmatmul.mubr.f32.gmra.mxu0 %v92
  %v281 = vpop.f32.mrf.mxu0
  %v282 = vadd.f32 %v62, %v281
  %v283 = vpop.f32.mrf.mxu0
  %v284 = vadd.f32 %v66, %v283
  %285 = vmatprep.mubr.f32.mxu0 0.0
  %286 = vmatmul.mubr.f32.gmra.mxu0 %v95
  %v287 = vpop.f32.mrf.mxu0
  %v288 = vadd.f32 %v62, %v287
  %v289 = vpop.f32.mrf.mxu0
  %v290 = vadd.f32 %v66, %v289
  %291 = vmatprep.mubr.f32.mxu0 0.0
  %292 = vmatmul.mubr.f32.gmra.mxu0 %v98
  %v293 = vpop.f32.mrf.mxu0
  %v294 = vadd.f32 %v62, %v293
  %v295 = vpop.f32.mrf.mxu0
  %v296 = vadd.f32 %v66, %v295
  %297 = vmatprep.mubr.f32.mxu0 0.0
  %298 = vmatmul.mubr.f32.gmra.mxu0 %v101
  %v299 = vpop.f32.mrf.mxu0
  %v300 = vadd.f32 %v62, %v299
  %v301 = vpop.f32.mrf.mxu0
  %v302 = vadd.f32 %v66, %v301
  %303 = vmatprep.mubr.f32.mxu0 0.0
  %304 = vmatmul.mubr.f32.gmra.mxu0 %v104
  %v305 = vpop.f32.mrf.mxu0
  %v306 = vadd.f32 %v62, %v305
  %v307 = vpop.f32.mrf.mxu0
  %v308 = vadd.f32 %v66, %v307
  %309 = vmatprep.mubr.f32.mxu0 0.0
  %310 = vmatmul.mubr.f32.gmra.mxu0 %v107
  %v311 = vpop.f32.mrf.mxu0
  %v312 = vadd.f32 %v62, %v311
  %v313 = vpop.f32.mrf.mxu0
  %v314 = vadd.f32 %v66, %v313
  %315 = vmatprep.mubr.f32.mxu0 0.0
  %316 = vmatmul.mubr.f32.gmra.mxu0 %v110
  %v317 = vpop.f32.mrf.mxu0
  %v318 = vadd.f32 %v62, %v317
  %v319 = vpop.f32.mrf.mxu0
  %v320 = vadd.f32 %v66, %v319
  %321 = vmatprep.mubr.f32.mxu0 0.0
  %322 = vmatmul.mubr.f32.gmra.mxu0 %v113
  %v323 = vpop.f32.mrf.mxu0
  %v324 = vadd.f32 %v62, %v323
  %v325 = vpop.f32.mrf.mxu0
  %v326 = vadd.f32 %v66, %v325
  %327 = vmatprep.mubr.f32.mxu0 0.0
  %328 = vmatmul.mubr.f32.gmra.mxu0 %v116
  %v329 = vpop.f32.mrf.mxu0
  %v330 = vadd.f32 %v62, %v329
  %v331 = vpop.f32.mrf.mxu0
  %v332 = vadd.f32 %v66, %v331
  %333 = vmatprep.mubr.f32.mxu0 0.0
  %334 = vmatmul.mubr.f32.gmra.mxu0 %v119
  %v335 = vpop.f32.mrf.mxu0
  %v336 = vadd.f32 %v62, %v335
  %v337 = vpop.f32.mrf.mxu0
  %v338 = vadd.f32 %v66, %v337
  %339 = vmatprep.mubr.f32.mxu0 0.0
  %340 = vmatmul.mubr.f32.gmra.mxu0 %v122
  %v341 = vpop.f32.mrf.mxu0
  %v342 = vadd.f32 %v62, %v341
  %v343 = vpop.f32.mrf.mxu0
  %v344 = vadd.f32 %v66, %v343
  %345 = vmatprep.mubr.f32.mxu0 0.0
  %346 = vmatmul.mubr.f32.gmra.mxu0 %v125
  %v347 = vpop.f32.mrf.mxu0
  %v348 = vadd.f32 %v62, %v347
  %v349 = vpop.f32.mrf.mxu0
  %v350 = vadd.f32 %v66, %v349
  %351 = vmatprep.mubr.f32.mxu0 0.0
  %352 = vmatmul.mubr.f32.gmra.mxu0 %v128
  %v353 = vpop.f32.mrf.mxu0
  %v354 = vadd.f32 %v62, %v353
  %v355 = vpop.f32.mrf.mxu0
  %v356 = vadd.f32 %v66, %v355
  %357 = vmatprep.mubr.f32.mxu0 0.0
  %358 = vmatmul.mubr.f32.gmra.mxu0 %v131
  %v359 = vpop.f32.mrf.mxu0
  %v360 = vadd.f32 %v62, %v359
  %v361 = vpop.f32.mrf.mxu0
  %v362 = vadd.f32 %v66, %v361
  %363 = vmatprep.mubr.f32.mxu0 0.0
  %364 = vmatmul.mubr.f32.gmra.mxu0 %v134
  %v365 = vpop.f32.mrf.mxu0
  %v366 = vadd.f32 %v62, %v365
  %v367 = vpop.f32.mrf.mxu0
  %v368 = vadd.f32 %v66, %v367
  %369 = vmatprep.mubr.f32.mxu0 0.0
  %370 = vmatmul.mubr.f32.gmra.mxu0 %v137
  %v371 = vpop.f32.mrf.mxu0
  %v372 = vadd.f32 %v62, %v371
  %v373 = vpop.f32.mrf.mxu0
  %v374 = vadd.f32 %v66, %v373
  %375 = vmatprep.mubr.f32.mxu0 0.0
  %376 = vmatmul.mubr.f32.gmra.mxu0 %v140
  %v377 = vpop.f32.mrf.mxu0
  %v378 = vadd.f32 %v62, %v377
  %v379 = vpop.f32.mrf.mxu0
  %v380 = vadd.f32 %v66, %v379
  %381 = vmatprep.mubr.f32.mxu0 0.0
  %382 = vmatmul.mubr.f32.gmra.mxu0 %v143
  %v383 = vpop.f32.mrf.mxu0
  %v384 = vadd.f32 %v62, %v383
  %v385 = vpop.f32.mrf.mxu0
  %v386 = vadd.f32 %v66, %v385
  %387 = vmatprep.mubr.f32.mxu0 0.0
  %388 = vmatmul.mubr.f32.gmra.mxu0 %v146
  %v389 = vpop.f32.mrf.mxu0
  %v390 = vadd.f32 %v62, %v389
  %v391 = vpop.f32.mrf.mxu0
  %v392 = vadd.f32 %v66, %v391
  %393 = vmatprep.mubr.f32.mxu0 0.0
  %394 = vmatmul.mubr.f32.gmra.mxu0 %v149
  %v395 = vpop.f32.mrf.mxu0
  %v396 = vadd.f32 %v62, %v395
  %v397 = vpop.f32.mrf.mxu0
  %v398 = vadd.f32 %v66, %v397
  %399 = vmatprep.mubr.f32.mxu0 0.0
  %400 = vmatmul.mubr.f32.gmra.mxu0 %v152
  %v401 = vpop.f32.mrf.mxu0
  %v402 = vadd.f32 %v62, %v401
  %v403 = vpop.f32.mrf.mxu0
  %v404 = vadd.f32 %v66, %v403
  %405 = vmatprep.mubr.f32.mxu0 0.0
  %406 = vmatmul.mubr.f32.gmra.mxu0 %v155
  %v407 = vpop.f32.mrf.mxu0
  %v408 = vadd.f32 %v62, %v407
  %v409 = vpop.f32.mrf.mxu0
  %v410 = vadd.f32 %v66, %v409
  %411 = vmatprep.mubr.f32.mxu0 0.0
  %412 = vmatmul.mubr.f32.gmra.mxu0 %v158
  %v413 = vpop.f32.mrf.mxu0
  %v414 = vadd.f32 %v62, %v413
  %v415 = vpop.f32.mrf.mxu0
  %v416 = vadd.f32 %v66, %v415
  %417 = vmatprep.mubr.f32.mxu0 0.0
  %418 = vmatmul.mubr.f32.gmra.mxu0 %v161
  %v419 = vpop.f32.mrf.mxu0
  %v420 = vadd.f32 %v62, %v419
  %v421 = vpop.f32.mrf.mxu0
  %v422 = vadd.f32 %v66, %v421
  %423 = vmatprep.mubr.f32.mxu0 0.0
  %424 = vmatmul.mubr.f32.gmra.mxu0 %v164
  %v425 = vpop.f32.mrf.mxu0
  %v426 = vadd.f32 %v62, %v425
  %v427 = vpop.f32.mrf.mxu0
  %v428 = vadd.f32 %v66, %v427
  %429 = vdwg.mxu0
  %v430 = vmax.f32 %v240, 0.0
  %v431 = vmax.f32 %v242, 0.0
  %v432 = vmax.f32 %v246, 0.0
  %v433 = vmax.f32 %v248, 0.0
  %v434 = vmax.f32 %v252, 0.0
  %v435 = vmax.f32 %v254, 0.0
  %v436 = vmax.f32 %v258, 0.0
  %v437 = vmax.f32 %v260, 0.0
  %v438 = vmax.f32 %v264, 0.0
  %v439 = vmax.f32 %v266, 0.0
  %v440 = vmax.f32 %v270, 0.0
  %v441 = vmax.f32 %v272, 0.0
  %v442 = vmax.f32 %v276, 0.0
  %v443 = vmax.f32 %v278, 0.0
  %v444 = vmax.f32 %v282, 0.0
  %v445 = vmax.f32 %v284, 0.0
  %v446 = vmax.f32 %v288, 0.0
  %v447 = vmax.f32 %v290, 0.0
  %v448 = vmax.f32 %v294, 0.0
  %v449 = vmax.f32 %v296, 0.0
  %v450 = vmax.f32 %v300, 0.0
  %v451 = vmax.f32 %v302, 0.0
  %v452 = vmax.f32 %v306, 0.0
  %v453 = vmax.f32 %v308, 0.0
  %v454 = vmax.f32 %v312, 0.0
  %v455 = vmax.f32 %v314, 0.0
  %v456 = vmax.f32 %v318, 0.0
  %v457 = vmax.f32 %v320, 0.0
  %v458 = vmax.f32 %v324, 0.0
  %v459 = vmax.f32 %v326, 0.0
  %v460 = vmax.f32 %v330, 0.0
  %v461 = vmax.f32 %v332, 0.0
  %v462 = vmax.f32 %v336, 0.0
  %v463 = vmax.f32 %v338, 0.0
  %v464 = vmax.f32 %v342, 0.0
  %v465 = vmax.f32 %v344, 0.0
  %v466 = vmax.f32 %v348, 0.0
  %v467 = vmax.f32 %v350, 0.0
  %v468 = vmax.f32 %v354, 0.0
  %v469 = vmax.f32 %v356, 0.0
  %v470 = vmax.f32 %v360, 0.0
  %v471 = vmax.f32 %v362, 0.0
  %v472 = vmax.f32 %v366, 0.0
  %v473 = vmax.f32 %v368, 0.0
  %v474 = vmax.f32 %v372, 0.0
  %v475 = vmax.f32 %v374, 0.0
  %v476 = vmax.f32 %v378, 0.0
  %v477 = vmax.f32 %v380, 0.0
  %v478 = vmax.f32 %v384, 0.0
  %v479 = vmax.f32 %v386, 0.0
  %v480 = vmax.f32 %v390, 0.0
  %v481 = vmax.f32 %v392, 0.0
  %v482 = vmax.f32 %v396, 0.0
  %v483 = vmax.f32 %v398, 0.0
  %v484 = vmax.f32 %v402, 0.0
  %v485 = vmax.f32 %v404, 0.0
  %v486 = vmax.f32 %v408, 0.0
  %v487 = vmax.f32 %v410, 0.0
  %v488 = vmax.f32 %v414, 0.0
  %v489 = vmax.f32 %v416, 0.0
  %v490 = vmax.f32 %v420, 0.0
  %v491 = vmax.f32 %v422, 0.0
  %v492 = vmax.f32 %v426, 0.0
  %v493 = vmax.f32 %v428, 0.0
  %v494 = vpack.c.bf16 %v432, %v430
  %v495 = vpack.c.bf16 %v433, %v431
  %v496 = vpack.c.bf16 %v436, %v434
  %v497 = vpack.c.bf16 %v437, %v435
  %v498 = vpack.c.bf16 %v440, %v438
  %v499 = vpack.c.bf16 %v441, %v439
  %v500 = vpack.c.bf16 %v444, %v442
  %v501 = vpack.c.bf16 %v445, %v443
  %v502 = vpack.c.bf16 %v448, %v446
  %v503 = vpack.c.bf16 %v449, %v447
  %v504 = vpack.c.bf16 %v452, %v450
  %v505 = vpack.c.bf16 %v453, %v451
  %v506 = vpack.c.bf16 %v456, %v454
  %v507 = vpack.c.bf16 %v457, %v455
  %v508 = vpack.c.bf16 %v460, %v458
  %v509 = vpack.c.bf16 %v461, %v459
  %v510 = vpack.c.bf16 %v464, %v462
  %v511 = vpack.c.bf16 %v465, %v463
  %v512 = vpack.c.bf16 %v468, %v466
  %v513 = vpack.c.bf16 %v469, %v467
  %v514 = vpack.c.bf16 %v472, %v470
  %v515 = vpack.c.bf16 %v473, %v471
  %v516 = vpack.c.bf16 %v476, %v474
  %v517 = vpack.c.bf16 %v477, %v475
  %v518 = vpack.c.bf16 %v480, %v478
  %v519 = vpack.c.bf16 %v481, %v479
  %v520 = vpack.c.bf16 %v484, %v482
  %v521 = vpack.c.bf16 %v485, %v483
  %v522 = vpack.c.bf16 %v488, %v486
  %v523 = vpack.c.bf16 %v489, %v487
  %v524 = vpack.c.bf16 %v492, %v490
  %v525 = vpack.c.bf16 %v493, %v491
  %v526 = vld [vmem:[%s3] sm:$0xff]
  %v527 = vld [vmem:[%s3 + $0x8] sm:$0xff]
  %v528 = vld [vmem:[%s3 + $0x10] sm:$0xff]
  %v529 = vld [vmem:[%s3 + $0x18] sm:$0xf]
  %v530 = vld [vmem:[%s3 + $0x1c] sm:$0xff]
  %v531 = vld [vmem:[%s3 + $0x24] sm:$0xff]
  %v532 = vld [vmem:[%s3 + $0x2c] sm:$0xff]
  %v533 = vld [vmem:[%s3 + $0x34] sm:$0xf]
  %v534 = vld [vmem:[%s3 + $0x38] sm:$0xff]
  %v535 = vld [vmem:[%s3 + $0x40] sm:$0xff]
  %v536 = vld [vmem:[%s3 + $0x48] sm:$0xff]
  %v537 = vld [vmem:[%s3 + $0x50] sm:$0xf]
  %v538 = vld [vmem:[%s3 + $0x54] sm:$0xff]
  %v539 = vld [vmem:[%s3 + $0x5c] sm:$0xff]
  %v540 = vld [vmem:[%s3 + $0x64] sm:$0xff]
  %v541 = vld [vmem:[%s3 + $0x6c] sm:$0xf]
  %v542 = vld [vmem:[%s3 + $0x70] sm:$0xff]
  %v543 = vld [vmem:[%s3 + $0x78] sm:$0xff]
  %v544 = vld [vmem:[%s3 + $0x80] sm:$0xff]
  %v545 = vld [vmem:[%s3 + $0x88] sm:$0xf]
  %v546 = vld [vmem:[%s3 + $0x8c] sm:$0xff]
  %v547 = vld [vmem:[%s3 + $0x94] sm:$0xff]
  %v548 = vld [vmem:[%s3 + $0x9c] sm:$0xff]
  %v549 = vld [vmem:[%s3 + $0xa4] sm:$0xf]
  %v550 = vld [vmem:[%s3 + $0xa8] sm:$0xff]
  %v551 = vld [vmem:[%s3 + $0xb0] sm:$0xff]
  %v552 = vld [vmem:[%s3 + $0xb8] sm:$0xff]
  %v553 = vld [vmem:[%s3 + $0xc0] sm:$0xf]
  %v554 = vld [vmem:[%s3 + $0xc4] sm:$0xff]
  %v555 = vld [vmem:[%s3 + $0xcc] sm:$0xff]
  %v556 = vld [vmem:[%s3 + $0xd4] sm:$0xff]
  %v557 = vld [vmem:[%s3 + $0xdc] sm:$0xf]
  %v558 = vld [vmem:[%s3 + $0xe0] sm:$0xff]
  %v559 = vld [vmem:[%s3 + $0xe8] sm:$0xff]
  %v560 = vld [vmem:[%s3 + $0xf0] sm:$0xff]
  %v561 = vld [vmem:[%s3 + $0xf8] sm:$0xf]
  %v562 = vld [vmem:[%s3 + $0xfc] sm:$0xff]
  %v563 = vld [vmem:[%s3 + $0x104] sm:$0xff]
  %v564 = vld [vmem:[%s3 + $0x10c] sm:$0xff]
  %v565 = vld [vmem:[%s3 + $0x114] sm:$0xf]
  %v566 = vld [vmem:[%s3 + $0x118] sm:$0xff]
  %v567 = vld [vmem:[%s3 + $0x120] sm:$0xff]
  %v568 = vld [vmem:[%s3 + $0x128] sm:$0xff]
  %v569 = vld [vmem:[%s3 + $0x130] sm:$0xf]
  %v570 = vld [vmem:[%s3 + $0x134] sm:$0xff]
  %v571 = vld [vmem:[%s3 + $0x13c] sm:$0xff]
  %v572 = vld [vmem:[%s3 + $0x144] sm:$0xff]
  %v573 = vld [vmem:[%s3 + $0x14c] sm:$0xf]
  %v574 = vld [vmem:[%s3 + $0x150] sm:$0xff]
  %v575 = vld [vmem:[%s3 + $0x158] sm:$0xff]
  %v576 = vld [vmem:[%s3 + $0x160] sm:$0xff]
  %v577 = vld [vmem:[%s3 + $0x168] sm:$0xf]
  %v578 = vld [vmem:[%s3 + $0x16c] sm:$0xff]
  %v579 = vld [vmem:[%s3 + $0x174] sm:$0xff]
  %v580 = vld [vmem:[%s3 + $0x17c] sm:$0xff]
  %v581 = vld [vmem:[%s3 + $0x184] sm:$0xf]
  %v582 = vld [vmem:[%s3 + $0x188] sm:$0xff]
  %v583 = vld [vmem:[%s3 + $0x190] sm:$0xff]
  %v584 = vld [vmem:[%s3 + $0x198] sm:$0xff]
  %v585 = vld [vmem:[%s3 + $0x1a0] sm:$0xf]
  %v586 = vld [vmem:[%s3 + $0x1a4] sm:$0xff]
  %v587 = vld [vmem:[%s3 + $0x1ac] sm:$0xff]
  %v588 = vld [vmem:[%s3 + $0x1b4] sm:$0xff]
  %v589 = vld [vmem:[%s3 + $0x1bc] sm:$0xf]
  %v590 = vld [vmem:[%s3 + $0x1c0] sm:$0xff]
  %v591 = vld [vmem:[%s3 + $0x1c8] sm:$0xff]
  %v592 = vld [vmem:[%s3 + $0x1d0] sm:$0xff]
  %v593 = vld [vmem:[%s3 + $0x1d8] sm:$0xf]
  %v594 = vld [vmem:[%s3 + $0x1dc] sm:$0xff]
  %v595 = vld [vmem:[%s3 + $0x1e4] sm:$0xff]
  %v596 = vld [vmem:[%s3 + $0x1ec] sm:$0xff]
  %v597 = vld [vmem:[%s3 + $0x1f4] sm:$0xf]
  %v598 = vld [vmem:[%s3 + $0x1f8] sm:$0xff]
  %v599 = vld [vmem:[%s3 + $0x200] sm:$0xff]
  %v600 = vld [vmem:[%s3 + $0x208] sm:$0xff]
  %v601 = vld [vmem:[%s3 + $0x210] sm:$0xf]
  %v602 = vld [vmem:[%s3 + $0x214] sm:$0xff]
  %v603 = vld [vmem:[%s3 + $0x21c] sm:$0xff]
  %v604 = vld [vmem:[%s3 + $0x224] sm:$0xff]
  %v605 = vld [vmem:[%s3 + $0x22c] sm:$0xf]
  %v606 = vld [vmem:[%s3 + $0x230] sm:$0xff]
  %v607 = vld [vmem:[%s3 + $0x238] sm:$0xff]
  %v608 = vld [vmem:[%s3 + $0x240] sm:$0xff]
  %v609 = vld [vmem:[%s3 + $0x248] sm:$0xf]
  %v610 = vld [vmem:[%s3 + $0x24c] sm:$0xff]
  %v611 = vld [vmem:[%s3 + $0x254] sm:$0xff]
  %v612 = vld [vmem:[%s3 + $0x25c] sm:$0xff]
  %v613 = vld [vmem:[%s3 + $0x264] sm:$0xf]
  %v614 = vld [vmem:[%s3 + $0x268] sm:$0xff]
  %v615 = vld [vmem:[%s3 + $0x270] sm:$0xff]
  %v616 = vld [vmem:[%s3 + $0x278] sm:$0xff]
  %v617 = vld [vmem:[%s3 + $0x280] sm:$0xf]
  %v618 = vld [vmem:[%s3 + $0x284] sm:$0xff]
  %v619 = vld [vmem:[%s3 + $0x28c] sm:$0xff]
  %v620 = vld [vmem:[%s3 + $0x294] sm:$0xff]
  %v621 = vld [vmem:[%s3 + $0x29c] sm:$0xf]
  %v622 = vld [vmem:[%s3 + $0x2a0] sm:$0xff]
  %v623 = vld [vmem:[%s3 + $0x2a8] sm:$0xff]
  %v624 = vld [vmem:[%s3 + $0x2b0] sm:$0xff]
  %v625 = vld [vmem:[%s3 + $0x2b8] sm:$0xf]
  %v626 = vld [vmem:[%s3 + $0x2bc] sm:$0xff]
  %v627 = vld [vmem:[%s3 + $0x2c4] sm:$0xff]
  %v628 = vld [vmem:[%s3 + $0x2cc] sm:$0xff]
  %v629 = vld [vmem:[%s3 + $0x2d4] sm:$0xf]
  %v630 = vld [vmem:[%s3 + $0x2d8] sm:$0xff]
  %v631 = vld [vmem:[%s3 + $0x2e0] sm:$0xff]
  %v632 = vld [vmem:[%s3 + $0x2e8] sm:$0xff]
  %v633 = vld [vmem:[%s3 + $0x2f0] sm:$0xf]
  %v634 = vld [vmem:[%s3 + $0x2f4] sm:$0xff]
  %v635 = vld [vmem:[%s3 + $0x2fc] sm:$0xff]
  %v636 = vld [vmem:[%s3 + $0x304] sm:$0xff]
  %v637 = vld [vmem:[%s3 + $0x30c] sm:$0xf]
  %v638 = vld [vmem:[%s3 + $0x310] sm:$0xff]
  %v639 = vld [vmem:[%s3 + $0x318] sm:$0xff]
  %v640 = vld [vmem:[%s3 + $0x320] sm:$0xff]
  %v641 = vld [vmem:[%s3 + $0x328] sm:$0xf]
  %v642 = vld [vmem:[%s3 + $0x32c] sm:$0xff]
  %v643 = vld [vmem:[%s3 + $0x334] sm:$0xff]
  %v644 = vld [vmem:[%s3 + $0x33c] sm:$0xff]
  %v645 = vld [vmem:[%s3 + $0x344] sm:$0xf]
  %v646 = vld [vmem:[%s3 + $0x348] sm:$0xff]
  %v647 = vld [vmem:[%s3 + $0x350] sm:$0xff]
  %v648 = vld [vmem:[%s3 + $0x358] sm:$0xff]
  %v649 = vld [vmem:[%s3 + $0x360] sm:$0xf]
  %v650 = vld [vmem:[%s3 + $0x364] sm:$0xff]
  %v651 = vld [vmem:[%s3 + $0x36c] sm:$0xff]
  %v652 = vld [vmem:[%s3 + $0x374] sm:$0xff]
  %v653 = vld [vmem:[%s3 + $0x37c] sm:$0xf]
  %v654 = vld [vmem:[%s4] sm:$0x7f]
  %v656 = vlaneseq
  %v657 = vshrl.u32 %v656, 7
  %v658 = vsub.s32 0, %v657
  %v659 = vrot.slane %v654, %v658
  %v660 = vlaneseq
  %v661 = vshrl.u32 %v660, 7
  %v662 = vsub.s32 1, %v661
  %v663 = vrot.slane %v654, %v662
  %v664 = vlaneseq
  %v665 = vshrl.u32 %v664, 7
  %v666 = vsub.s32 2, %v665
  %v667 = vrot.slane %v654, %v666
  %v668 = vlaneseq
  %v669 = vshrl.u32 %v668, 7
  %v670 = vsub.s32 3, %v669
  %v671 = vrot.slane %v654, %v670
  %v672 = vlaneseq
  %v673 = vshrl.u32 %v672, 7
  %v674 = vsub.s32 4, %v673
  %v675 = vrot.slane %v654, %v674
  %v676 = vlaneseq
  %v677 = vshrl.u32 %v676, 7
  %v678 = vsub.s32 5, %v677
  %v679 = vrot.slane %v654, %v678
  %v680 = vlaneseq
  %v681 = vshrl.u32 %v680, 7
  %v682 = vsub.s32 6, %v681
  %v683 = vrot.slane %v654, %v682
  %v819 = vunpack.c.l.b16 %v526
  %v820 = vunpack.c.h.b16 %v526
  %v821 = vunpack.c.l.b16 %v527
  %v822 = vunpack.c.h.b16 %v527
  %v823 = vunpack.c.l.b16 %v528
  %v824 = vunpack.c.h.b16 %v528
  %v825 = vunpack.c.l.b16 %v529
  %v826 = vunpack.c.l.b16 %v530
  %v827 = vunpack.c.h.b16 %v530
  %v828 = vunpack.c.l.b16 %v531
  %v829 = vunpack.c.h.b16 %v531
  %v830 = vunpack.c.l.b16 %v532
  %v831 = vunpack.c.h.b16 %v532
  %v832 = vunpack.c.l.b16 %v533
  %v833 = vunpack.c.l.b16 %v534
  %v834 = vunpack.c.h.b16 %v534
  %v835 = vunpack.c.l.b16 %v535
  %v836 = vunpack.c.h.b16 %v535
  %v837 = vunpack.c.l.b16 %v536
  %v838 = vunpack.c.h.b16 %v536
  %v839 = vunpack.c.l.b16 %v537
  %v840 = vunpack.c.l.b16 %v538
  %v841 = vunpack.c.h.b16 %v538
  %v842 = vunpack.c.l.b16 %v539
  %v843 = vunpack.c.h.b16 %v539
  %v844 = vunpack.c.l.b16 %v540
  %v845 = vunpack.c.h.b16 %v540
  %v846 = vunpack.c.l.b16 %v541
  %v847 = vunpack.c.l.b16 %v542
  %v848 = vunpack.c.h.b16 %v542
  %v849 = vunpack.c.l.b16 %v543
  %v850 = vunpack.c.h.b16 %v543
  %v851 = vunpack.c.l.b16 %v544
  %v852 = vunpack.c.h.b16 %v544
  %v853 = vunpack.c.l.b16 %v545
  %v854 = vunpack.c.l.b16 %v546
  %v855 = vunpack.c.h.b16 %v546
  %v856 = vunpack.c.l.b16 %v547
  %v857 = vunpack.c.h.b16 %v547
  %v858 = vunpack.c.l.b16 %v548
  %v859 = vunpack.c.h.b16 %v548
  %v860 = vunpack.c.l.b16 %v549
  %v861 = vunpack.c.l.b16 %v550
  %v862 = vunpack.c.h.b16 %v550
  %v863 = vunpack.c.l.b16 %v551
  %v864 = vunpack.c.h.b16 %v551
  %v865 = vunpack.c.l.b16 %v552
  %v866 = vunpack.c.h.b16 %v552
  %v867 = vunpack.c.l.b16 %v553
  %v868 = vunpack.c.l.b16 %v554
  %v869 = vunpack.c.h.b16 %v554
  %v870 = vunpack.c.l.b16 %v555
  %v871 = vunpack.c.h.b16 %v555
  %v872 = vunpack.c.l.b16 %v556
  %v873 = vunpack.c.h.b16 %v556
  %v874 = vunpack.c.l.b16 %v557
  %v875 = vunpack.c.l.b16 %v558
  %v876 = vunpack.c.h.b16 %v558
  %v877 = vunpack.c.l.b16 %v559
  %v878 = vunpack.c.h.b16 %v559
  %v879 = vunpack.c.l.b16 %v560
  %v880 = vunpack.c.h.b16 %v560
  %v881 = vunpack.c.l.b16 %v561
  %v882 = vunpack.c.l.b16 %v562
  %v883 = vunpack.c.h.b16 %v562
  %v884 = vunpack.c.l.b16 %v563
  %v885 = vunpack.c.h.b16 %v563
  %v886 = vunpack.c.l.b16 %v564
  %v887 = vunpack.c.h.b16 %v564
  %v888 = vunpack.c.l.b16 %v565
  %v889 = vunpack.c.l.b16 %v566
  %v890 = vunpack.c.h.b16 %v566
  %v891 = vunpack.c.l.b16 %v567
  %v892 = vunpack.c.h.b16 %v567
  %v893 = vunpack.c.l.b16 %v568
  %v894 = vunpack.c.h.b16 %v568
  %v895 = vunpack.c.l.b16 %v569
  %v896 = vunpack.c.l.b16 %v570
  %v897 = vunpack.c.h.b16 %v570
  %v898 = vunpack.c.l.b16 %v571
  %v899 = vunpack.c.h.b16 %v571
  %v900 = vunpack.c.l.b16 %v572
  %v901 = vunpack.c.h.b16 %v572
  %v902 = vunpack.c.l.b16 %v573
  %v903 = vunpack.c.l.b16 %v574
  %v904 = vunpack.c.h.b16 %v574
  %v905 = vunpack.c.l.b16 %v575
  %v906 = vunpack.c.h.b16 %v575
  %v907 = vunpack.c.l.b16 %v576
  %v908 = vunpack.c.h.b16 %v576
  %v909 = vunpack.c.l.b16 %v577
  %v910 = vunpack.c.l.b16 %v578
  %v911 = vunpack.c.h.b16 %v578
  %v912 = vunpack.c.l.b16 %v579
  %v913 = vunpack.c.h.b16 %v579
  %v914 = vunpack.c.l.b16 %v580
  %v915 = vunpack.c.h.b16 %v580
  %v916 = vunpack.c.l.b16 %v581
  %v917 = vunpack.c.l.b16 %v582
  %v918 = vunpack.c.h.b16 %v582
  %v919 = vunpack.c.l.b16 %v583
  %v920 = vunpack.c.h.b16 %v583
  %v921 = vunpack.c.l.b16 %v584
  %v922 = vunpack.c.h.b16 %v584
  %v923 = vunpack.c.l.b16 %v585
  %v924 = vunpack.c.l.b16 %v586
  %v925 = vunpack.c.h.b16 %v586
  %v926 = vunpack.c.l.b16 %v587
  %v927 = vunpack.c.h.b16 %v587
  %v928 = vunpack.c.l.b16 %v588
  %v929 = vunpack.c.h.b16 %v588
  %v930 = vunpack.c.l.b16 %v589
  %v931 = vunpack.c.l.b16 %v590
  %v932 = vunpack.c.h.b16 %v590
  %v933 = vunpack.c.l.b16 %v591
  %v934 = vunpack.c.h.b16 %v591
  %v935 = vunpack.c.l.b16 %v592
  %v936 = vunpack.c.h.b16 %v592
  %v937 = vunpack.c.l.b16 %v593
  %v938 = vunpack.c.l.b16 %v594
  %v939 = vunpack.c.h.b16 %v594
  %v940 = vunpack.c.l.b16 %v595
  %v941 = vunpack.c.h.b16 %v595
  %v942 = vunpack.c.l.b16 %v596
  %v943 = vunpack.c.h.b16 %v596
  %v944 = vunpack.c.l.b16 %v597
  %v945 = vunpack.c.l.b16 %v598
  %v946 = vunpack.c.h.b16 %v598
  %v947 = vunpack.c.l.b16 %v599
  %v948 = vunpack.c.h.b16 %v599
  %v949 = vunpack.c.l.b16 %v600
  %v950 = vunpack.c.h.b16 %v600
  %v951 = vunpack.c.l.b16 %v601
  %v952 = vunpack.c.l.b16 %v602
  %v953 = vunpack.c.h.b16 %v602
  %v954 = vunpack.c.l.b16 %v603
  %v955 = vunpack.c.h.b16 %v603
  %v956 = vunpack.c.l.b16 %v604
  %v957 = vunpack.c.h.b16 %v604
  %v958 = vunpack.c.l.b16 %v605
  %v959 = vunpack.c.l.b16 %v606
  %v960 = vunpack.c.h.b16 %v606
  %v961 = vunpack.c.l.b16 %v607
  %v962 = vunpack.c.h.b16 %v607
  %v963 = vunpack.c.l.b16 %v608
  %v964 = vunpack.c.h.b16 %v608
  %v965 = vunpack.c.l.b16 %v609
  %v966 = vunpack.c.l.b16 %v610
  %v967 = vunpack.c.h.b16 %v610
  %v968 = vunpack.c.l.b16 %v611
  %v969 = vunpack.c.h.b16 %v611
  %v970 = vunpack.c.l.b16 %v612
  %v971 = vunpack.c.h.b16 %v612
  %v972 = vunpack.c.l.b16 %v613
  %v973 = vunpack.c.l.b16 %v614
  %v974 = vunpack.c.h.b16 %v614
  %v975 = vunpack.c.l.b16 %v615
  %v976 = vunpack.c.h.b16 %v615
  %v977 = vunpack.c.l.b16 %v616
  %v978 = vunpack.c.h.b16 %v616
  %v979 = vunpack.c.l.b16 %v617
  %v980 = vunpack.c.l.b16 %v618
  %v981 = vunpack.c.h.b16 %v618
  %v982 = vunpack.c.l.b16 %v619
  %v983 = vunpack.c.h.b16 %v619
  %v984 = vunpack.c.l.b16 %v620
  %v985 = vunpack.c.h.b16 %v620
  %v986 = vunpack.c.l.b16 %v621
  %v987 = vunpack.c.l.b16 %v622
  %v988 = vunpack.c.h.b16 %v622
  %v989 = vunpack.c.l.b16 %v623
  %v990 = vunpack.c.h.b16 %v623
  %v991 = vunpack.c.l.b16 %v624
  %v992 = vunpack.c.h.b16 %v624
  %v993 = vunpack.c.l.b16 %v625
  %v994 = vunpack.c.l.b16 %v626
  %v995 = vunpack.c.h.b16 %v626
  %v996 = vunpack.c.l.b16 %v627
  %v997 = vunpack.c.h.b16 %v627
  %v998 = vunpack.c.l.b16 %v628
  %v999 = vunpack.c.h.b16 %v628
  %v1000 = vunpack.c.l.b16 %v629
  %v1001 = vunpack.c.l.b16 %v630
  %v1002 = vunpack.c.h.b16 %v630
  %v1003 = vunpack.c.l.b16 %v631
  %v1004 = vunpack.c.h.b16 %v631
  %v1005 = vunpack.c.l.b16 %v632
  %v1006 = vunpack.c.h.b16 %v632
  %v1007 = vunpack.c.l.b16 %v633
  %v1008 = vunpack.c.l.b16 %v634
  %v1009 = vunpack.c.h.b16 %v634
  %v1010 = vunpack.c.l.b16 %v635
  %v1011 = vunpack.c.h.b16 %v635
  %v1012 = vunpack.c.l.b16 %v636
  %v1013 = vunpack.c.h.b16 %v636
  %v1014 = vunpack.c.l.b16 %v637
  %v1015 = vunpack.c.l.b16 %v638
  %v1016 = vunpack.c.h.b16 %v638
  %v1017 = vunpack.c.l.b16 %v639
  %v1018 = vunpack.c.h.b16 %v639
  %v1019 = vunpack.c.l.b16 %v640
  %v1020 = vunpack.c.h.b16 %v640
  %v1021 = vunpack.c.l.b16 %v641
  %v1022 = vunpack.c.l.b16 %v642
  %v1023 = vunpack.c.h.b16 %v642
  %v1024 = vunpack.c.l.b16 %v643
  %v1025 = vunpack.c.h.b16 %v643
  %v1026 = vunpack.c.l.b16 %v644
  %v1027 = vunpack.c.h.b16 %v644
  %v1028 = vunpack.c.l.b16 %v645
  %v1029 = vunpack.c.l.b16 %v646
  %v1030 = vunpack.c.h.b16 %v646
  %v1031 = vunpack.c.l.b16 %v647
  %v1032 = vunpack.c.h.b16 %v647
  %v1033 = vunpack.c.l.b16 %v648
  %v1034 = vunpack.c.h.b16 %v648
  %v1035 = vunpack.c.l.b16 %v649
  %v1036 = vunpack.c.l.b16 %v650
  %v1037 = vunpack.c.h.b16 %v650
  %v1038 = vunpack.c.l.b16 %v651
  %v1039 = vunpack.c.h.b16 %v651
  %v1040 = vunpack.c.l.b16 %v652
  %v1041 = vunpack.c.h.b16 %v652
  %v1042 = vunpack.c.l.b16 %v653
  %v1043 = vpack.c.b16 %v826, %v819
  %v1044 = vpack.c.b16 %v827, %v820
  %v1045 = vpack.c.b16 %v828, %v821
  %v1046 = vpack.c.b16 %v829, %v822
  %v1047 = vpack.c.b16 %v830, %v823
  %v1048 = vpack.c.b16 %v831, %v824
  %v1049 = vpack.c.b16 %v832, %v825
  %v1050 = vpack.c.b16 %v840, %v833
  %v1051 = vpack.c.b16 %v841, %v834
  %v1052 = vpack.c.b16 %v842, %v835
  %v1053 = vpack.c.b16 %v843, %v836
  %v1054 = vpack.c.b16 %v844, %v837
  %v1055 = vpack.c.b16 %v845, %v838
  %v1056 = vpack.c.b16 %v846, %v839
  %v1057 = vpack.c.b16 %v854, %v847
  %v1058 = vpack.c.b16 %v855, %v848
  %v1059 = vpack.c.b16 %v856, %v849
  %v1060 = vpack.c.b16 %v857, %v850
  %v1061 = vpack.c.b16 %v858, %v851
  %v1062 = vpack.c.b16 %v859, %v852
  %v1063 = vpack.c.b16 %v860, %v853
  %v1064 = vpack.c.b16 %v868, %v861
  %v1065 = vpack.c.b16 %v869, %v862
  %v1066 = vpack.c.b16 %v870, %v863
  %v1067 = vpack.c.b16 %v871, %v864
  %v1068 = vpack.c.b16 %v872, %v865
  %v1069 = vpack.c.b16 %v873, %v866
  %v1070 = vpack.c.b16 %v874, %v867
  %v1071 = vpack.c.b16 %v882, %v875
  %v1072 = vpack.c.b16 %v883, %v876
  %v1073 = vpack.c.b16 %v884, %v877
  %v1074 = vpack.c.b16 %v885, %v878
  %v1075 = vpack.c.b16 %v886, %v879
  %v1076 = vpack.c.b16 %v887, %v880
  %v1077 = vpack.c.b16 %v888, %v881
  %v1078 = vpack.c.b16 %v896, %v889
  %v1079 = vpack.c.b16 %v897, %v890
  %v1080 = vpack.c.b16 %v898, %v891
  %v1081 = vpack.c.b16 %v899, %v892
  %v1082 = vpack.c.b16 %v900, %v893
  %v1083 = vpack.c.b16 %v901, %v894
  %v1084 = vpack.c.b16 %v902, %v895
  %v1085 = vpack.c.b16 %v910, %v903
  %v1086 = vpack.c.b16 %v911, %v904
  %v1087 = vpack.c.b16 %v912, %v905
  %v1088 = vpack.c.b16 %v913, %v906
  %v1089 = vpack.c.b16 %v914, %v907
  %v1090 = vpack.c.b16 %v915, %v908
  %v1091 = vpack.c.b16 %v916, %v909
  %v1092 = vpack.c.b16 %v924, %v917
  %v1093 = vpack.c.b16 %v925, %v918
  %v1094 = vpack.c.b16 %v926, %v919
  %v1095 = vpack.c.b16 %v927, %v920
  %v1096 = vpack.c.b16 %v928, %v921
  %v1097 = vpack.c.b16 %v929, %v922
  %v1098 = vpack.c.b16 %v930, %v923
  %v1099 = vpack.c.b16 %v938, %v931
  %v1100 = vpack.c.b16 %v939, %v932
  %v1101 = vpack.c.b16 %v940, %v933
  %v1102 = vpack.c.b16 %v941, %v934
  %v1103 = vpack.c.b16 %v942, %v935
  %v1104 = vpack.c.b16 %v943, %v936
  %v1105 = vpack.c.b16 %v944, %v937
  %v1106 = vpack.c.b16 %v952, %v945
  %v1107 = vpack.c.b16 %v953, %v946
  %v1108 = vpack.c.b16 %v954, %v947
  %v1109 = vpack.c.b16 %v955, %v948
  %v1110 = vpack.c.b16 %v956, %v949
  %v1111 = vpack.c.b16 %v957, %v950
  %v1112 = vpack.c.b16 %v958, %v951
  %v1113 = vpack.c.b16 %v966, %v959
  %v1114 = vpack.c.b16 %v967, %v960
  %v1115 = vpack.c.b16 %v968, %v961
  %v1116 = vpack.c.b16 %v969, %v962
  %v1117 = vpack.c.b16 %v970, %v963
  %v1118 = vpack.c.b16 %v971, %v964
  %v1119 = vpack.c.b16 %v972, %v965
  %v1120 = vpack.c.b16 %v980, %v973
  %v1121 = vpack.c.b16 %v981, %v974
  %v1122 = vpack.c.b16 %v982, %v975
  %v1123 = vpack.c.b16 %v983, %v976
  %v1124 = vpack.c.b16 %v984, %v977
  %v1125 = vpack.c.b16 %v985, %v978
  %v1126 = vpack.c.b16 %v986, %v979
  %v1127 = vpack.c.b16 %v994, %v987
  %v1128 = vpack.c.b16 %v995, %v988
  %v1129 = vpack.c.b16 %v996, %v989
  %v1130 = vpack.c.b16 %v997, %v990
  %v1131 = vpack.c.b16 %v998, %v991
  %v1132 = vpack.c.b16 %v999, %v992
  %v1133 = vpack.c.b16 %v1000, %v993
  %v1134 = vpack.c.b16 %v1008, %v1001
  %v1135 = vpack.c.b16 %v1009, %v1002
  %v1136 = vpack.c.b16 %v1010, %v1003
  %v1137 = vpack.c.b16 %v1011, %v1004
  %v1138 = vpack.c.b16 %v1012, %v1005
  %v1139 = vpack.c.b16 %v1013, %v1006
  %v1140 = vpack.c.b16 %v1014, %v1007
  %v1141 = vpack.c.b16 %v1022, %v1015
  %v1142 = vpack.c.b16 %v1023, %v1016
  %v1143 = vpack.c.b16 %v1024, %v1017
  %v1144 = vpack.c.b16 %v1025, %v1018
  %v1145 = vpack.c.b16 %v1026, %v1019
  %v1146 = vpack.c.b16 %v1027, %v1020
  %v1147 = vpack.c.b16 %v1028, %v1021
  %v1148 = vpack.c.b16 %v1036, %v1029
  %v1149 = vpack.c.b16 %v1037, %v1030
  %v1150 = vpack.c.b16 %v1038, %v1031
  %v1151 = vpack.c.b16 %v1039, %v1032
  %v1152 = vpack.c.b16 %v1040, %v1033
  %v1153 = vpack.c.b16 %v1041, %v1034
  %v1154 = vpack.c.b16 %v1042, %v1035
  %1267 = vmatprep.subr.bf16.mxu0 %v1093
  %1268 = vmatpush1.bf16.msra.mxu0 %v1092
  %1269 = vmatprep.subr.bf16.mxu0 %v1086
  %1270 = vmatpush1.bf16.msra.mxu0 %v1085
  %1271 = vmatprep.subr.bf16.mxu0 %v1079
  %1272 = vmatpush1.bf16.msra.mxu0 %v1078
  %1273 = vmatprep.subr.bf16.mxu0 %v1072
  %1274 = vmatpush1.bf16.msra.mxu0 %v1071
  %1275 = vmatprep.subr.bf16.mxu0 %v1065
  %1276 = vmatpush1.bf16.msra.mxu0 %v1064
  %1277 = vmatprep.subr.bf16.mxu0 %v1058
  %1278 = vmatpush1.bf16.msra.mxu0 %v1057
  %1279 = vmatprep.subr.bf16.mxu0 %v1051
  %1280 = vmatpush1.bf16.msra.mxu0 %v1050
  %1281 = vmatprep.subr.bf16.mxu0 %v1044
  %1282 = vmatpush1.bf16.msra.mxu0 %v1043
  %1283 = vmatprep.subr.bf16.mxu0 %v1149
  %1284 = vmatpush2.bf16.msra.mxu0 %v1148
  %1285 = vmatprep.subr.bf16.mxu0 %v1142
  %1286 = vmatpush2.bf16.msra.mxu0 %v1141
  %1287 = vmatprep.subr.bf16.mxu0 %v1135
  %1288 = vmatpush2.bf16.msra.mxu0 %v1134
  %1289 = vmatprep.subr.bf16.mxu0 %v1128
  %1290 = vmatpush2.bf16.msra.mxu0 %v1127
  %1291 = vmatprep.subr.bf16.mxu0 %v1121
  %1292 = vmatpush2.bf16.msra.mxu0 %v1120
  %1293 = vmatprep.subr.bf16.mxu0 %v1114
  %1294 = vmatpush2.bf16.msra.mxu0 %v1113
  %1295 = vmatprep.subr.bf16.mxu0 %v1107
  %1296 = vmatpush2.bf16.msra.mxu0 %v1106
  %1297 = vmatprep.subr.bf16.mxu0 %v1100
  %1298 = vmatpush2.bf16.msra.mxu0 %v1099
  %1299 = vmatprep.mubr.bf16.mxu0 %v495
  %1300 = vmatmul.mubr.bf16.gmra.mxu0 %v494
  %v1301 = vpop.f32.mrf.mxu0
  %v1302 = vadd.f32 %v659, %v1301
  %v1303 = vpop.f32.mrf.mxu0
  %v1304 = vadd.f32 %v663, %v1303
  %v1305 = vpop.f32.mrf.mxu0
  %v1306 = vadd.f32 %v659, %v1305
  %v1307 = vpop.f32.mrf.mxu0
  %v1308 = vadd.f32 %v663, %v1307
  %1309 = vmatprep.mubr.bf16.mxu0 %v497
  %1310 = vmatmul.mubr.bf16.gmra.mxu0 %v496
  %v1311 = vpop.f32.mrf.mxu0
  %v1312 = vadd.f32 %v659, %v1311
  %v1313 = vpop.f32.mrf.mxu0
  %v1314 = vadd.f32 %v663, %v1313
  %v1315 = vpop.f32.mrf.mxu0
  %v1316 = vadd.f32 %v659, %v1315
  %v1317 = vpop.f32.mrf.mxu0
  %v1318 = vadd.f32 %v663, %v1317
  %1319 = vmatprep.mubr.bf16.mxu0 %v499
  %1320 = vmatmul.mubr.bf16.gmra.mxu0 %v498
  %v1321 = vpop.f32.mrf.mxu0
  %v1322 = vadd.f32 %v659, %v1321
  %v1323 = vpop.f32.mrf.mxu0
  %v1324 = vadd.f32 %v663, %v1323
  %v1325 = vpop.f32.mrf.mxu0
  %v1326 = vadd.f32 %v659, %v1325
  %v1327 = vpop.f32.mrf.mxu0
  %v1328 = vadd.f32 %v663, %v1327
  %1329 = vmatprep.mubr.bf16.mxu0 %v501
  %1330 = vmatmul.mubr.bf16.gmra.mxu0 %v500
  %v1331 = vpop.f32.mrf.mxu0
  %v1332 = vadd.f32 %v659, %v1331
  %v1333 = vpop.f32.mrf.mxu0
  %v1334 = vadd.f32 %v663, %v1333
  %v1335 = vpop.f32.mrf.mxu0
  %v1336 = vadd.f32 %v659, %v1335
  %v1337 = vpop.f32.mrf.mxu0
  %v1338 = vadd.f32 %v663, %v1337
  %1339 = vmatprep.mubr.bf16.mxu0 %v503
  %1340 = vmatmul.mubr.bf16.gmra.mxu0 %v502
  %v1341 = vpop.f32.mrf.mxu0
  %v1342 = vadd.f32 %v659, %v1341
  %v1343 = vpop.f32.mrf.mxu0
  %v1344 = vadd.f32 %v663, %v1343
  %v1345 = vpop.f32.mrf.mxu0
  %v1346 = vadd.f32 %v659, %v1345
  %v1347 = vpop.f32.mrf.mxu0
  %v1348 = vadd.f32 %v663, %v1347
  %1349 = vmatprep.mubr.bf16.mxu0 %v505
  %1350 = vmatmul.mubr.bf16.gmra.mxu0 %v504
  %v1351 = vpop.f32.mrf.mxu0
  %v1352 = vadd.f32 %v659, %v1351
  %v1353 = vpop.f32.mrf.mxu0
  %v1354 = vadd.f32 %v663, %v1353
  %v1355 = vpop.f32.mrf.mxu0
  %v1356 = vadd.f32 %v659, %v1355
  %v1357 = vpop.f32.mrf.mxu0
  %v1358 = vadd.f32 %v663, %v1357
  %1359 = vmatprep.mubr.bf16.mxu0 %v507
  %1360 = vmatmul.mubr.bf16.gmra.mxu0 %v506
  %v1361 = vpop.f32.mrf.mxu0
  %v1362 = vadd.f32 %v659, %v1361
  %v1363 = vpop.f32.mrf.mxu0
  %v1364 = vadd.f32 %v663, %v1363
  %v1365 = vpop.f32.mrf.mxu0
  %v1366 = vadd.f32 %v659, %v1365
  %v1367 = vpop.f32.mrf.mxu0
  %v1368 = vadd.f32 %v663, %v1367
  %1369 = vmatprep.mubr.bf16.mxu0 %v509
  %1370 = vmatmul.mubr.bf16.gmra.mxu0 %v508
  %v1371 = vpop.f32.mrf.mxu0
  %v1372 = vadd.f32 %v659, %v1371
  %v1373 = vpop.f32.mrf.mxu0
  %v1374 = vadd.f32 %v663, %v1373
  %v1375 = vpop.f32.mrf.mxu0
  %v1376 = vadd.f32 %v659, %v1375
  %v1377 = vpop.f32.mrf.mxu0
  %v1378 = vadd.f32 %v663, %v1377
  %1379 = vmatprep.mubr.bf16.mxu0 %v511
  %1380 = vmatmul.mubr.bf16.gmra.mxu0 %v510
  %v1381 = vpop.f32.mrf.mxu0
  %v1382 = vadd.f32 %v659, %v1381
  %v1383 = vpop.f32.mrf.mxu0
  %v1384 = vadd.f32 %v663, %v1383
  %v1385 = vpop.f32.mrf.mxu0
  %v1386 = vadd.f32 %v659, %v1385
  %v1387 = vpop.f32.mrf.mxu0
  %v1388 = vadd.f32 %v663, %v1387
  %1389 = vmatprep.mubr.bf16.mxu0 %v513
  %1390 = vmatmul.mubr.bf16.gmra.mxu0 %v512
  %v1391 = vpop.f32.mrf.mxu0
  %v1392 = vadd.f32 %v659, %v1391
  %v1393 = vpop.f32.mrf.mxu0
  %v1394 = vadd.f32 %v663, %v1393
  %v1395 = vpop.f32.mrf.mxu0
  %v1396 = vadd.f32 %v659, %v1395
  %v1397 = vpop.f32.mrf.mxu0
  %v1398 = vadd.f32 %v663, %v1397
  %1399 = vmatprep.mubr.bf16.mxu0 %v515
  %1400 = vmatmul.mubr.bf16.gmra.mxu0 %v514
  %v1401 = vpop.f32.mrf.mxu0
  %v1402 = vadd.f32 %v659, %v1401
  %v1403 = vpop.f32.mrf.mxu0
  %v1404 = vadd.f32 %v663, %v1403
  %v1405 = vpop.f32.mrf.mxu0
  %v1406 = vadd.f32 %v659, %v1405
  %v1407 = vpop.f32.mrf.mxu0
  %v1408 = vadd.f32 %v663, %v1407
  %1409 = vmatprep.mubr.bf16.mxu0 %v517
  %1410 = vmatmul.mubr.bf16.gmra.mxu0 %v516
  %v1411 = vpop.f32.mrf.mxu0
  %v1412 = vadd.f32 %v659, %v1411
  %v1413 = vpop.f32.mrf.mxu0
  %v1414 = vadd.f32 %v663, %v1413
  %v1415 = vpop.f32.mrf.mxu0
  %v1416 = vadd.f32 %v659, %v1415
  %v1417 = vpop.f32.mrf.mxu0
  %v1418 = vadd.f32 %v663, %v1417
  %1419 = vmatprep.mubr.bf16.mxu0 %v519
  %1420 = vmatmul.mubr.bf16.gmra.mxu0 %v518
  %v1421 = vpop.f32.mrf.mxu0
  %v1422 = vadd.f32 %v659, %v1421
  %v1423 = vpop.f32.mrf.mxu0
  %v1424 = vadd.f32 %v663, %v1423
  %v1425 = vpop.f32.mrf.mxu0
  %v1426 = vadd.f32 %v659, %v1425
  %v1427 = vpop.f32.mrf.mxu0
  %v1428 = vadd.f32 %v663, %v1427
  %1429 = vmatprep.mubr.bf16.mxu0 %v521
  %1430 = vmatmul.mubr.bf16.gmra.mxu0 %v520
  %v1431 = vpop.f32.mrf.mxu0
  %v1432 = vadd.f32 %v659, %v1431
  %v1433 = vpop.f32.mrf.mxu0
  %v1434 = vadd.f32 %v663, %v1433
  %v1435 = vpop.f32.mrf.mxu0
  %v1436 = vadd.f32 %v659, %v1435
  %v1437 = vpop.f32.mrf.mxu0
  %v1438 = vadd.f32 %v663, %v1437
  %1439 = vmatprep.mubr.bf16.mxu0 %v523
  %1440 = vmatmul.mubr.bf16.gmra.mxu0 %v522
  %v1441 = vpop.f32.mrf.mxu0
  %v1442 = vadd.f32 %v659, %v1441
  %v1443 = vpop.f32.mrf.mxu0
  %v1444 = vadd.f32 %v663, %v1443
  %v1445 = vpop.f32.mrf.mxu0
  %v1446 = vadd.f32 %v659, %v1445
  %v1447 = vpop.f32.mrf.mxu0
  %v1448 = vadd.f32 %v663, %v1447
  %1449 = vmatprep.mubr.bf16.mxu0 %v525
  %1450 = vmatmul.mubr.bf16.gmra.mxu0 %v524
  %v1451 = vpop.f32.mrf.mxu0
  %v1452 = vadd.f32 %v659, %v1451
  %v1453 = vpop.f32.mrf.mxu0
  %v1454 = vadd.f32 %v663, %v1453
  %v1455 = vpop.f32.mrf.mxu0
  %v1456 = vadd.f32 %v659, %v1455
  %v1457 = vpop.f32.mrf.mxu0
  %v1458 = vadd.f32 %v663, %v1457
  %1459 = vdwg.mxu0
  %1460 = vmatprep.subr.bf16.mxu0 %v1095
  %1461 = vmatpush1.bf16.msra.mxu0 %v1094
  %1462 = vmatprep.subr.bf16.mxu0 %v1088
  %1463 = vmatpush1.bf16.msra.mxu0 %v1087
  %1464 = vmatprep.subr.bf16.mxu0 %v1081
  %1465 = vmatpush1.bf16.msra.mxu0 %v1080
  %1466 = vmatprep.subr.bf16.mxu0 %v1074
  %1467 = vmatpush1.bf16.msra.mxu0 %v1073
  %1468 = vmatprep.subr.bf16.mxu0 %v1067
  %1469 = vmatpush1.bf16.msra.mxu0 %v1066
  %1470 = vmatprep.subr.bf16.mxu0 %v1060
  %1471 = vmatpush1.bf16.msra.mxu0 %v1059
  %1472 = vmatprep.subr.bf16.mxu0 %v1053
  %1473 = vmatpush1.bf16.msra.mxu0 %v1052
  %1474 = vmatprep.subr.bf16.mxu0 %v1046
  %1475 = vmatpush1.bf16.msra.mxu0 %v1045
  %1476 = vmatprep.subr.bf16.mxu0 %v1151
  %1477 = vmatpush2.bf16.msra.mxu0 %v1150
  %1478 = vmatprep.subr.bf16.mxu0 %v1144
  %1479 = vmatpush2.bf16.msra.mxu0 %v1143
  %1480 = vmatprep.subr.bf16.mxu0 %v1137
  %1481 = vmatpush2.bf16.msra.mxu0 %v1136
  %1482 = vmatprep.subr.bf16.mxu0 %v1130
  %1483 = vmatpush2.bf16.msra.mxu0 %v1129
  %1484 = vmatprep.subr.bf16.mxu0 %v1123
  %1485 = vmatpush2.bf16.msra.mxu0 %v1122
  %1486 = vmatprep.subr.bf16.mxu0 %v1116
  %1487 = vmatpush2.bf16.msra.mxu0 %v1115
  %1488 = vmatprep.subr.bf16.mxu0 %v1109
  %1489 = vmatpush2.bf16.msra.mxu0 %v1108
  %1490 = vmatprep.subr.bf16.mxu0 %v1102
  %1491 = vmatpush2.bf16.msra.mxu0 %v1101
  %1492 = vmatprep.mubr.bf16.mxu0 %v495
  %1493 = vmatmul.mubr.bf16.gmra.mxu0 %v494
  %v1494 = vpop.f32.mrf.mxu0
  %v1495 = vadd.f32 %v667, %v1494
  %v1496 = vpop.f32.mrf.mxu0
  %v1497 = vadd.f32 %v671, %v1496
  %v1498 = vpop.f32.mrf.mxu0
  %v1499 = vadd.f32 %v667, %v1498
  %v1500 = vpop.f32.mrf.mxu0
  %v1501 = vadd.f32 %v671, %v1500
  %1502 = vmatprep.mubr.bf16.mxu0 %v497
  %1503 = vmatmul.mubr.bf16.gmra.mxu0 %v496
  %v1504 = vpop.f32.mrf.mxu0
  %v1505 = vadd.f32 %v667, %v1504
  %v1506 = vpop.f32.mrf.mxu0
  %v1507 = vadd.f32 %v671, %v1506
  %v1508 = vpop.f32.mrf.mxu0
  %v1509 = vadd.f32 %v667, %v1508
  %v1510 = vpop.f32.mrf.mxu0
  %v1511 = vadd.f32 %v671, %v1510
  %1512 = vmatprep.mubr.bf16.mxu0 %v499
  %1513 = vmatmul.mubr.bf16.gmra.mxu0 %v498
  %v1514 = vpop.f32.mrf.mxu0
  %v1515 = vadd.f32 %v667, %v1514
  %v1516 = vpop.f32.mrf.mxu0
  %v1517 = vadd.f32 %v671, %v1516
  %v1518 = vpop.f32.mrf.mxu0
  %v1519 = vadd.f32 %v667, %v1518
  %v1520 = vpop.f32.mrf.mxu0
  %v1521 = vadd.f32 %v671, %v1520
  %1522 = vmatprep.mubr.bf16.mxu0 %v501
  %1523 = vmatmul.mubr.bf16.gmra.mxu0 %v500
  %v1524 = vpop.f32.mrf.mxu0
  %v1525 = vadd.f32 %v667, %v1524
  %v1526 = vpop.f32.mrf.mxu0
  %v1527 = vadd.f32 %v671, %v1526
  %v1528 = vpop.f32.mrf.mxu0
  %v1529 = vadd.f32 %v667, %v1528
  %v1530 = vpop.f32.mrf.mxu0
  %v1531 = vadd.f32 %v671, %v1530
  %1532 = vmatprep.mubr.bf16.mxu0 %v503
  %1533 = vmatmul.mubr.bf16.gmra.mxu0 %v502
  %v1534 = vpop.f32.mrf.mxu0
  %v1535 = vadd.f32 %v667, %v1534
  %v1536 = vpop.f32.mrf.mxu0
  %v1537 = vadd.f32 %v671, %v1536
  %v1538 = vpop.f32.mrf.mxu0
  %v1539 = vadd.f32 %v667, %v1538
  %v1540 = vpop.f32.mrf.mxu0
  %v1541 = vadd.f32 %v671, %v1540
  %1542 = vmatprep.mubr.bf16.mxu0 %v505
  %1543 = vmatmul.mubr.bf16.gmra.mxu0 %v504
  %v1544 = vpop.f32.mrf.mxu0
  %v1545 = vadd.f32 %v667, %v1544
  %v1546 = vpop.f32.mrf.mxu0
  %v1547 = vadd.f32 %v671, %v1546
  %v1548 = vpop.f32.mrf.mxu0
  %v1549 = vadd.f32 %v667, %v1548
  %v1550 = vpop.f32.mrf.mxu0
  %v1551 = vadd.f32 %v671, %v1550
  %1552 = vmatprep.mubr.bf16.mxu0 %v507
  %1553 = vmatmul.mubr.bf16.gmra.mxu0 %v506
  %v1554 = vpop.f32.mrf.mxu0
  %v1555 = vadd.f32 %v667, %v1554
  %v1556 = vpop.f32.mrf.mxu0
  %v1557 = vadd.f32 %v671, %v1556
  %v1558 = vpop.f32.mrf.mxu0
  %v1559 = vadd.f32 %v667, %v1558
  %v1560 = vpop.f32.mrf.mxu0
  %v1561 = vadd.f32 %v671, %v1560
  %1562 = vmatprep.mubr.bf16.mxu0 %v509
  %1563 = vmatmul.mubr.bf16.gmra.mxu0 %v508
  %v1564 = vpop.f32.mrf.mxu0
  %v1565 = vadd.f32 %v667, %v1564
  %v1566 = vpop.f32.mrf.mxu0
  %v1567 = vadd.f32 %v671, %v1566
  %v1568 = vpop.f32.mrf.mxu0
  %v1569 = vadd.f32 %v667, %v1568
  %v1570 = vpop.f32.mrf.mxu0
  %v1571 = vadd.f32 %v671, %v1570
  %1572 = vmatprep.mubr.bf16.mxu0 %v511
  %1573 = vmatmul.mubr.bf16.gmra.mxu0 %v510
  %v1574 = vpop.f32.mrf.mxu0
  %v1575 = vadd.f32 %v667, %v1574
  %v1576 = vpop.f32.mrf.mxu0
  %v1577 = vadd.f32 %v671, %v1576
  %v1578 = vpop.f32.mrf.mxu0
  %v1579 = vadd.f32 %v667, %v1578
  %v1580 = vpop.f32.mrf.mxu0
  %v1581 = vadd.f32 %v671, %v1580
  %1582 = vmatprep.mubr.bf16.mxu0 %v513
  %1583 = vmatmul.mubr.bf16.gmra.mxu0 %v512
  %v1584 = vpop.f32.mrf.mxu0
  %v1585 = vadd.f32 %v667, %v1584
  %v1586 = vpop.f32.mrf.mxu0
  %v1587 = vadd.f32 %v671, %v1586
  %v1588 = vpop.f32.mrf.mxu0
  %v1589 = vadd.f32 %v667, %v1588
  %v1590 = vpop.f32.mrf.mxu0
  %v1591 = vadd.f32 %v671, %v1590
  %1592 = vmatprep.mubr.bf16.mxu0 %v515
  %1593 = vmatmul.mubr.bf16.gmra.mxu0 %v514
  %v1594 = vpop.f32.mrf.mxu0
  %v1595 = vadd.f32 %v667, %v1594
  %v1596 = vpop.f32.mrf.mxu0
  %v1597 = vadd.f32 %v671, %v1596
  %v1598 = vpop.f32.mrf.mxu0
  %v1599 = vadd.f32 %v667, %v1598
  %v1600 = vpop.f32.mrf.mxu0
  %v1601 = vadd.f32 %v671, %v1600
  %1602 = vmatprep.mubr.bf16.mxu0 %v517
  %1603 = vmatmul.mubr.bf16.gmra.mxu0 %v516
  %v1604 = vpop.f32.mrf.mxu0
  %v1605 = vadd.f32 %v667, %v1604
  %v1606 = vpop.f32.mrf.mxu0
  %v1607 = vadd.f32 %v671, %v1606
  %v1608 = vpop.f32.mrf.mxu0
  %v1609 = vadd.f32 %v667, %v1608
  %v1610 = vpop.f32.mrf.mxu0
  %v1611 = vadd.f32 %v671, %v1610
  %1612 = vmatprep.mubr.bf16.mxu0 %v519
  %1613 = vmatmul.mubr.bf16.gmra.mxu0 %v518
  %v1614 = vpop.f32.mrf.mxu0
  %v1615 = vadd.f32 %v667, %v1614
  %v1616 = vpop.f32.mrf.mxu0
  %v1617 = vadd.f32 %v671, %v1616
  %v1618 = vpop.f32.mrf.mxu0
  %v1619 = vadd.f32 %v667, %v1618
  %v1620 = vpop.f32.mrf.mxu0
  %v1621 = vadd.f32 %v671, %v1620
  %1622 = vmatprep.mubr.bf16.mxu0 %v521
  %1623 = vmatmul.mubr.bf16.gmra.mxu0 %v520
  %v1624 = vpop.f32.mrf.mxu0
  %v1625 = vadd.f32 %v667, %v1624
  %v1626 = vpop.f32.mrf.mxu0
  %v1627 = vadd.f32 %v671, %v1626
  %v1628 = vpop.f32.mrf.mxu0
  %v1629 = vadd.f32 %v667, %v1628
  %v1630 = vpop.f32.mrf.mxu0
  %v1631 = vadd.f32 %v671, %v1630
  %1632 = vmatprep.mubr.bf16.mxu0 %v523
  %1633 = vmatmul.mubr.bf16.gmra.mxu0 %v522
  %v1634 = vpop.f32.mrf.mxu0
  %v1635 = vadd.f32 %v667, %v1634
  %v1636 = vpop.f32.mrf.mxu0
  %v1637 = vadd.f32 %v671, %v1636
  %v1638 = vpop.f32.mrf.mxu0
  %v1639 = vadd.f32 %v667, %v1638
  %v1640 = vpop.f32.mrf.mxu0
  %v1641 = vadd.f32 %v671, %v1640
  %1642 = vmatprep.mubr.bf16.mxu0 %v525
  %1643 = vmatmul.mubr.bf16.gmra.mxu0 %v524
  %v1644 = vpop.f32.mrf.mxu0
  %v1645 = vadd.f32 %v667, %v1644
  %v1646 = vpop.f32.mrf.mxu0
  %v1647 = vadd.f32 %v671, %v1646
  %v1648 = vpop.f32.mrf.mxu0
  %v1649 = vadd.f32 %v667, %v1648
  %v1650 = vpop.f32.mrf.mxu0
  %v1651 = vadd.f32 %v671, %v1650
  %1652 = vdwg.mxu0
  %1653 = vmatprep.subr.bf16.mxu0 %v1097
  %1654 = vmatpush1.bf16.msra.mxu0 %v1096
  %1655 = vmatprep.subr.bf16.mxu0 %v1090
  %1656 = vmatpush1.bf16.msra.mxu0 %v1089
  %1657 = vmatprep.subr.bf16.mxu0 %v1083
  %1658 = vmatpush1.bf16.msra.mxu0 %v1082
  %1659 = vmatprep.subr.bf16.mxu0 %v1076
  %1660 = vmatpush1.bf16.msra.mxu0 %v1075
  %1661 = vmatprep.subr.bf16.mxu0 %v1069
  %1662 = vmatpush1.bf16.msra.mxu0 %v1068
  %1663 = vmatprep.subr.bf16.mxu0 %v1062
  %1664 = vmatpush1.bf16.msra.mxu0 %v1061
  %1665 = vmatprep.subr.bf16.mxu0 %v1055
  %1666 = vmatpush1.bf16.msra.mxu0 %v1054
  %1667 = vmatprep.subr.bf16.mxu0 %v1048
  %1668 = vmatpush1.bf16.msra.mxu0 %v1047
  %1669 = vmatprep.subr.bf16.mxu0 %v1153
  %1670 = vmatpush2.bf16.msra.mxu0 %v1152
  %1671 = vmatprep.subr.bf16.mxu0 %v1146
  %1672 = vmatpush2.bf16.msra.mxu0 %v1145
  %1673 = vmatprep.subr.bf16.mxu0 %v1139
  %1674 = vmatpush2.bf16.msra.mxu0 %v1138
  %1675 = vmatprep.subr.bf16.mxu0 %v1132
  %1676 = vmatpush2.bf16.msra.mxu0 %v1131
  %1677 = vmatprep.subr.bf16.mxu0 %v1125
  %1678 = vmatpush2.bf16.msra.mxu0 %v1124
  %1679 = vmatprep.subr.bf16.mxu0 %v1118
  %1680 = vmatpush2.bf16.msra.mxu0 %v1117
  %1681 = vmatprep.subr.bf16.mxu0 %v1111
  %1682 = vmatpush2.bf16.msra.mxu0 %v1110
  %1683 = vmatprep.subr.bf16.mxu0 %v1104
  %1684 = vmatpush2.bf16.msra.mxu0 %v1103
  %1685 = vmatprep.mubr.bf16.mxu0 %v495
  %1686 = vmatmul.mubr.bf16.gmra.mxu0 %v494
  %v1687 = vpop.f32.mrf.mxu0
  %v1688 = vadd.f32 %v675, %v1687
  %v1689 = vpop.f32.mrf.mxu0
  %v1690 = vadd.f32 %v679, %v1689
  %v1691 = vpop.f32.mrf.mxu0
  %v1692 = vadd.f32 %v675, %v1691
  %v1693 = vpop.f32.mrf.mxu0
  %v1694 = vadd.f32 %v679, %v1693
  %1695 = vmatprep.mubr.bf16.mxu0 %v497
  %1696 = vmatmul.mubr.bf16.gmra.mxu0 %v496
  %v1697 = vpop.f32.mrf.mxu0
  %v1698 = vadd.f32 %v675, %v1697
  %v1699 = vpop.f32.mrf.mxu0
  %v1700 = vadd.f32 %v679, %v1699
  %v1701 = vpop.f32.mrf.mxu0
  %v1702 = vadd.f32 %v675, %v1701
  %v1703 = vpop.f32.mrf.mxu0
  %v1704 = vadd.f32 %v679, %v1703
  %1705 = vmatprep.mubr.bf16.mxu0 %v499
  %1706 = vmatmul.mubr.bf16.gmra.mxu0 %v498
  %v1707 = vpop.f32.mrf.mxu0
  %v1708 = vadd.f32 %v675, %v1707
  %v1709 = vpop.f32.mrf.mxu0
  %v1710 = vadd.f32 %v679, %v1709
  %v1711 = vpop.f32.mrf.mxu0
  %v1712 = vadd.f32 %v675, %v1711
  %v1713 = vpop.f32.mrf.mxu0
  %v1714 = vadd.f32 %v679, %v1713
  %1715 = vmatprep.mubr.bf16.mxu0 %v501
  %1716 = vmatmul.mubr.bf16.gmra.mxu0 %v500
  %v1717 = vpop.f32.mrf.mxu0
  %v1718 = vadd.f32 %v675, %v1717
  %v1719 = vpop.f32.mrf.mxu0
  %v1720 = vadd.f32 %v679, %v1719
  %v1721 = vpop.f32.mrf.mxu0
  %v1722 = vadd.f32 %v675, %v1721
  %v1723 = vpop.f32.mrf.mxu0
  %v1724 = vadd.f32 %v679, %v1723
  %1725 = vmatprep.mubr.bf16.mxu0 %v503
  %1726 = vmatmul.mubr.bf16.gmra.mxu0 %v502
  %v1727 = vpop.f32.mrf.mxu0
  %v1728 = vadd.f32 %v675, %v1727
  %v1729 = vpop.f32.mrf.mxu0
  %v1730 = vadd.f32 %v679, %v1729
  %v1731 = vpop.f32.mrf.mxu0
  %v1732 = vadd.f32 %v675, %v1731
  %v1733 = vpop.f32.mrf.mxu0
  %v1734 = vadd.f32 %v679, %v1733
  %1735 = vmatprep.mubr.bf16.mxu0 %v505
  %1736 = vmatmul.mubr.bf16.gmra.mxu0 %v504
  %v1737 = vpop.f32.mrf.mxu0
  %v1738 = vadd.f32 %v675, %v1737
  %v1739 = vpop.f32.mrf.mxu0
  %v1740 = vadd.f32 %v679, %v1739
  %v1741 = vpop.f32.mrf.mxu0
  %v1742 = vadd.f32 %v675, %v1741
  %v1743 = vpop.f32.mrf.mxu0
  %v1744 = vadd.f32 %v679, %v1743
  %1745 = vmatprep.mubr.bf16.mxu0 %v507
  %1746 = vmatmul.mubr.bf16.gmra.mxu0 %v506
  %v1747 = vpop.f32.mrf.mxu0
  %v1748 = vadd.f32 %v675, %v1747
  %v1749 = vpop.f32.mrf.mxu0
  %v1750 = vadd.f32 %v679, %v1749
  %v1751 = vpop.f32.mrf.mxu0
  %v1752 = vadd.f32 %v675, %v1751
  %v1753 = vpop.f32.mrf.mxu0
  %v1754 = vadd.f32 %v679, %v1753
  %1755 = vmatprep.mubr.bf16.mxu0 %v509
  %1756 = vmatmul.mubr.bf16.gmra.mxu0 %v508
  %v1757 = vpop.f32.mrf.mxu0
  %v1758 = vadd.f32 %v675, %v1757
  %v1759 = vpop.f32.mrf.mxu0
  %v1760 = vadd.f32 %v679, %v1759
  %v1761 = vpop.f32.mrf.mxu0
  %v1762 = vadd.f32 %v675, %v1761
  %v1763 = vpop.f32.mrf.mxu0
  %v1764 = vadd.f32 %v679, %v1763
  %1765 = vmatprep.mubr.bf16.mxu0 %v511
  %1766 = vmatmul.mubr.bf16.gmra.mxu0 %v510
  %v1767 = vpop.f32.mrf.mxu0
  %v1768 = vadd.f32 %v675, %v1767
  %v1769 = vpop.f32.mrf.mxu0
  %v1770 = vadd.f32 %v679, %v1769
  %v1771 = vpop.f32.mrf.mxu0
  %v1772 = vadd.f32 %v675, %v1771
  %v1773 = vpop.f32.mrf.mxu0
  %v1774 = vadd.f32 %v679, %v1773
  %1775 = vmatprep.mubr.bf16.mxu0 %v513
  %1776 = vmatmul.mubr.bf16.gmra.mxu0 %v512
  %v1777 = vpop.f32.mrf.mxu0
  %v1778 = vadd.f32 %v675, %v1777
  %v1779 = vpop.f32.mrf.mxu0
  %v1780 = vadd.f32 %v679, %v1779
  %v1781 = vpop.f32.mrf.mxu0
  %v1782 = vadd.f32 %v675, %v1781
  %v1783 = vpop.f32.mrf.mxu0
  %v1784 = vadd.f32 %v679, %v1783
  %1785 = vmatprep.mubr.bf16.mxu0 %v515
  %1786 = vmatmul.mubr.bf16.gmra.mxu0 %v514
  %v1787 = vpop.f32.mrf.mxu0
  %v1788 = vadd.f32 %v675, %v1787
  %v1789 = vpop.f32.mrf.mxu0
  %v1790 = vadd.f32 %v679, %v1789
  %v1791 = vpop.f32.mrf.mxu0
  %v1792 = vadd.f32 %v675, %v1791
  %v1793 = vpop.f32.mrf.mxu0
  %v1794 = vadd.f32 %v679, %v1793
  %1795 = vmatprep.mubr.bf16.mxu0 %v517
  %1796 = vmatmul.mubr.bf16.gmra.mxu0 %v516
  %v1797 = vpop.f32.mrf.mxu0
  %v1798 = vadd.f32 %v675, %v1797
  %v1799 = vpop.f32.mrf.mxu0
  %v1800 = vadd.f32 %v679, %v1799
  %v1801 = vpop.f32.mrf.mxu0
  %v1802 = vadd.f32 %v675, %v1801
  %v1803 = vpop.f32.mrf.mxu0
  %v1804 = vadd.f32 %v679, %v1803
  %1805 = vmatprep.mubr.bf16.mxu0 %v519
  %1806 = vmatmul.mubr.bf16.gmra.mxu0 %v518
  %v1807 = vpop.f32.mrf.mxu0
  %v1808 = vadd.f32 %v675, %v1807
  %v1809 = vpop.f32.mrf.mxu0
  %v1810 = vadd.f32 %v679, %v1809
  %v1811 = vpop.f32.mrf.mxu0
  %v1812 = vadd.f32 %v675, %v1811
  %v1813 = vpop.f32.mrf.mxu0
  %v1814 = vadd.f32 %v679, %v1813
  %1815 = vmatprep.mubr.bf16.mxu0 %v521
  %1816 = vmatmul.mubr.bf16.gmra.mxu0 %v520
  %v1817 = vpop.f32.mrf.mxu0
  %v1818 = vadd.f32 %v675, %v1817
  %v1819 = vpop.f32.mrf.mxu0
  %v1820 = vadd.f32 %v679, %v1819
  %v1821 = vpop.f32.mrf.mxu0
  %v1822 = vadd.f32 %v675, %v1821
  %v1823 = vpop.f32.mrf.mxu0
  %v1824 = vadd.f32 %v679, %v1823
  %1825 = vmatprep.mubr.bf16.mxu0 %v523
  %1826 = vmatmul.mubr.bf16.gmra.mxu0 %v522
  %v1827 = vpop.f32.mrf.mxu0
  %v1828 = vadd.f32 %v675, %v1827
  %v1829 = vpop.f32.mrf.mxu0
  %v1830 = vadd.f32 %v679, %v1829
  %v1831 = vpop.f32.mrf.mxu0
  %v1832 = vadd.f32 %v675, %v1831
  %v1833 = vpop.f32.mrf.mxu0
  %v1834 = vadd.f32 %v679, %v1833
  %1835 = vmatprep.mubr.bf16.mxu0 %v525
  %1836 = vmatmul.mubr.bf16.gmra.mxu0 %v524
  %v1837 = vpop.f32.mrf.mxu0
  %v1838 = vadd.f32 %v675, %v1837
  %v1839 = vpop.f32.mrf.mxu0
  %v1840 = vadd.f32 %v679, %v1839
  %v1841 = vpop.f32.mrf.mxu0
  %v1842 = vadd.f32 %v675, %v1841
  %v1843 = vpop.f32.mrf.mxu0
  %v1844 = vadd.f32 %v679, %v1843
  %1845 = vdwg.mxu0
  %1846 = vmatprep.subr.bf16.mxu0 0
  %1847 = vmatpush1.bf16.msra.mxu0 %v1098
  %1848 = vmatprep.subr.bf16.mxu0 0
  %1849 = vmatpush1.bf16.msra.mxu0 %v1091
  %1850 = vmatprep.subr.bf16.mxu0 0
  %1851 = vmatpush1.bf16.msra.mxu0 %v1084
  %1852 = vmatprep.subr.bf16.mxu0 0
  %1853 = vmatpush1.bf16.msra.mxu0 %v1077
  %1854 = vmatprep.subr.bf16.mxu0 0
  %1855 = vmatpush1.bf16.msra.mxu0 %v1070
  %1856 = vmatprep.subr.bf16.mxu0 0
  %1857 = vmatpush1.bf16.msra.mxu0 %v1063
  %1858 = vmatprep.subr.bf16.mxu0 0
  %1859 = vmatpush1.bf16.msra.mxu0 %v1056
  %1860 = vmatprep.subr.bf16.mxu0 0
  %1861 = vmatpush1.bf16.msra.mxu0 %v1049
  %1862 = vmatprep.subr.bf16.mxu0 0
  %1863 = vmatpush2.bf16.msra.mxu0 %v1154
  %1864 = vmatprep.subr.bf16.mxu0 0
  %1865 = vmatpush2.bf16.msra.mxu0 %v1147
  %1866 = vmatprep.subr.bf16.mxu0 0
  %1867 = vmatpush2.bf16.msra.mxu0 %v1140
  %1868 = vmatprep.subr.bf16.mxu0 0
  %1869 = vmatpush2.bf16.msra.mxu0 %v1133
  %1870 = vmatprep.subr.bf16.mxu0 0
  %1871 = vmatpush2.bf16.msra.mxu0 %v1126
  %1872 = vmatprep.subr.bf16.mxu0 0
  %1873 = vmatpush2.bf16.msra.mxu0 %v1119
  %1874 = vmatprep.subr.bf16.mxu0 0
  %1875 = vmatpush2.bf16.msra.mxu0 %v1112
  %1876 = vmatprep.subr.bf16.mxu0 0
  %1877 = vmatpush2.bf16.msra.mxu0 %v1105
  %1878 = vmatprep.mubr.bf16.mxu0 %v495
  %1879 = vmatmul.mubr.bf16.gmra.mxu0 %v494
  %v1880 = vpop.f32.mrf.mxu0
  %v1881 = vadd.f32 %v683, %v1880
  %v1882 = vpop.f32.mrf.mxu0
  %v1883 = vpop.f32.mrf.mxu0
  %v1884 = vadd.f32 %v683, %v1883
  %v1885 = vpop.f32.mrf.mxu0
  %1886 = vmatprep.mubr.bf16.mxu0 %v497
  %1887 = vmatmul.mubr.bf16.gmra.mxu0 %v496
  %v1888 = vpop.f32.mrf.mxu0
  %v1889 = vadd.f32 %v683, %v1888
  %v1890 = vpop.f32.mrf.mxu0
  %v1891 = vpop.f32.mrf.mxu0
  %v1892 = vadd.f32 %v683, %v1891
  %v1893 = vpop.f32.mrf.mxu0
  %1894 = vmatprep.mubr.bf16.mxu0 %v499
  %1895 = vmatmul.mubr.bf16.gmra.mxu0 %v498
  %v1896 = vpop.f32.mrf.mxu0
  %v1897 = vadd.f32 %v683, %v1896
  %v1898 = vpop.f32.mrf.mxu0
  %v1899 = vpop.f32.mrf.mxu0
  %v1900 = vadd.f32 %v683, %v1899
  %v1901 = vpop.f32.mrf.mxu0
  %1902 = vmatprep.mubr.bf16.mxu0 %v501
  %1903 = vmatmul.mubr.bf16.gmra.mxu0 %v500
  %v1904 = vpop.f32.mrf.mxu0
  %v1905 = vadd.f32 %v683, %v1904
  %v1906 = vpop.f32.mrf.mxu0
  %v1907 = vpop.f32.mrf.mxu0
  %v1908 = vadd.f32 %v683, %v1907
  %v1909 = vpop.f32.mrf.mxu0
  %1910 = vmatprep.mubr.bf16.mxu0 %v503
  %1911 = vmatmul.mubr.bf16.gmra.mxu0 %v502
  %v1912 = vpop.f32.mrf.mxu0
  %v1913 = vadd.f32 %v683, %v1912
  %v1914 = vpop.f32.mrf.mxu0
  %v1915 = vpop.f32.mrf.mxu0
  %v1916 = vadd.f32 %v683, %v1915
  %v1917 = vpop.f32.mrf.mxu0
  %1918 = vmatprep.mubr.bf16.mxu0 %v505
  %1919 = vmatmul.mubr.bf16.gmra.mxu0 %v504
  %v1920 = vpop.f32.mrf.mxu0
  %v1921 = vadd.f32 %v683, %v1920
  %v1922 = vpop.f32.mrf.mxu0
  %v1923 = vpop.f32.mrf.mxu0
  %v1924 = vadd.f32 %v683, %v1923
  %v1925 = vpop.f32.mrf.mxu0
  %1926 = vmatprep.mubr.bf16.mxu0 %v507
  %1927 = vmatmul.mubr.bf16.gmra.mxu0 %v506
  %v1928 = vpop.f32.mrf.mxu0
  %v1929 = vadd.f32 %v683, %v1928
  %v1930 = vpop.f32.mrf.mxu0
  %v1931 = vpop.f32.mrf.mxu0
  %v1932 = vadd.f32 %v683, %v1931
  %v1933 = vpop.f32.mrf.mxu0
  %1934 = vmatprep.mubr.bf16.mxu0 %v509
  %1935 = vmatmul.mubr.bf16.gmra.mxu0 %v508
  %v1936 = vpop.f32.mrf.mxu0
  %v1937 = vadd.f32 %v683, %v1936
  %v1938 = vpop.f32.mrf.mxu0
  %v1939 = vpop.f32.mrf.mxu0
  %v1940 = vadd.f32 %v683, %v1939
  %v1941 = vpop.f32.mrf.mxu0
  %1942 = vmatprep.mubr.bf16.mxu0 %v511
  %1943 = vmatmul.mubr.bf16.gmra.mxu0 %v510
  %v1944 = vpop.f32.mrf.mxu0
  %v1945 = vadd.f32 %v683, %v1944
  %v1946 = vpop.f32.mrf.mxu0
  %v1947 = vpop.f32.mrf.mxu0
  %v1948 = vadd.f32 %v683, %v1947
  %v1949 = vpop.f32.mrf.mxu0
  %1950 = vmatprep.mubr.bf16.mxu0 %v513
  %1951 = vmatmul.mubr.bf16.gmra.mxu0 %v512
  %v1952 = vpop.f32.mrf.mxu0
  %v1953 = vadd.f32 %v683, %v1952
  %v1954 = vpop.f32.mrf.mxu0
  %v1955 = vpop.f32.mrf.mxu0
  %v1956 = vadd.f32 %v683, %v1955
  %v1957 = vpop.f32.mrf.mxu0
  %1958 = vmatprep.mubr.bf16.mxu0 %v515
  %1959 = vmatmul.mubr.bf16.gmra.mxu0 %v514
  %v1960 = vpop.f32.mrf.mxu0
  %v1961 = vadd.f32 %v683, %v1960
  %v1962 = vpop.f32.mrf.mxu0
  %v1963 = vpop.f32.mrf.mxu0
  %v1964 = vadd.f32 %v683, %v1963
  %v1965 = vpop.f32.mrf.mxu0
  %1966 = vmatprep.mubr.bf16.mxu0 %v517
  %1967 = vmatmul.mubr.bf16.gmra.mxu0 %v516
  %v1968 = vpop.f32.mrf.mxu0
  %v1969 = vadd.f32 %v683, %v1968
  %v1970 = vpop.f32.mrf.mxu0
  %v1971 = vpop.f32.mrf.mxu0
  %v1972 = vadd.f32 %v683, %v1971
  %v1973 = vpop.f32.mrf.mxu0
  %1974 = vmatprep.mubr.bf16.mxu0 %v519
  %1975 = vmatmul.mubr.bf16.gmra.mxu0 %v518
  %v1976 = vpop.f32.mrf.mxu0
  %v1977 = vadd.f32 %v683, %v1976
  %v1978 = vpop.f32.mrf.mxu0
  %v1979 = vpop.f32.mrf.mxu0
  %v1980 = vadd.f32 %v683, %v1979
  %v1981 = vpop.f32.mrf.mxu0
  %1982 = vmatprep.mubr.bf16.mxu0 %v521
  %1983 = vmatmul.mubr.bf16.gmra.mxu0 %v520
  %v1984 = vpop.f32.mrf.mxu0
  %v1985 = vadd.f32 %v683, %v1984
  %v1986 = vpop.f32.mrf.mxu0
  %v1987 = vpop.f32.mrf.mxu0
  %v1988 = vadd.f32 %v683, %v1987
  %v1989 = vpop.f32.mrf.mxu0
  %1990 = vmatprep.mubr.bf16.mxu0 %v523
  %1991 = vmatmul.mubr.bf16.gmra.mxu0 %v522
  %v1992 = vpop.f32.mrf.mxu0
  %v1993 = vadd.f32 %v683, %v1992
  %v1994 = vpop.f32.mrf.mxu0
  %v1995 = vpop.f32.mrf.mxu0
  %v1996 = vadd.f32 %v683, %v1995
  %v1997 = vpop.f32.mrf.mxu0
  %1998 = vmatprep.mubr.bf16.mxu0 %v525
  %1999 = vmatmul.mubr.bf16.gmra.mxu0 %v524
  %v2000 = vpop.f32.mrf.mxu0
  %v2001 = vadd.f32 %v683, %v2000
  %v2002 = vpop.f32.mrf.mxu0
  %v2003 = vpop.f32.mrf.mxu0
  %v2004 = vadd.f32 %v683, %v2003
  %v2005 = vpop.f32.mrf.mxu0
  %2006 = vdwg.mxu0
  %v2007 = vxor.u32 %v1302, 2147483648
  %v2008 = vxor.u32 %v1304, 2147483648
  %v2009 = vxor.u32 %v1495, 2147483648
  %v2010 = vxor.u32 %v1497, 2147483648
  %v2011 = vxor.u32 %v1688, 2147483648
  %v2012 = vxor.u32 %v1690, 2147483648
  %v2013 = vxor.u32 %v1881, 2147483648
  %v2014 = vxor.u32 %v1306, 2147483648
  %v2015 = vxor.u32 %v1308, 2147483648
  %v2016 = vxor.u32 %v1499, 2147483648
  %v2017 = vxor.u32 %v1501, 2147483648
  %v2018 = vxor.u32 %v1692, 2147483648
  %v2019 = vxor.u32 %v1694, 2147483648
  %v2020 = vxor.u32 %v1884, 2147483648
  %v2021 = vxor.u32 %v1312, 2147483648
  %v2022 = vxor.u32 %v1314, 2147483648
  %v2023 = vxor.u32 %v1505, 2147483648
  %v2024 = vxor.u32 %v1507, 2147483648
  %v2025 = vxor.u32 %v1698, 2147483648
  %v2026 = vxor.u32 %v1700, 2147483648
  %v2027 = vxor.u32 %v1889, 2147483648
  %v2028 = vxor.u32 %v1316, 2147483648
  %v2029 = vxor.u32 %v1318, 2147483648
  %v2030 = vxor.u32 %v1509, 2147483648
  %v2031 = vxor.u32 %v1511, 2147483648
  %v2032 = vxor.u32 %v1702, 2147483648
  %v2033 = vxor.u32 %v1704, 2147483648
  %v2034 = vxor.u32 %v1892, 2147483648
  %v2035 = vxor.u32 %v1322, 2147483648
  %v2036 = vxor.u32 %v1324, 2147483648
  %v2037 = vxor.u32 %v1515, 2147483648
  %v2038 = vxor.u32 %v1517, 2147483648
  %v2039 = vxor.u32 %v1708, 2147483648
  %v2040 = vxor.u32 %v1710, 2147483648
  %v2041 = vxor.u32 %v1897, 2147483648
  %v2042 = vxor.u32 %v1326, 2147483648
  %v2043 = vxor.u32 %v1328, 2147483648
  %v2044 = vxor.u32 %v1519, 2147483648
  %v2045 = vxor.u32 %v1521, 2147483648
  %v2046 = vxor.u32 %v1712, 2147483648
  %v2047 = vxor.u32 %v1714, 2147483648
  %v2048 = vxor.u32 %v1900, 2147483648
  %v2049 = vxor.u32 %v1332, 2147483648
  %v2050 = vxor.u32 %v1334, 2147483648
  %v2051 = vxor.u32 %v1525, 2147483648
  %v2052 = vxor.u32 %v1527, 2147483648
  %v2053 = vxor.u32 %v1718, 2147483648
  %v2054 = vxor.u32 %v1720, 2147483648
  %v2055 = vxor.u32 %v1905, 2147483648
  %v2056 = vxor.u32 %v1336, 2147483648
  %v2057 = vxor.u32 %v1338, 2147483648
  %v2058 = vxor.u32 %v1529, 2147483648
  %v2059 = vxor.u32 %v1531, 2147483648
  %v2060 = vxor.u32 %v1722, 2147483648
  %v2061 = vxor.u32 %v1724, 2147483648
  %v2062 = vxor.u32 %v1908, 2147483648
  %v2063 = vxor.u32 %v1342, 2147483648
  %v2064 = vxor.u32 %v1344, 2147483648
  %v2065 = vxor.u32 %v1535, 2147483648
  %v2066 = vxor.u32 %v1537, 2147483648
  %v2067 = vxor.u32 %v1728, 2147483648
  %v2068 = vxor.u32 %v1730, 2147483648
  %v2069 = vxor.u32 %v1913, 2147483648
  %v2070 = vxor.u32 %v1346, 2147483648
  %v2071 = vxor.u32 %v1348, 2147483648
  %v2072 = vxor.u32 %v1539, 2147483648
  %v2073 = vxor.u32 %v1541, 2147483648
  %v2074 = vxor.u32 %v1732, 2147483648
  %v2075 = vxor.u32 %v1734, 2147483648
  %v2076 = vxor.u32 %v1916, 2147483648
  %v2077 = vxor.u32 %v1352, 2147483648
  %v2078 = vxor.u32 %v1354, 2147483648
  %v2079 = vxor.u32 %v1545, 2147483648
  %v2080 = vxor.u32 %v1547, 2147483648
  %v2081 = vxor.u32 %v1738, 2147483648
  %v2082 = vxor.u32 %v1740, 2147483648
  %v2083 = vxor.u32 %v1921, 2147483648
  %v2084 = vxor.u32 %v1356, 2147483648
  %v2085 = vxor.u32 %v1358, 2147483648
  %v2086 = vxor.u32 %v1549, 2147483648
  %v2087 = vxor.u32 %v1551, 2147483648
  %v2088 = vxor.u32 %v1742, 2147483648
  %v2089 = vxor.u32 %v1744, 2147483648
  %v2090 = vxor.u32 %v1924, 2147483648
  %v2091 = vxor.u32 %v1362, 2147483648
  %v2092 = vxor.u32 %v1364, 2147483648
  %v2093 = vxor.u32 %v1555, 2147483648
  %v2094 = vxor.u32 %v1557, 2147483648
  %v2095 = vxor.u32 %v1748, 2147483648
  %v2096 = vxor.u32 %v1750, 2147483648
  %v2097 = vxor.u32 %v1929, 2147483648
  %v2098 = vxor.u32 %v1366, 2147483648
  %v2099 = vxor.u32 %v1368, 2147483648
  %v2100 = vxor.u32 %v1559, 2147483648
  %v2101 = vxor.u32 %v1561, 2147483648
  %v2102 = vxor.u32 %v1752, 2147483648
  %v2103 = vxor.u32 %v1754, 2147483648
  %v2104 = vxor.u32 %v1932, 2147483648
  %v2105 = vxor.u32 %v1372, 2147483648
  %v2106 = vxor.u32 %v1374, 2147483648
  %v2107 = vxor.u32 %v1565, 2147483648
  %v2108 = vxor.u32 %v1567, 2147483648
  %v2109 = vxor.u32 %v1758, 2147483648
  %v2110 = vxor.u32 %v1760, 2147483648
  %v2111 = vxor.u32 %v1937, 2147483648
  %v2112 = vxor.u32 %v1376, 2147483648
  %v2113 = vxor.u32 %v1378, 2147483648
  %v2114 = vxor.u32 %v1569, 2147483648
  %v2115 = vxor.u32 %v1571, 2147483648
  %v2116 = vxor.u32 %v1762, 2147483648
  %v2117 = vxor.u32 %v1764, 2147483648
  %v2118 = vxor.u32 %v1940, 2147483648
  %v2119 = vxor.u32 %v1382, 2147483648
  %v2120 = vxor.u32 %v1384, 2147483648
  %v2121 = vxor.u32 %v1575, 2147483648
  %v2122 = vxor.u32 %v1577, 2147483648
  %v2123 = vxor.u32 %v1768, 2147483648
  %v2124 = vxor.u32 %v1770, 2147483648
  %v2125 = vxor.u32 %v1945, 2147483648
  %v2126 = vxor.u32 %v1386, 2147483648
  %v2127 = vxor.u32 %v1388, 2147483648
  %v2128 = vxor.u32 %v1579, 2147483648
  %v2129 = vxor.u32 %v1581, 2147483648
  %v2130 = vxor.u32 %v1772, 2147483648
  %v2131 = vxor.u32 %v1774, 2147483648
  %v2132 = vxor.u32 %v1948, 2147483648
  %v2133 = vxor.u32 %v1392, 2147483648
  %v2134 = vxor.u32 %v1394, 2147483648
  %v2135 = vxor.u32 %v1585, 2147483648
  %v2136 = vxor.u32 %v1587, 2147483648
  %v2137 = vxor.u32 %v1778, 2147483648
  %v2138 = vxor.u32 %v1780, 2147483648
  %v2139 = vxor.u32 %v1953, 2147483648
  %v2140 = vxor.u32 %v1396, 2147483648
  %v2141 = vxor.u32 %v1398, 2147483648
  %v2142 = vxor.u32 %v1589, 2147483648
  %v2143 = vxor.u32 %v1591, 2147483648
  %v2144 = vxor.u32 %v1782, 2147483648
  %v2145 = vxor.u32 %v1784, 2147483648
  %v2146 = vxor.u32 %v1956, 2147483648
  %v2147 = vxor.u32 %v1402, 2147483648
  %v2148 = vxor.u32 %v1404, 2147483648
  %v2149 = vxor.u32 %v1595, 2147483648
  %v2150 = vxor.u32 %v1597, 2147483648
  %v2151 = vxor.u32 %v1788, 2147483648
  %v2152 = vxor.u32 %v1790, 2147483648
  %v2153 = vxor.u32 %v1961, 2147483648
  %v2154 = vxor.u32 %v1406, 2147483648
  %v2155 = vxor.u32 %v1408, 2147483648
  %v2156 = vxor.u32 %v1599, 2147483648
  %v2157 = vxor.u32 %v1601, 2147483648
  %v2158 = vxor.u32 %v1792, 2147483648
  %v2159 = vxor.u32 %v1794, 2147483648
  %v2160 = vxor.u32 %v1964, 2147483648
  %v2161 = vxor.u32 %v1412, 2147483648
  %v2162 = vxor.u32 %v1414, 2147483648
  %v2163 = vxor.u32 %v1605, 2147483648
  %v2164 = vxor.u32 %v1607, 2147483648
  %v2165 = vxor.u32 %v1798, 2147483648
  %v2166 = vxor.u32 %v1800, 2147483648
  %v2167 = vxor.u32 %v1969, 2147483648
  %v2168 = vxor.u32 %v1416, 2147483648
  %v2169 = vxor.u32 %v1418, 2147483648
  %v2170 = vxor.u32 %v1609, 2147483648
  %v2171 = vxor.u32 %v1611, 2147483648
  %v2172 = vxor.u32 %v1802, 2147483648
  %v2173 = vxor.u32 %v1804, 2147483648
  %v2174 = vxor.u32 %v1972, 2147483648
  %v2175 = vxor.u32 %v1422, 2147483648
  %v2176 = vxor.u32 %v1424, 2147483648
  %v2177 = vxor.u32 %v1615, 2147483648
  %v2178 = vxor.u32 %v1617, 2147483648
  %v2179 = vxor.u32 %v1808, 2147483648
  %v2180 = vxor.u32 %v1810, 2147483648
  %v2181 = vxor.u32 %v1977, 2147483648
  %v2182 = vxor.u32 %v1426, 2147483648
  %v2183 = vxor.u32 %v1428, 2147483648
  %v2184 = vxor.u32 %v1619, 2147483648
  %v2185 = vxor.u32 %v1621, 2147483648
  %v2186 = vxor.u32 %v1812, 2147483648
  %v2187 = vxor.u32 %v1814, 2147483648
  %v2188 = vxor.u32 %v1980, 2147483648
  %v2189 = vxor.u32 %v1432, 2147483648
  %v2190 = vxor.u32 %v1434, 2147483648
  %v2191 = vxor.u32 %v1625, 2147483648
  %v2192 = vxor.u32 %v1627, 2147483648
  %v2193 = vxor.u32 %v1818, 2147483648
  %v2194 = vxor.u32 %v1820, 2147483648
  %v2195 = vxor.u32 %v1985, 2147483648
  %v2196 = vxor.u32 %v1436, 2147483648
  %v2197 = vxor.u32 %v1438, 2147483648
  %v2198 = vxor.u32 %v1629, 2147483648
  %v2199 = vxor.u32 %v1631, 2147483648
  %v2200 = vxor.u32 %v1822, 2147483648
  %v2201 = vxor.u32 %v1824, 2147483648
  %v2202 = vxor.u32 %v1988, 2147483648
  %v2203 = vxor.u32 %v1442, 2147483648
  %v2204 = vxor.u32 %v1444, 2147483648
  %v2205 = vxor.u32 %v1635, 2147483648
  %v2206 = vxor.u32 %v1637, 2147483648
  %v2207 = vxor.u32 %v1828, 2147483648
  %v2208 = vxor.u32 %v1830, 2147483648
  %v2209 = vxor.u32 %v1993, 2147483648
  %v2210 = vxor.u32 %v1446, 2147483648
  %v2211 = vxor.u32 %v1448, 2147483648
  %v2212 = vxor.u32 %v1639, 2147483648
  %v2213 = vxor.u32 %v1641, 2147483648
  %v2214 = vxor.u32 %v1832, 2147483648
  %v2215 = vxor.u32 %v1834, 2147483648
  %v2216 = vxor.u32 %v1996, 2147483648
  %v2217 = vxor.u32 %v1452, 2147483648
  %v2218 = vxor.u32 %v1454, 2147483648
  %v2219 = vxor.u32 %v1645, 2147483648
  %v2220 = vxor.u32 %v1647, 2147483648
  %v2221 = vxor.u32 %v1838, 2147483648
  %v2222 = vxor.u32 %v1840, 2147483648
  %v2223 = vxor.u32 %v2001, 2147483648
  %v2224 = vxor.u32 %v1456, 2147483648
  %v2225 = vxor.u32 %v1458, 2147483648
  %v2226 = vxor.u32 %v1649, 2147483648
  %v2227 = vxor.u32 %v1651, 2147483648
  %v2228 = vxor.u32 %v1842, 2147483648
  %v2229 = vxor.u32 %v1844, 2147483648
  %v2230 = vxor.u32 %v2004, 2147483648
  %v2231 = vmul.f32 %v2007, 1.442695
  %v2232 = vpow.pop %v2231
  %v2233 = vmul.f32 %v2008, 1.442695
  %v2234 = vpow.pop %v2233
  %v2235 = vmul.f32 %v2009, 1.442695
  %v2236 = vpow.pop %v2235
  %v2237 = vmul.f32 %v2010, 1.442695
  %v2238 = vpow.pop %v2237
  %v2239 = vmul.f32 %v2011, 1.442695
  %v2240 = vpow.pop %v2239
  %v2241 = vmul.f32 %v2012, 1.442695
  %v2242 = vpow.pop %v2241
  %v2243 = vmul.f32 %v2013, 1.442695
  %v2244 = vpow.pop %v2243
  %v2245 = vmul.f32 %v2014, 1.442695
  %v2246 = vpow.pop %v2245
  %v2247 = vmul.f32 %v2015, 1.442695
  %v2248 = vpow.pop %v2247
  %v2249 = vmul.f32 %v2016, 1.442695
  %v2250 = vpow.pop %v2249
  %v2251 = vmul.f32 %v2017, 1.442695
  %v2252 = vpow.pop %v2251
  %v2253 = vmul.f32 %v2018, 1.442695
  %v2254 = vpow.pop %v2253
  %v2255 = vmul.f32 %v2019, 1.442695
  %v2256 = vpow.pop %v2255
  %v2257 = vmul.f32 %v2020, 1.442695
  %v2258 = vpow.pop %v2257
  %v2259 = vmul.f32 %v2021, 1.442695
  %v2260 = vpow.pop %v2259
  %v2261 = vmul.f32 %v2022, 1.442695
  %v2262 = vpow.pop %v2261
  %v2263 = vmul.f32 %v2023, 1.442695
  %v2264 = vpow.pop %v2263
  %v2265 = vmul.f32 %v2024, 1.442695
  %v2266 = vpow.pop %v2265
  %v2267 = vmul.f32 %v2025, 1.442695
  %v2268 = vpow.pop %v2267
  %v2269 = vmul.f32 %v2026, 1.442695
  %v2270 = vpow.pop %v2269
  %v2271 = vmul.f32 %v2027, 1.442695
  %v2272 = vpow.pop %v2271
  %v2273 = vmul.f32 %v2028, 1.442695
  %v2274 = vpow.pop %v2273
  %v2275 = vmul.f32 %v2029, 1.442695
  %v2276 = vpow.pop %v2275
  %v2277 = vmul.f32 %v2030, 1.442695
  %v2278 = vpow.pop %v2277
  %v2279 = vmul.f32 %v2031, 1.442695
  %v2280 = vpow.pop %v2279
  %v2281 = vmul.f32 %v2032, 1.442695
  %v2282 = vpow.pop %v2281
  %v2283 = vmul.f32 %v2033, 1.442695
  %v2284 = vpow.pop %v2283
  %v2285 = vmul.f32 %v2034, 1.442695
  %v2286 = vpow.pop %v2285
  %v2287 = vmul.f32 %v2035, 1.442695
  %v2288 = vpow.pop %v2287
  %v2289 = vmul.f32 %v2036, 1.442695
  %v2290 = vpow.pop %v2289
  %v2291 = vmul.f32 %v2037, 1.442695
  %v2292 = vpow.pop %v2291
  %v2293 = vmul.f32 %v2038, 1.442695
  %v2294 = vpow.pop %v2293
  %v2295 = vmul.f32 %v2039, 1.442695
  %v2296 = vpow.pop %v2295
  %v2297 = vmul.f32 %v2040, 1.442695
  %v2298 = vpow.pop %v2297
  %v2299 = vmul.f32 %v2041, 1.442695
  %v2300 = vpow.pop %v2299
  %v2301 = vmul.f32 %v2042, 1.442695
  %v2302 = vpow.pop %v2301
  %v2303 = vmul.f32 %v2043, 1.442695
  %v2304 = vpow.pop %v2303
  %v2305 = vmul.f32 %v2044, 1.442695
  %v2306 = vpow.pop %v2305
  %v2307 = vmul.f32 %v2045, 1.442695
  %v2308 = vpow.pop %v2307
  %v2309 = vmul.f32 %v2046, 1.442695
  %v2310 = vpow.pop %v2309
  %v2311 = vmul.f32 %v2047, 1.442695
  %v2312 = vpow.pop %v2311
  %v2313 = vmul.f32 %v2048, 1.442695
  %v2314 = vpow.pop %v2313
  %v2315 = vmul.f32 %v2049, 1.442695
  %v2316 = vpow.pop %v2315
  %v2317 = vmul.f32 %v2050, 1.442695
  %v2318 = vpow.pop %v2317
  %v2319 = vmul.f32 %v2051, 1.442695
  %v2320 = vpow.pop %v2319
  %v2321 = vmul.f32 %v2052, 1.442695
  %v2322 = vpow.pop %v2321
  %v2323 = vmul.f32 %v2053, 1.442695
  %v2324 = vpow.pop %v2323
  %v2325 = vmul.f32 %v2054, 1.442695
  %v2326 = vpow.pop %v2325
  %v2327 = vmul.f32 %v2055, 1.442695
  %v2328 = vpow.pop %v2327
  %v2329 = vmul.f32 %v2056, 1.442695
  %v2330 = vpow.pop %v2329
  %v2331 = vmul.f32 %v2057, 1.442695
  %v2332 = vpow.pop %v2331
  %v2333 = vmul.f32 %v2058, 1.442695
  %v2334 = vpow.pop %v2333
  %v2335 = vmul.f32 %v2059, 1.442695
  %v2336 = vpow.pop %v2335
  %v2337 = vmul.f32 %v2060, 1.442695
  %v2338 = vpow.pop %v2337
  %v2339 = vmul.f32 %v2061, 1.442695
  %v2340 = vpow.pop %v2339
  %v2341 = vmul.f32 %v2062, 1.442695
  %v2342 = vpow.pop %v2341
  %v2343 = vmul.f32 %v2063, 1.442695
  %v2344 = vpow.pop %v2343
  %v2345 = vmul.f32 %v2064, 1.442695
  %v2346 = vpow.pop %v2345
  %v2347 = vmul.f32 %v2065, 1.442695
  %v2348 = vpow.pop %v2347
  %v2349 = vmul.f32 %v2066, 1.442695
  %v2350 = vpow.pop %v2349
  %v2351 = vmul.f32 %v2067, 1.442695
  %v2352 = vpow.pop %v2351
  %v2353 = vmul.f32 %v2068, 1.442695
  %v2354 = vpow.pop %v2353
  %v2355 = vmul.f32 %v2069, 1.442695
  %v2356 = vpow.pop %v2355
  %v2357 = vmul.f32 %v2070, 1.442695
  %v2358 = vpow.pop %v2357
  %v2359 = vmul.f32 %v2071, 1.442695
  %v2360 = vpow.pop %v2359
  %v2361 = vmul.f32 %v2072, 1.442695
  %v2362 = vpow.pop %v2361
  %v2363 = vmul.f32 %v2073, 1.442695
  %v2364 = vpow.pop %v2363
  %v2365 = vmul.f32 %v2074, 1.442695
  %v2366 = vpow.pop %v2365
  %v2367 = vmul.f32 %v2075, 1.442695
  %v2368 = vpow.pop %v2367
  %v2369 = vmul.f32 %v2076, 1.442695
  %v2370 = vpow.pop %v2369
  %v2371 = vmul.f32 %v2077, 1.442695
  %v2372 = vpow.pop %v2371
  %v2373 = vmul.f32 %v2078, 1.442695
  %v2374 = vpow.pop %v2373
  %v2375 = vmul.f32 %v2079, 1.442695
  %v2376 = vpow.pop %v2375
  %v2377 = vmul.f32 %v2080, 1.442695
  %v2378 = vpow.pop %v2377
  %v2379 = vmul.f32 %v2081, 1.442695
  %v2380 = vpow.pop %v2379
  %v2381 = vmul.f32 %v2082, 1.442695
  %v2382 = vpow.pop %v2381
  %v2383 = vmul.f32 %v2083, 1.442695
  %v2384 = vpow.pop %v2383
  %v2385 = vmul.f32 %v2084, 1.442695
  %v2386 = vpow.pop %v2385
  %v2387 = vmul.f32 %v2085, 1.442695
  %v2388 = vpow.pop %v2387
  %v2389 = vmul.f32 %v2086, 1.442695
  %v2390 = vpow.pop %v2389
  %v2391 = vmul.f32 %v2087, 1.442695
  %v2392 = vpow.pop %v2391
  %v2393 = vmul.f32 %v2088, 1.442695
  %v2394 = vpow.pop %v2393
  %v2395 = vmul.f32 %v2089, 1.442695
  %v2396 = vpow.pop %v2395
  %v2397 = vmul.f32 %v2090, 1.442695
  %v2398 = vpow.pop %v2397
  %v2399 = vmul.f32 %v2091, 1.442695
  %v2400 = vpow.pop %v2399
  %v2401 = vmul.f32 %v2092, 1.442695
  %v2402 = vpow.pop %v2401
  %v2403 = vmul.f32 %v2093, 1.442695
  %v2404 = vpow.pop %v2403
  %v2405 = vmul.f32 %v2094, 1.442695
  %v2406 = vpow.pop %v2405
  %v2407 = vmul.f32 %v2095, 1.442695
  %v2408 = vpow.pop %v2407
  %v2409 = vmul.f32 %v2096, 1.442695
  %v2410 = vpow.pop %v2409
  %v2411 = vmul.f32 %v2097, 1.442695
  %v2412 = vpow.pop %v2411
  %v2413 = vmul.f32 %v2098, 1.442695
  %v2414 = vpow.pop %v2413
  %v2415 = vmul.f32 %v2099, 1.442695
  %v2416 = vpow.pop %v2415
  %v2417 = vmul.f32 %v2100, 1.442695
  %v2418 = vpow.pop %v2417
  %v2419 = vmul.f32 %v2101, 1.442695
  %v2420 = vpow.pop %v2419
  %v2421 = vmul.f32 %v2102, 1.442695
  %v2422 = vpow.pop %v2421
  %v2423 = vmul.f32 %v2103, 1.442695
  %v2424 = vpow.pop %v2423
  %v2425 = vmul.f32 %v2104, 1.442695
  %v2426 = vpow.pop %v2425
  %v2427 = vmul.f32 %v2105, 1.442695
  %v2428 = vpow.pop %v2427
  %v2429 = vmul.f32 %v2106, 1.442695
  %v2430 = vpow.pop %v2429
  %v2431 = vmul.f32 %v2107, 1.442695
  %v2432 = vpow.pop %v2431
  %v2433 = vmul.f32 %v2108, 1.442695
  %v2434 = vpow.pop %v2433
  %v2435 = vmul.f32 %v2109, 1.442695
  %v2436 = vpow.pop %v2435
  %v2437 = vmul.f32 %v2110, 1.442695
  %v2438 = vpow.pop %v2437
  %v2439 = vmul.f32 %v2111, 1.442695
  %v2440 = vpow.pop %v2439
  %v2441 = vmul.f32 %v2112, 1.442695
  %v2442 = vpow.pop %v2441
  %v2443 = vmul.f32 %v2113, 1.442695
  %v2444 = vpow.pop %v2443
  %v2445 = vmul.f32 %v2114, 1.442695
  %v2446 = vpow.pop %v2445
  %v2447 = vmul.f32 %v2115, 1.442695
  %v2448 = vpow.pop %v2447
  %v2449 = vmul.f32 %v2116, 1.442695
  %v2450 = vpow.pop %v2449
  %v2451 = vmul.f32 %v2117, 1.442695
  %v2452 = vpow.pop %v2451
  %v2453 = vmul.f32 %v2118, 1.442695
  %v2454 = vpow.pop %v2453
  %v2455 = vmul.f32 %v2119, 1.442695
  %v2456 = vpow.pop %v2455
  %v2457 = vmul.f32 %v2120, 1.442695
  %v2458 = vpow.pop %v2457
  %v2459 = vmul.f32 %v2121, 1.442695
  %v2460 = vpow.pop %v2459
  %v2461 = vmul.f32 %v2122, 1.442695
  %v2462 = vpow.pop %v2461
  %v2463 = vmul.f32 %v2123, 1.442695
  %v2464 = vpow.pop %v2463
  %v2465 = vmul.f32 %v2124, 1.442695
  %v2466 = vpow.pop %v2465
  %v2467 = vmul.f32 %v2125, 1.442695
  %v2468 = vpow.pop %v2467
  %v2469 = vmul.f32 %v2126, 1.442695
  %v2470 = vpow.pop %v2469
  %v2471 = vmul.f32 %v2127, 1.442695
  %v2472 = vpow.pop %v2471
  %v2473 = vmul.f32 %v2128, 1.442695
  %v2474 = vpow.pop %v2473
  %v2475 = vmul.f32 %v2129, 1.442695
  %v2476 = vpow.pop %v2475
  %v2477 = vmul.f32 %v2130, 1.442695
  %v2478 = vpow.pop %v2477
  %v2479 = vmul.f32 %v2131, 1.442695
  %v2480 = vpow.pop %v2479
  %v2481 = vmul.f32 %v2132, 1.442695
  %v2482 = vpow.pop %v2481
  %v2483 = vmul.f32 %v2133, 1.442695
  %v2484 = vpow.pop %v2483
  %v2485 = vmul.f32 %v2134, 1.442695
  %v2486 = vpow.pop %v2485
  %v2487 = vmul.f32 %v2135, 1.442695
  %v2488 = vpow.pop %v2487
  %v2489 = vmul.f32 %v2136, 1.442695
  %v2490 = vpow.pop %v2489
  %v2491 = vmul.f32 %v2137, 1.442695
  %v2492 = vpow.pop %v2491
  %v2493 = vmul.f32 %v2138, 1.442695
  %v2494 = vpow.pop %v2493
  %v2495 = vmul.f32 %v2139, 1.442695
  %v2496 = vpow.pop %v2495
  %v2497 = vmul.f32 %v2140, 1.442695
  %v2498 = vpow.pop %v2497
  %v2499 = vmul.f32 %v2141, 1.442695
  %v2500 = vpow.pop %v2499
  %v2501 = vmul.f32 %v2142, 1.442695
  %v2502 = vpow.pop %v2501
  %v2503 = vmul.f32 %v2143, 1.442695
  %v2504 = vpow.pop %v2503
  %v2505 = vmul.f32 %v2144, 1.442695
  %v2506 = vpow.pop %v2505
  %v2507 = vmul.f32 %v2145, 1.442695
  %v2508 = vpow.pop %v2507
  %v2509 = vmul.f32 %v2146, 1.442695
  %v2510 = vpow.pop %v2509
  %v2511 = vmul.f32 %v2147, 1.442695
  %v2512 = vpow.pop %v2511
  %v2513 = vmul.f32 %v2148, 1.442695
  %v2514 = vpow.pop %v2513
  %v2515 = vmul.f32 %v2149, 1.442695
  %v2516 = vpow.pop %v2515
  %v2517 = vmul.f32 %v2150, 1.442695
  %v2518 = vpow.pop %v2517
  %v2519 = vmul.f32 %v2151, 1.442695
  %v2520 = vpow.pop %v2519
  %v2521 = vmul.f32 %v2152, 1.442695
  %v2522 = vpow.pop %v2521
  %v2523 = vmul.f32 %v2153, 1.442695
  %v2524 = vpow.pop %v2523
  %v2525 = vmul.f32 %v2154, 1.442695
  %v2526 = vpow.pop %v2525
  %v2527 = vmul.f32 %v2155, 1.442695
  %v2528 = vpow.pop %v2527
  %v2529 = vmul.f32 %v2156, 1.442695
  %v2530 = vpow.pop %v2529
  %v2531 = vmul.f32 %v2157, 1.442695
  %v2532 = vpow.pop %v2531
  %v2533 = vmul.f32 %v2158, 1.442695
  %v2534 = vpow.pop %v2533
  %v2535 = vmul.f32 %v2159, 1.442695
  %v2536 = vpow.pop %v2535
  %v2537 = vmul.f32 %v2160, 1.442695
  %v2538 = vpow.pop %v2537
  %v2539 = vmul.f32 %v2161, 1.442695
  %v2540 = vpow.pop %v2539
  %v2541 = vmul.f32 %v2162, 1.442695
  %v2542 = vpow.pop %v2541
  %v2543 = vmul.f32 %v2163, 1.442695
  %v2544 = vpow.pop %v2543
  %v2545 = vmul.f32 %v2164, 1.442695
  %v2546 = vpow.pop %v2545
  %v2547 = vmul.f32 %v2165, 1.442695
  %v2548 = vpow.pop %v2547
  %v2549 = vmul.f32 %v2166, 1.442695
  %v2550 = vpow.pop %v2549
  %v2551 = vmul.f32 %v2167, 1.442695
  %v2552 = vpow.pop %v2551
  %v2553 = vmul.f32 %v2168, 1.442695
  %v2554 = vpow.pop %v2553
  %v2555 = vmul.f32 %v2169, 1.442695
  %v2556 = vpow.pop %v2555
  %v2557 = vmul.f32 %v2170, 1.442695
  %v2558 = vpow.pop %v2557
  %v2559 = vmul.f32 %v2171, 1.442695
  %v2560 = vpow.pop %v2559
  %v2561 = vmul.f32 %v2172, 1.442695
  %v2562 = vpow.pop %v2561
  %v2563 = vmul.f32 %v2173, 1.442695
  %v2564 = vpow.pop %v2563
  %v2565 = vmul.f32 %v2174, 1.442695
  %v2566 = vpow.pop %v2565
  %v2567 = vmul.f32 %v2175, 1.442695
  %v2568 = vpow.pop %v2567
  %v2569 = vmul.f32 %v2176, 1.442695
  %v2570 = vpow.pop %v2569
  %v2571 = vmul.f32 %v2177, 1.442695
  %v2572 = vpow.pop %v2571
  %v2573 = vmul.f32 %v2178, 1.442695
  %v2574 = vpow.pop %v2573
  %v2575 = vmul.f32 %v2179, 1.442695
  %v2576 = vpow.pop %v2575
  %v2577 = vmul.f32 %v2180, 1.442695
  %v2578 = vpow.pop %v2577
  %v2579 = vmul.f32 %v2181, 1.442695
  %v2580 = vpow.pop %v2579
  %v2581 = vmul.f32 %v2182, 1.442695
  %v2582 = vpow.pop %v2581
  %v2583 = vmul.f32 %v2183, 1.442695
  %v2584 = vpow.pop %v2583
  %v2585 = vmul.f32 %v2184, 1.442695
  %v2586 = vpow.pop %v2585
  %v2587 = vmul.f32 %v2185, 1.442695
  %v2588 = vpow.pop %v2587
  %v2589 = vmul.f32 %v2186, 1.442695
  %v2590 = vpow.pop %v2589
  %v2591 = vmul.f32 %v2187, 1.442695
  %v2592 = vpow.pop %v2591
  %v2593 = vmul.f32 %v2188, 1.442695
  %v2594 = vpow.pop %v2593
  %v2595 = vmul.f32 %v2189, 1.442695
  %v2596 = vpow.pop %v2595
  %v2597 = vmul.f32 %v2190, 1.442695
  %v2598 = vpow.pop %v2597
  %v2599 = vmul.f32 %v2191, 1.442695
  %v2600 = vpow.pop %v2599
  %v2601 = vmul.f32 %v2192, 1.442695
  %v2602 = vpow.pop %v2601
  %v2603 = vmul.f32 %v2193, 1.442695
  %v2604 = vpow.pop %v2603
  %v2605 = vmul.f32 %v2194, 1.442695
  %v2606 = vpow.pop %v2605
  %v2607 = vmul.f32 %v2195, 1.442695
  %v2608 = vpow.pop %v2607
  %v2609 = vmul.f32 %v2196, 1.442695
  %v2610 = vpow.pop %v2609
  %v2611 = vmul.f32 %v2197, 1.442695
  %v2612 = vpow.pop %v2611
  %v2613 = vmul.f32 %v2198, 1.442695
  %v2614 = vpow.pop %v2613
  %v2615 = vmul.f32 %v2199, 1.442695
  %v2616 = vpow.pop %v2615
  %v2617 = vmul.f32 %v2200, 1.442695
  %v2618 = vpow.pop %v2617
  %v2619 = vmul.f32 %v2201, 1.442695
  %v2620 = vpow.pop %v2619
  %v2621 = vmul.f32 %v2202, 1.442695
  %v2622 = vpow.pop %v2621
  %v2623 = vmul.f32 %v2203, 1.442695
  %v2624 = vpow.pop %v2623
  %v2625 = vmul.f32 %v2204, 1.442695
  %v2626 = vpow.pop %v2625
  %v2627 = vmul.f32 %v2205, 1.442695
  %v2628 = vpow.pop %v2627
  %v2629 = vmul.f32 %v2206, 1.442695
  %v2630 = vpow.pop %v2629
  %v2631 = vmul.f32 %v2207, 1.442695
  %v2632 = vpow.pop %v2631
  %v2633 = vmul.f32 %v2208, 1.442695
  %v2634 = vpow.pop %v2633
  %v2635 = vmul.f32 %v2209, 1.442695
  %v2636 = vpow.pop %v2635
  %v2637 = vmul.f32 %v2210, 1.442695
  %v2638 = vpow.pop %v2637
  %v2639 = vmul.f32 %v2211, 1.442695
  %v2640 = vpow.pop %v2639
  %v2641 = vmul.f32 %v2212, 1.442695
  %v2642 = vpow.pop %v2641
  %v2643 = vmul.f32 %v2213, 1.442695
  %v2644 = vpow.pop %v2643
  %v2645 = vmul.f32 %v2214, 1.442695
  %v2646 = vpow.pop %v2645
  %v2647 = vmul.f32 %v2215, 1.442695
  %v2648 = vpow.pop %v2647
  %v2649 = vmul.f32 %v2216, 1.442695
  %v2650 = vpow.pop %v2649
  %v2651 = vmul.f32 %v2217, 1.442695
  %v2652 = vpow.pop %v2651
  %v2653 = vmul.f32 %v2218, 1.442695
  %v2654 = vpow.pop %v2653
  %v2655 = vmul.f32 %v2219, 1.442695
  %v2656 = vpow.pop %v2655
  %v2657 = vmul.f32 %v2220, 1.442695
  %v2658 = vpow.pop %v2657
  %v2659 = vmul.f32 %v2221, 1.442695
  %v2660 = vpow.pop %v2659
  %v2661 = vmul.f32 %v2222, 1.442695
  %v2662 = vpow.pop %v2661
  %v2663 = vmul.f32 %v2223, 1.442695
  %v2664 = vpow.pop %v2663
  %v2665 = vmul.f32 %v2224, 1.442695
  %v2666 = vpow.pop %v2665
  %v2667 = vmul.f32 %v2225, 1.442695
  %v2668 = vpow.pop %v2667
  %v2669 = vmul.f32 %v2226, 1.442695
  %v2670 = vpow.pop %v2669
  %v2671 = vmul.f32 %v2227, 1.442695
  %v2672 = vpow.pop %v2671
  %v2673 = vmul.f32 %v2228, 1.442695
  %v2674 = vpow.pop %v2673
  %v2675 = vmul.f32 %v2229, 1.442695
  %v2676 = vpow.pop %v2675
  %v2677 = vmul.f32 %v2230, 1.442695
  %v2678 = vpow.pop %v2677
  %v2679 = vadd.f32 %v2232, 1.0
  %v2680 = vadd.f32 %v2234, 1.0
  %v2681 = vadd.f32 %v2236, 1.0
  %v2682 = vadd.f32 %v2238, 1.0
  %v2683 = vadd.f32 %v2240, 1.0
  %v2684 = vadd.f32 %v2242, 1.0
  %v2685 = vadd.f32 %v2244, 1.0
  %v2686 = vadd.f32 %v2246, 1.0
  %v2687 = vadd.f32 %v2248, 1.0
  %v2688 = vadd.f32 %v2250, 1.0
  %v2689 = vadd.f32 %v2252, 1.0
  %v2690 = vadd.f32 %v2254, 1.0
  %v2691 = vadd.f32 %v2256, 1.0
  %v2692 = vadd.f32 %v2258, 1.0
  %v2693 = vadd.f32 %v2260, 1.0
  %v2694 = vadd.f32 %v2262, 1.0
  %v2695 = vadd.f32 %v2264, 1.0
  %v2696 = vadd.f32 %v2266, 1.0
  %v2697 = vadd.f32 %v2268, 1.0
  %v2698 = vadd.f32 %v2270, 1.0
  %v2699 = vadd.f32 %v2272, 1.0
  %v2700 = vadd.f32 %v2274, 1.0
  %v2701 = vadd.f32 %v2276, 1.0
  %v2702 = vadd.f32 %v2278, 1.0
  %v2703 = vadd.f32 %v2280, 1.0
  %v2704 = vadd.f32 %v2282, 1.0
  %v2705 = vadd.f32 %v2284, 1.0
  %v2706 = vadd.f32 %v2286, 1.0
  %v2707 = vadd.f32 %v2288, 1.0
  %v2708 = vadd.f32 %v2290, 1.0
  %v2709 = vadd.f32 %v2292, 1.0
  %v2710 = vadd.f32 %v2294, 1.0
  %v2711 = vadd.f32 %v2296, 1.0
  %v2712 = vadd.f32 %v2298, 1.0
  %v2713 = vadd.f32 %v2300, 1.0
  %v2714 = vadd.f32 %v2302, 1.0
  %v2715 = vadd.f32 %v2304, 1.0
  %v2716 = vadd.f32 %v2306, 1.0
  %v2717 = vadd.f32 %v2308, 1.0
  %v2718 = vadd.f32 %v2310, 1.0
  %v2719 = vadd.f32 %v2312, 1.0
  %v2720 = vadd.f32 %v2314, 1.0
  %v2721 = vadd.f32 %v2316, 1.0
  %v2722 = vadd.f32 %v2318, 1.0
  %v2723 = vadd.f32 %v2320, 1.0
  %v2724 = vadd.f32 %v2322, 1.0
  %v2725 = vadd.f32 %v2324, 1.0
  %v2726 = vadd.f32 %v2326, 1.0
  %v2727 = vadd.f32 %v2328, 1.0
  %v2728 = vadd.f32 %v2330, 1.0
  %v2729 = vadd.f32 %v2332, 1.0
  %v2730 = vadd.f32 %v2334, 1.0
  %v2731 = vadd.f32 %v2336, 1.0
  %v2732 = vadd.f32 %v2338, 1.0
  %v2733 = vadd.f32 %v2340, 1.0
  %v2734 = vadd.f32 %v2342, 1.0
  %v2735 = vadd.f32 %v2344, 1.0
  %v2736 = vadd.f32 %v2346, 1.0
  %v2737 = vadd.f32 %v2348, 1.0
  %v2738 = vadd.f32 %v2350, 1.0
  %v2739 = vadd.f32 %v2352, 1.0
  %v2740 = vadd.f32 %v2354, 1.0
  %v2741 = vadd.f32 %v2356, 1.0
  %v2742 = vadd.f32 %v2358, 1.0
  %v2743 = vadd.f32 %v2360, 1.0
  %v2744 = vadd.f32 %v2362, 1.0
  %v2745 = vadd.f32 %v2364, 1.0
  %v2746 = vadd.f32 %v2366, 1.0
  %v2747 = vadd.f32 %v2368, 1.0
  %v2748 = vadd.f32 %v2370, 1.0
  %v2749 = vadd.f32 %v2372, 1.0
  %v2750 = vadd.f32 %v2374, 1.0
  %v2751 = vadd.f32 %v2376, 1.0
  %v2752 = vadd.f32 %v2378, 1.0
  %v2753 = vadd.f32 %v2380, 1.0
  %v2754 = vadd.f32 %v2382, 1.0
  %v2755 = vadd.f32 %v2384, 1.0
  %v2756 = vadd.f32 %v2386, 1.0
  %v2757 = vadd.f32 %v2388, 1.0
  %v2758 = vadd.f32 %v2390, 1.0
  %v2759 = vadd.f32 %v2392, 1.0
  %v2760 = vadd.f32 %v2394, 1.0
  %v2761 = vadd.f32 %v2396, 1.0
  %v2762 = vadd.f32 %v2398, 1.0
  %v2763 = vadd.f32 %v2400, 1.0
  %v2764 = vadd.f32 %v2402, 1.0
  %v2765 = vadd.f32 %v2404, 1.0
  %v2766 = vadd.f32 %v2406, 1.0
  %v2767 = vadd.f32 %v2408, 1.0
  %v2768 = vadd.f32 %v2410, 1.0
  %v2769 = vadd.f32 %v2412, 1.0
  %v2770 = vadd.f32 %v2414, 1.0
  %v2771 = vadd.f32 %v2416, 1.0
  %v2772 = vadd.f32 %v2418, 1.0
  %v2773 = vadd.f32 %v2420, 1.0
  %v2774 = vadd.f32 %v2422, 1.0
  %v2775 = vadd.f32 %v2424, 1.0
  %v2776 = vadd.f32 %v2426, 1.0
  %v2777 = vadd.f32 %v2428, 1.0
  %v2778 = vadd.f32 %v2430, 1.0
  %v2779 = vadd.f32 %v2432, 1.0
  %v2780 = vadd.f32 %v2434, 1.0
  %v2781 = vadd.f32 %v2436, 1.0
  %v2782 = vadd.f32 %v2438, 1.0
  %v2783 = vadd.f32 %v2440, 1.0
  %v2784 = vadd.f32 %v2442, 1.0
  %v2785 = vadd.f32 %v2444, 1.0
  %v2786 = vadd.f32 %v2446, 1.0
  %v2787 = vadd.f32 %v2448, 1.0
  %v2788 = vadd.f32 %v2450, 1.0
  %v2789 = vadd.f32 %v2452, 1.0
  %v2790 = vadd.f32 %v2454, 1.0
  %v2791 = vadd.f32 %v2456, 1.0
  %v2792 = vadd.f32 %v2458, 1.0
  %v2793 = vadd.f32 %v2460, 1.0
  %v2794 = vadd.f32 %v2462, 1.0
  %v2795 = vadd.f32 %v2464, 1.0
  %v2796 = vadd.f32 %v2466, 1.0
  %v2797 = vadd.f32 %v2468, 1.0
  %v2798 = vadd.f32 %v2470, 1.0
  %v2799 = vadd.f32 %v2472, 1.0
  %v2800 = vadd.f32 %v2474, 1.0
  %v2801 = vadd.f32 %v2476, 1.0
  %v2802 = vadd.f32 %v2478, 1.0
  %v2803 = vadd.f32 %v2480, 1.0
  %v2804 = vadd.f32 %v2482, 1.0
  %v2805 = vadd.f32 %v2484, 1.0
  %v2806 = vadd.f32 %v2486, 1.0
  %v2807 = vadd.f32 %v2488, 1.0
  %v2808 = vadd.f32 %v2490, 1.0
  %v2809 = vadd.f32 %v2492, 1.0
  %v2810 = vadd.f32 %v2494, 1.0
  %v2811 = vadd.f32 %v2496, 1.0
  %v2812 = vadd.f32 %v2498, 1.0
  %v2813 = vadd.f32 %v2500, 1.0
  %v2814 = vadd.f32 %v2502, 1.0
  %v2815 = vadd.f32 %v2504, 1.0
  %v2816 = vadd.f32 %v2506, 1.0
  %v2817 = vadd.f32 %v2508, 1.0
  %v2818 = vadd.f32 %v2510, 1.0
  %v2819 = vadd.f32 %v2512, 1.0
  %v2820 = vadd.f32 %v2514, 1.0
  %v2821 = vadd.f32 %v2516, 1.0
  %v2822 = vadd.f32 %v2518, 1.0
  %v2823 = vadd.f32 %v2520, 1.0
  %v2824 = vadd.f32 %v2522, 1.0
  %v2825 = vadd.f32 %v2524, 1.0
  %v2826 = vadd.f32 %v2526, 1.0
  %v2827 = vadd.f32 %v2528, 1.0
  %v2828 = vadd.f32 %v2530, 1.0
  %v2829 = vadd.f32 %v2532, 1.0
  %v2830 = vadd.f32 %v2534, 1.0
  %v2831 = vadd.f32 %v2536, 1.0
  %v2832 = vadd.f32 %v2538, 1.0
  %v2833 = vadd.f32 %v2540, 1.0
  %v2834 = vadd.f32 %v2542, 1.0
  %v2835 = vadd.f32 %v2544, 1.0
  %v2836 = vadd.f32 %v2546, 1.0
  %v2837 = vadd.f32 %v2548, 1.0
  %v2838 = vadd.f32 %v2550, 1.0
  %v2839 = vadd.f32 %v2552, 1.0
  %v2840 = vadd.f32 %v2554, 1.0
  %v2841 = vadd.f32 %v2556, 1.0
  %v2842 = vadd.f32 %v2558, 1.0
  %v2843 = vadd.f32 %v2560, 1.0
  %v2844 = vadd.f32 %v2562, 1.0
  %v2845 = vadd.f32 %v2564, 1.0
  %v2846 = vadd.f32 %v2566, 1.0
  %v2847 = vadd.f32 %v2568, 1.0
  %v2848 = vadd.f32 %v2570, 1.0
  %v2849 = vadd.f32 %v2572, 1.0
  %v2850 = vadd.f32 %v2574, 1.0
  %v2851 = vadd.f32 %v2576, 1.0
  %v2852 = vadd.f32 %v2578, 1.0
  %v2853 = vadd.f32 %v2580, 1.0
  %v2854 = vadd.f32 %v2582, 1.0
  %v2855 = vadd.f32 %v2584, 1.0
  %v2856 = vadd.f32 %v2586, 1.0
  %v2857 = vadd.f32 %v2588, 1.0
  %v2858 = vadd.f32 %v2590, 1.0
  %v2859 = vadd.f32 %v2592, 1.0
  %v2860 = vadd.f32 %v2594, 1.0
  %v2861 = vadd.f32 %v2596, 1.0
  %v2862 = vadd.f32 %v2598, 1.0
  %v2863 = vadd.f32 %v2600, 1.0
  %v2864 = vadd.f32 %v2602, 1.0
  %v2865 = vadd.f32 %v2604, 1.0
  %v2866 = vadd.f32 %v2606, 1.0
  %v2867 = vadd.f32 %v2608, 1.0
  %v2868 = vadd.f32 %v2610, 1.0
  %v2869 = vadd.f32 %v2612, 1.0
  %v2870 = vadd.f32 %v2614, 1.0
  %v2871 = vadd.f32 %v2616, 1.0
  %v2872 = vadd.f32 %v2618, 1.0
  %v2873 = vadd.f32 %v2620, 1.0
  %v2874 = vadd.f32 %v2622, 1.0
  %v2875 = vadd.f32 %v2624, 1.0
  %v2876 = vadd.f32 %v2626, 1.0
  %v2877 = vadd.f32 %v2628, 1.0
  %v2878 = vadd.f32 %v2630, 1.0
  %v2879 = vadd.f32 %v2632, 1.0
  %v2880 = vadd.f32 %v2634, 1.0
  %v2881 = vadd.f32 %v2636, 1.0
  %v2882 = vadd.f32 %v2638, 1.0
  %v2883 = vadd.f32 %v2640, 1.0
  %v2884 = vadd.f32 %v2642, 1.0
  %v2885 = vadd.f32 %v2644, 1.0
  %v2886 = vadd.f32 %v2646, 1.0
  %v2887 = vadd.f32 %v2648, 1.0
  %v2888 = vadd.f32 %v2650, 1.0
  %v2889 = vadd.f32 %v2652, 1.0
  %v2890 = vadd.f32 %v2654, 1.0
  %v2891 = vadd.f32 %v2656, 1.0
  %v2892 = vadd.f32 %v2658, 1.0
  %v2893 = vadd.f32 %v2660, 1.0
  %v2894 = vadd.f32 %v2662, 1.0
  %v2895 = vadd.f32 %v2664, 1.0
  %v2896 = vadd.f32 %v2666, 1.0
  %v2897 = vadd.f32 %v2668, 1.0
  %v2898 = vadd.f32 %v2670, 1.0
  %v2899 = vadd.f32 %v2672, 1.0
  %v2900 = vadd.f32 %v2674, 1.0
  %v2901 = vadd.f32 %v2676, 1.0
  %v2902 = vadd.f32 %v2678, 1.0
  %v2903 = vrcp.pop %v2679
  %v2904 = vmul.f32 1.0, %v2903
  %v2905 = vrcp.pop %v2680
  %v2906 = vmul.f32 1.0, %v2905
  %v2907 = vrcp.pop %v2681
  %v2908 = vmul.f32 1.0, %v2907
  %v2909 = vrcp.pop %v2682
  %v2910 = vmul.f32 1.0, %v2909
  %v2911 = vrcp.pop %v2683
  %v2912 = vmul.f32 1.0, %v2911
  %v2913 = vrcp.pop %v2684
  %v2914 = vmul.f32 1.0, %v2913
  %v2915 = vrcp.pop %v2685
  %v2916 = vmul.f32 1.0, %v2915
  %v2917 = vrcp.pop %v2686
  %v2918 = vmul.f32 1.0, %v2917
  %v2919 = vrcp.pop %v2687
  %v2920 = vmul.f32 1.0, %v2919
  %v2921 = vrcp.pop %v2688
  %v2922 = vmul.f32 1.0, %v2921
  %v2923 = vrcp.pop %v2689
  %v2924 = vmul.f32 1.0, %v2923
  %v2925 = vrcp.pop %v2690
  %v2926 = vmul.f32 1.0, %v2925
  %v2927 = vrcp.pop %v2691
  %v2928 = vmul.f32 1.0, %v2927
  %v2929 = vrcp.pop %v2692
  %v2930 = vmul.f32 1.0, %v2929
  %v2931 = vrcp.pop %v2693
  %v2932 = vmul.f32 1.0, %v2931
  %v2933 = vrcp.pop %v2694
  %v2934 = vmul.f32 1.0, %v2933
  %v2935 = vrcp.pop %v2695
  %v2936 = vmul.f32 1.0, %v2935
  %v2937 = vrcp.pop %v2696
  %v2938 = vmul.f32 1.0, %v2937
  %v2939 = vrcp.pop %v2697
  %v2940 = vmul.f32 1.0, %v2939
  %v2941 = vrcp.pop %v2698
  %v2942 = vmul.f32 1.0, %v2941
  %v2943 = vrcp.pop %v2699
  %v2944 = vmul.f32 1.0, %v2943
  %v2945 = vrcp.pop %v2700
  %v2946 = vmul.f32 1.0, %v2945
  %v2947 = vrcp.pop %v2701
  %v2948 = vmul.f32 1.0, %v2947
  %v2949 = vrcp.pop %v2702
  %v2950 = vmul.f32 1.0, %v2949
  %v2951 = vrcp.pop %v2703
  %v2952 = vmul.f32 1.0, %v2951
  %v2953 = vrcp.pop %v2704
  %v2954 = vmul.f32 1.0, %v2953
  %v2955 = vrcp.pop %v2705
  %v2956 = vmul.f32 1.0, %v2955
  %v2957 = vrcp.pop %v2706
  %v2958 = vmul.f32 1.0, %v2957
  %v2959 = vrcp.pop %v2707
  %v2960 = vmul.f32 1.0, %v2959
  %v2961 = vrcp.pop %v2708
  %v2962 = vmul.f32 1.0, %v2961
  %v2963 = vrcp.pop %v2709
  %v2964 = vmul.f32 1.0, %v2963
  %v2965 = vrcp.pop %v2710
  %v2966 = vmul.f32 1.0, %v2965
  %v2967 = vrcp.pop %v2711
  %v2968 = vmul.f32 1.0, %v2967
  %v2969 = vrcp.pop %v2712
  %v2970 = vmul.f32 1.0, %v2969
  %v2971 = vrcp.pop %v2713
  %v2972 = vmul.f32 1.0, %v2971
  %v2973 = vrcp.pop %v2714
  %v2974 = vmul.f32 1.0, %v2973
  %v2975 = vrcp.pop %v2715
  %v2976 = vmul.f32 1.0, %v2975
  %v2977 = vrcp.pop %v2716
  %v2978 = vmul.f32 1.0, %v2977
  %v2979 = vrcp.pop %v2717
  %v2980 = vmul.f32 1.0, %v2979
  %v2981 = vrcp.pop %v2718
  %v2982 = vmul.f32 1.0, %v2981
  %v2983 = vrcp.pop %v2719
  %v2984 = vmul.f32 1.0, %v2983
  %v2985 = vrcp.pop %v2720
  %v2986 = vmul.f32 1.0, %v2985
  %v2987 = vrcp.pop %v2721
  %v2988 = vmul.f32 1.0, %v2987
  %v2989 = vrcp.pop %v2722
  %v2990 = vmul.f32 1.0, %v2989
  %v2991 = vrcp.pop %v2723
  %v2992 = vmul.f32 1.0, %v2991
  %v2993 = vrcp.pop %v2724
  %v2994 = vmul.f32 1.0, %v2993
  %v2995 = vrcp.pop %v2725
  %v2996 = vmul.f32 1.0, %v2995
  %v2997 = vrcp.pop %v2726
  %v2998 = vmul.f32 1.0, %v2997
  %v2999 = vrcp.pop %v2727
  %v3000 = vmul.f32 1.0, %v2999
  %v3001 = vrcp.pop %v2728
  %v3002 = vmul.f32 1.0, %v3001
  %v3003 = vrcp.pop %v2729
  %v3004 = vmul.f32 1.0, %v3003
  %v3005 = vrcp.pop %v2730
  %v3006 = vmul.f32 1.0, %v3005
  %v3007 = vrcp.pop %v2731
  %v3008 = vmul.f32 1.0, %v3007
  %v3009 = vrcp.pop %v2732
  %v3010 = vmul.f32 1.0, %v3009
  %v3011 = vrcp.pop %v2733
  %v3012 = vmul.f32 1.0, %v3011
  %v3013 = vrcp.pop %v2734
  %v3014 = vmul.f32 1.0, %v3013
  %v3015 = vrcp.pop %v2735
  %v3016 = vmul.f32 1.0, %v3015
  %v3017 = vrcp.pop %v2736
  %v3018 = vmul.f32 1.0, %v3017
  %v3019 = vrcp.pop %v2737
  %v3020 = vmul.f32 1.0, %v3019
  %v3021 = vrcp.pop %v2738
  %v3022 = vmul.f32 1.0, %v3021
  %v3023 = vrcp.pop %v2739
  %v3024 = vmul.f32 1.0, %v3023
  %v3025 = vrcp.pop %v2740
  %v3026 = vmul.f32 1.0, %v3025
  %v3027 = vrcp.pop %v2741
  %v3028 = vmul.f32 1.0, %v3027
  %v3029 = vrcp.pop %v2742
  %v3030 = vmul.f32 1.0, %v3029
  %v3031 = vrcp.pop %v2743
  %v3032 = vmul.f32 1.0, %v3031
  %v3033 = vrcp.pop %v2744
  %v3034 = vmul.f32 1.0, %v3033
  %v3035 = vrcp.pop %v2745
  %v3036 = vmul.f32 1.0, %v3035
  %v3037 = vrcp.pop %v2746
  %v3038 = vmul.f32 1.0, %v3037
  %v3039 = vrcp.pop %v2747
  %v3040 = vmul.f32 1.0, %v3039
  %v3041 = vrcp.pop %v2748
  %v3042 = vmul.f32 1.0, %v3041
  %v3043 = vrcp.pop %v2749
  %v3044 = vmul.f32 1.0, %v3043
  %v3045 = vrcp.pop %v2750
  %v3046 = vmul.f32 1.0, %v3045
  %v3047 = vrcp.pop %v2751
  %v3048 = vmul.f32 1.0, %v3047
  %v3049 = vrcp.pop %v2752
  %v3050 = vmul.f32 1.0, %v3049
  %v3051 = vrcp.pop %v2753
  %v3052 = vmul.f32 1.0, %v3051
  %v3053 = vrcp.pop %v2754
  %v3054 = vmul.f32 1.0, %v3053
  %v3055 = vrcp.pop %v2755
  %v3056 = vmul.f32 1.0, %v3055
  %v3057 = vrcp.pop %v2756
  %v3058 = vmul.f32 1.0, %v3057
  %v3059 = vrcp.pop %v2757
  %v3060 = vmul.f32 1.0, %v3059
  %v3061 = vrcp.pop %v2758
  %v3062 = vmul.f32 1.0, %v3061
  %v3063 = vrcp.pop %v2759
  %v3064 = vmul.f32 1.0, %v3063
  %v3065 = vrcp.pop %v2760
  %v3066 = vmul.f32 1.0, %v3065
  %v3067 = vrcp.pop %v2761
  %v3068 = vmul.f32 1.0, %v3067
  %v3069 = vrcp.pop %v2762
  %v3070 = vmul.f32 1.0, %v3069
  %v3071 = vrcp.pop %v2763
  %v3072 = vmul.f32 1.0, %v3071
  %v3073 = vrcp.pop %v2764
  %v3074 = vmul.f32 1.0, %v3073
  %v3075 = vrcp.pop %v2765
  %v3076 = vmul.f32 1.0, %v3075
  %v3077 = vrcp.pop %v2766
  %v3078 = vmul.f32 1.0, %v3077
  %v3079 = vrcp.pop %v2767
  %v3080 = vmul.f32 1.0, %v3079
  %v3081 = vrcp.pop %v2768
  %v3082 = vmul.f32 1.0, %v3081
  %v3083 = vrcp.pop %v2769
  %v3084 = vmul.f32 1.0, %v3083
  %v3085 = vrcp.pop %v2770
  %v3086 = vmul.f32 1.0, %v3085
  %v3087 = vrcp.pop %v2771
  %v3088 = vmul.f32 1.0, %v3087
  %v3089 = vrcp.pop %v2772
  %v3090 = vmul.f32 1.0, %v3089
  %v3091 = vrcp.pop %v2773
  %v3092 = vmul.f32 1.0, %v3091
  %v3093 = vrcp.pop %v2774
  %v3094 = vmul.f32 1.0, %v3093
  %v3095 = vrcp.pop %v2775
  %v3096 = vmul.f32 1.0, %v3095
  %v3097 = vrcp.pop %v2776
  %v3098 = vmul.f32 1.0, %v3097
  %v3099 = vrcp.pop %v2777
  %v3100 = vmul.f32 1.0, %v3099
  %v3101 = vrcp.pop %v2778
  %v3102 = vmul.f32 1.0, %v3101
  %v3103 = vrcp.pop %v2779
  %v3104 = vmul.f32 1.0, %v3103
  %v3105 = vrcp.pop %v2780
  %v3106 = vmul.f32 1.0, %v3105
  %v3107 = vrcp.pop %v2781
  %v3108 = vmul.f32 1.0, %v3107
  %v3109 = vrcp.pop %v2782
  %v3110 = vmul.f32 1.0, %v3109
  %v3111 = vrcp.pop %v2783
  %v3112 = vmul.f32 1.0, %v3111
  %v3113 = vrcp.pop %v2784
  %v3114 = vmul.f32 1.0, %v3113
  %v3115 = vrcp.pop %v2785
  %v3116 = vmul.f32 1.0, %v3115
  %v3117 = vrcp.pop %v2786
  %v3118 = vmul.f32 1.0, %v3117
  %v3119 = vrcp.pop %v2787
  %v3120 = vmul.f32 1.0, %v3119
  %v3121 = vrcp.pop %v2788
  %v3122 = vmul.f32 1.0, %v3121
  %v3123 = vrcp.pop %v2789
  %v3124 = vmul.f32 1.0, %v3123
  %v3125 = vrcp.pop %v2790
  %v3126 = vmul.f32 1.0, %v3125
  %v3127 = vrcp.pop %v2791
  %v3128 = vmul.f32 1.0, %v3127
  %v3129 = vrcp.pop %v2792
  %v3130 = vmul.f32 1.0, %v3129
  %v3131 = vrcp.pop %v2793
  %v3132 = vmul.f32 1.0, %v3131
  %v3133 = vrcp.pop %v2794
  %v3134 = vmul.f32 1.0, %v3133
  %v3135 = vrcp.pop %v2795
  %v3136 = vmul.f32 1.0, %v3135
  %v3137 = vrcp.pop %v2796
  %v3138 = vmul.f32 1.0, %v3137
  %v3139 = vrcp.pop %v2797
  %v3140 = vmul.f32 1.0, %v3139
  %v3141 = vrcp.pop %v2798
  %v3142 = vmul.f32 1.0, %v3141
  %v3143 = vrcp.pop %v2799
  %v3144 = vmul.f32 1.0, %v3143
  %v3145 = vrcp.pop %v2800
  %v3146 = vmul.f32 1.0, %v3145
  %v3147 = vrcp.pop %v2801
  %v3148 = vmul.f32 1.0, %v3147
  %v3149 = vrcp.pop %v2802
  %v3150 = vmul.f32 1.0, %v3149
  %v3151 = vrcp.pop %v2803
  %v3152 = vmul.f32 1.0, %v3151
  %v3153 = vrcp.pop %v2804
  %v3154 = vmul.f32 1.0, %v3153
  %v3155 = vrcp.pop %v2805
  %v3156 = vmul.f32 1.0, %v3155
  %v3157 = vrcp.pop %v2806
  %v3158 = vmul.f32 1.0, %v3157
  %v3159 = vrcp.pop %v2807
  %v3160 = vmul.f32 1.0, %v3159
  %v3161 = vrcp.pop %v2808
  %v3162 = vmul.f32 1.0, %v3161
  %v3163 = vrcp.pop %v2809
  %v3164 = vmul.f32 1.0, %v3163
  %v3165 = vrcp.pop %v2810
  %v3166 = vmul.f32 1.0, %v3165
  %v3167 = vrcp.pop %v2811
  %v3168 = vmul.f32 1.0, %v3167
  %v3169 = vrcp.pop %v2812
  %v3170 = vmul.f32 1.0, %v3169
  %v3171 = vrcp.pop %v2813
  %v3172 = vmul.f32 1.0, %v3171
  %v3173 = vrcp.pop %v2814
  %v3174 = vmul.f32 1.0, %v3173
  %v3175 = vrcp.pop %v2815
  %v3176 = vmul.f32 1.0, %v3175
  %v3177 = vrcp.pop %v2816
  %v3178 = vmul.f32 1.0, %v3177
  %v3179 = vrcp.pop %v2817
  %v3180 = vmul.f32 1.0, %v3179
  %v3181 = vrcp.pop %v2818
  %v3182 = vmul.f32 1.0, %v3181
  %v3183 = vrcp.pop %v2819
  %v3184 = vmul.f32 1.0, %v3183
  %v3185 = vrcp.pop %v2820
  %v3186 = vmul.f32 1.0, %v3185
  %v3187 = vrcp.pop %v2821
  %v3188 = vmul.f32 1.0, %v3187
  %v3189 = vrcp.pop %v2822
  %v3190 = vmul.f32 1.0, %v3189
  %v3191 = vrcp.pop %v2823
  %v3192 = vmul.f32 1.0, %v3191
  %v3193 = vrcp.pop %v2824
  %v3194 = vmul.f32 1.0, %v3193
  %v3195 = vrcp.pop %v2825
  %v3196 = vmul.f32 1.0, %v3195
  %v3197 = vrcp.pop %v2826
  %v3198 = vmul.f32 1.0, %v3197
  %v3199 = vrcp.pop %v2827
  %v3200 = vmul.f32 1.0, %v3199
  %v3201 = vrcp.pop %v2828
  %v3202 = vmul.f32 1.0, %v3201
  %v3203 = vrcp.pop %v2829
  %v3204 = vmul.f32 1.0, %v3203
  %v3205 = vrcp.pop %v2830
  %v3206 = vmul.f32 1.0, %v3205
  %v3207 = vrcp.pop %v2831
  %v3208 = vmul.f32 1.0, %v3207
  %v3209 = vrcp.pop %v2832
  %v3210 = vmul.f32 1.0, %v3209
  %v3211 = vrcp.pop %v2833
  %v3212 = vmul.f32 1.0, %v3211
  %v3213 = vrcp.pop %v2834
  %v3214 = vmul.f32 1.0, %v3213
  %v3215 = vrcp.pop %v2835
  %v3216 = vmul.f32 1.0, %v3215
  %v3217 = vrcp.pop %v2836
  %v3218 = vmul.f32 1.0, %v3217
  %v3219 = vrcp.pop %v2837
  %v3220 = vmul.f32 1.0, %v3219
  %v3221 = vrcp.pop %v2838
  %v3222 = vmul.f32 1.0, %v3221
  %v3223 = vrcp.pop %v2839
  %v3224 = vmul.f32 1.0, %v3223
  %v3225 = vrcp.pop %v2840
  %v3226 = vmul.f32 1.0, %v3225
  %v3227 = vrcp.pop %v2841
  %v3228 = vmul.f32 1.0, %v3227
  %v3229 = vrcp.pop %v2842
  %v3230 = vmul.f32 1.0, %v3229
  %v3231 = vrcp.pop %v2843
  %v3232 = vmul.f32 1.0, %v3231
  %v3233 = vrcp.pop %v2844
  %v3234 = vmul.f32 1.0, %v3233
  %v3235 = vrcp.pop %v2845
  %v3236 = vmul.f32 1.0, %v3235
  %v3237 = vrcp.pop %v2846
  %v3238 = vmul.f32 1.0, %v3237
  %v3239 = vrcp.pop %v2847
  %v3240 = vmul.f32 1.0, %v3239
  %v3241 = vrcp.pop %v2848
  %v3242 = vmul.f32 1.0, %v3241
  %v3243 = vrcp.pop %v2849
  %v3244 = vmul.f32 1.0, %v3243
  %v3245 = vrcp.pop %v2850
  %v3246 = vmul.f32 1.0, %v3245
  %v3247 = vrcp.pop %v2851
  %v3248 = vmul.f32 1.0, %v3247
  %v3249 = vrcp.pop %v2852
  %v3250 = vmul.f32 1.0, %v3249
  %v3251 = vrcp.pop %v2853
  %v3252 = vmul.f32 1.0, %v3251
  %v3253 = vrcp.pop %v2854
  %v3254 = vmul.f32 1.0, %v3253
  %v3255 = vrcp.pop %v2855
  %v3256 = vmul.f32 1.0, %v3255
  %v3257 = vrcp.pop %v2856
  %v3258 = vmul.f32 1.0, %v3257
  %v3259 = vrcp.pop %v2857
  %v3260 = vmul.f32 1.0, %v3259
  %v3261 = vrcp.pop %v2858
  %v3262 = vmul.f32 1.0, %v3261
  %v3263 = vrcp.pop %v2859
  %v3264 = vmul.f32 1.0, %v3263
  %v3265 = vrcp.pop %v2860
  %v3266 = vmul.f32 1.0, %v3265
  %v3267 = vrcp.pop %v2861
  %v3268 = vmul.f32 1.0, %v3267
  %v3269 = vrcp.pop %v2862
  %v3270 = vmul.f32 1.0, %v3269
  %v3271 = vrcp.pop %v2863
  %v3272 = vmul.f32 1.0, %v3271
  %v3273 = vrcp.pop %v2864
  %v3274 = vmul.f32 1.0, %v3273
  %v3275 = vrcp.pop %v2865
  %v3276 = vmul.f32 1.0, %v3275
  %v3277 = vrcp.pop %v2866
  %v3278 = vmul.f32 1.0, %v3277
  %v3279 = vrcp.pop %v2867
  %v3280 = vmul.f32 1.0, %v3279
  %v3281 = vrcp.pop %v2868
  %v3282 = vmul.f32 1.0, %v3281
  %v3283 = vrcp.pop %v2869
  %v3284 = vmul.f32 1.0, %v3283
  %v3285 = vrcp.pop %v2870
  %v3286 = vmul.f32 1.0, %v3285
  %v3287 = vrcp.pop %v2871
  %v3288 = vmul.f32 1.0, %v3287
  %v3289 = vrcp.pop %v2872
  %v3290 = vmul.f32 1.0, %v3289
  %v3291 = vrcp.pop %v2873
  %v3292 = vmul.f32 1.0, %v3291
  %v3293 = vrcp.pop %v2874
  %v3294 = vmul.f32 1.0, %v3293
  %v3295 = vrcp.pop %v2875
  %v3296 = vmul.f32 1.0, %v3295
  %v3297 = vrcp.pop %v2876
  %v3298 = vmul.f32 1.0, %v3297
  %v3299 = vrcp.pop %v2877
  %v3300 = vmul.f32 1.0, %v3299
  %v3301 = vrcp.pop %v2878
  %v3302 = vmul.f32 1.0, %v3301
  %v3303 = vrcp.pop %v2879
  %v3304 = vmul.f32 1.0, %v3303
  %v3305 = vrcp.pop %v2880
  %v3306 = vmul.f32 1.0, %v3305
  %v3307 = vrcp.pop %v2881
  %v3308 = vmul.f32 1.0, %v3307
  %v3309 = vrcp.pop %v2882
  %v3310 = vmul.f32 1.0, %v3309
  %v3311 = vrcp.pop %v2883
  %v3312 = vmul.f32 1.0, %v3311
  %v3313 = vrcp.pop %v2884
  %v3314 = vmul.f32 1.0, %v3313
  %v3315 = vrcp.pop %v2885
  %v3316 = vmul.f32 1.0, %v3315
  %v3317 = vrcp.pop %v2886
  %v3318 = vmul.f32 1.0, %v3317
  %v3319 = vrcp.pop %v2887
  %v3320 = vmul.f32 1.0, %v3319
  %v3321 = vrcp.pop %v2888
  %v3322 = vmul.f32 1.0, %v3321
  %v3323 = vrcp.pop %v2889
  %v3324 = vmul.f32 1.0, %v3323
  %v3325 = vrcp.pop %v2890
  %v3326 = vmul.f32 1.0, %v3325
  %v3327 = vrcp.pop %v2891
  %v3328 = vmul.f32 1.0, %v3327
  %v3329 = vrcp.pop %v2892
  %v3330 = vmul.f32 1.0, %v3329
  %v3331 = vrcp.pop %v2893
  %v3332 = vmul.f32 1.0, %v3331
  %v3333 = vrcp.pop %v2894
  %v3334 = vmul.f32 1.0, %v3333
  %v3335 = vrcp.pop %v2895
  %v3336 = vmul.f32 1.0, %v3335
  %v3337 = vrcp.pop %v2896
  %v3338 = vmul.f32 1.0, %v3337
  %v3339 = vrcp.pop %v2897
  %v3340 = vmul.f32 1.0, %v3339
  %v3341 = vrcp.pop %v2898
  %v3342 = vmul.f32 1.0, %v3341
  %v3343 = vrcp.pop %v2899
  %v3344 = vmul.f32 1.0, %v3343
  %v3345 = vrcp.pop %v2900
  %v3346 = vmul.f32 1.0, %v3345
  %v3347 = vrcp.pop %v2901
  %v3348 = vmul.f32 1.0, %v3347
  %v3349 = vrcp.pop %v2902
  %v3350 = vmul.f32 1.0, %v3349
  %3351 = vst [vmem:[%s5] sm:$0xff] %v2904
  %3352 = vst [vmem:[%s5 + $0x8] sm:$0xff] %v2906
  %3353 = vst [vmem:[%s5 + $0x10] sm:$0xff] %v2908
  %3354 = vst [vmem:[%s5 + $0x18] sm:$0xff] %v2910
  %3355 = vst [vmem:[%s5 + $0x20] sm:$0xff] %v2912
  %3356 = vst [vmem:[%s5 + $0x28] sm:$0xff] %v2914
  %vm3357 = vcmask 130048
  %3358 = vst.msk [vmem:[%s5 + $0x30] sm:$0xff] %vm3357, %v2916
  %3359 = vst [vmem:[%s5 + $0x38] sm:$0xff] %v2918
  %3360 = vst [vmem:[%s5 + $0x40] sm:$0xff] %v2920
  %3361 = vst [vmem:[%s5 + $0x48] sm:$0xff] %v2922
  %3362 = vst [vmem:[%s5 + $0x50] sm:$0xff] %v2924
  %3363 = vst [vmem:[%s5 + $0x58] sm:$0xff] %v2926
  %3364 = vst [vmem:[%s5 + $0x60] sm:$0xff] %v2928
  %3365 = vst.msk [vmem:[%s5 + $0x68] sm:$0xff] %vm3357, %v2930
  %3366 = vst [vmem:[%s5 + $0x70] sm:$0xff] %v2932
  %3367 = vst [vmem:[%s5 + $0x78] sm:$0xff] %v2934
  %3368 = vst [vmem:[%s5 + $0x80] sm:$0xff] %v2936
  %3369 = vst [vmem:[%s5 + $0x88] sm:$0xff] %v2938
  %3370 = vst [vmem:[%s5 + $0x90] sm:$0xff] %v2940
  %3371 = vst [vmem:[%s5 + $0x98] sm:$0xff] %v2942
  %3372 = vst.msk [vmem:[%s5 + $0xa0] sm:$0xff] %vm3357, %v2944
  %3373 = vst [vmem:[%s5 + $0xa8] sm:$0xff] %v2946
  %3374 = vst [vmem:[%s5 + $0xb0] sm:$0xff] %v2948
  %3375 = vst [vmem:[%s5 + $0xb8] sm:$0xff] %v2950
  %3376 = vst [vmem:[%s5 + $0xc0] sm:$0xff] %v2952
  %3377 = vst [vmem:[%s5 + $0xc8] sm:$0xff] %v2954
  %3378 = vst [vmem:[%s5 + $0xd0] sm:$0xff] %v2956
  %3379 = vst.msk [vmem:[%s5 + $0xd8] sm:$0xff] %vm3357, %v2958
  %3380 = vst [vmem:[%s5 + $0xe0] sm:$0xff] %v2960
  %3381 = vst [vmem:[%s5 + $0xe8] sm:$0xff] %v2962
  %3382 = vst [vmem:[%s5 + $0xf0] sm:$0xff] %v2964
  %3383 = vst [vmem:[%s5 + $0xf8] sm:$0xff] %v2966
  %3384 = vst [vmem:[%s5 + $0x100] sm:$0xff] %v2968
  %3385 = vst [vmem:[%s5 + $0x108] sm:$0xff] %v2970
  %3386 = vst.msk [vmem:[%s5 + $0x110] sm:$0xff] %vm3357, %v2972
  %3387 = vst [vmem:[%s5 + $0x118] sm:$0xff] %v2974
  %3388 = vst [vmem:[%s5 + $0x120] sm:$0xff] %v2976
  %3389 = vst [vmem:[%s5 + $0x128] sm:$0xff] %v2978
  %3390 = vst [vmem:[%s5 + $0x130] sm:$0xff] %v2980
  %3391 = vst [vmem:[%s5 + $0x138] sm:$0xff] %v2982
  %3392 = vst [vmem:[%s5 + $0x140] sm:$0xff] %v2984
  %3393 = vst.msk [vmem:[%s5 + $0x148] sm:$0xff] %vm3357, %v2986
  %3394 = vst [vmem:[%s5 + $0x150] sm:$0xff] %v2988
  %3395 = vst [vmem:[%s5 + $0x158] sm:$0xff] %v2990
  %3396 = vst [vmem:[%s5 + $0x160] sm:$0xff] %v2992
  %3397 = vst [vmem:[%s5 + $0x168] sm:$0xff] %v2994
  %3398 = vst [vmem:[%s5 + $0x170] sm:$0xff] %v2996
  %3399 = vst [vmem:[%s5 + $0x178] sm:$0xff] %v2998
  %3400 = vst.msk [vmem:[%s5 + $0x180] sm:$0xff] %vm3357, %v3000
  %3401 = vst [vmem:[%s5 + $0x188] sm:$0xff] %v3002
  %3402 = vst [vmem:[%s5 + $0x190] sm:$0xff] %v3004
  %3403 = vst [vmem:[%s5 + $0x198] sm:$0xff] %v3006
  %3404 = vst [vmem:[%s5 + $0x1a0] sm:$0xff] %v3008
  %3405 = vst [vmem:[%s5 + $0x1a8] sm:$0xff] %v3010
  %3406 = vst [vmem:[%s5 + $0x1b0] sm:$0xff] %v3012
  %3407 = vst.msk [vmem:[%s5 + $0x1b8] sm:$0xff] %vm3357, %v3014
  %3408 = vst [vmem:[%s5 + $0x1c0] sm:$0xff] %v3016
  %3409 = vst [vmem:[%s5 + $0x1c8] sm:$0xff] %v3018
  %3410 = vst [vmem:[%s5 + $0x1d0] sm:$0xff] %v3020
  %3411 = vst [vmem:[%s5 + $0x1d8] sm:$0xff] %v3022
  %3412 = vst [vmem:[%s5 + $0x1e0] sm:$0xff] %v3024
  %3413 = vst [vmem:[%s5 + $0x1e8] sm:$0xff] %v3026
  %3414 = vst.msk [vmem:[%s5 + $0x1f0] sm:$0xff] %vm3357, %v3028
  %3415 = vst [vmem:[%s5 + $0x1f8] sm:$0xff] %v3030
  %3416 = vst [vmem:[%s5 + $0x200] sm:$0xff] %v3032
  %3417 = vst [vmem:[%s5 + $0x208] sm:$0xff] %v3034
  %3418 = vst [vmem:[%s5 + $0x210] sm:$0xff] %v3036
  %3419 = vst [vmem:[%s5 + $0x218] sm:$0xff] %v3038
  %3420 = vst [vmem:[%s5 + $0x220] sm:$0xff] %v3040
  %3421 = vst.msk [vmem:[%s5 + $0x228] sm:$0xff] %vm3357, %v3042
  %3422 = vst [vmem:[%s5 + $0x230] sm:$0xff] %v3044
  %3423 = vst [vmem:[%s5 + $0x238] sm:$0xff] %v3046
  %3424 = vst [vmem:[%s5 + $0x240] sm:$0xff] %v3048
  %3425 = vst [vmem:[%s5 + $0x248] sm:$0xff] %v3050
  %3426 = vst [vmem:[%s5 + $0x250] sm:$0xff] %v3052
  %3427 = vst [vmem:[%s5 + $0x258] sm:$0xff] %v3054
  %3428 = vst.msk [vmem:[%s5 + $0x260] sm:$0xff] %vm3357, %v3056
  %3429 = vst [vmem:[%s5 + $0x268] sm:$0xff] %v3058
  %3430 = vst [vmem:[%s5 + $0x270] sm:$0xff] %v3060
  %3431 = vst [vmem:[%s5 + $0x278] sm:$0xff] %v3062
  %3432 = vst [vmem:[%s5 + $0x280] sm:$0xff] %v3064
  %3433 = vst [vmem:[%s5 + $0x288] sm:$0xff] %v3066
  %3434 = vst [vmem:[%s5 + $0x290] sm:$0xff] %v3068
  %3435 = vst.msk [vmem:[%s5 + $0x298] sm:$0xff] %vm3357, %v3070
  %3436 = vst [vmem:[%s5 + $0x2a0] sm:$0xff] %v3072
  %3437 = vst [vmem:[%s5 + $0x2a8] sm:$0xff] %v3074
  %3438 = vst [vmem:[%s5 + $0x2b0] sm:$0xff] %v3076
  %3439 = vst [vmem:[%s5 + $0x2b8] sm:$0xff] %v3078
  %3440 = vst [vmem:[%s5 + $0x2c0] sm:$0xff] %v3080
  %3441 = vst [vmem:[%s5 + $0x2c8] sm:$0xff] %v3082
  %3442 = vst.msk [vmem:[%s5 + $0x2d0] sm:$0xff] %vm3357, %v3084
  %3443 = vst [vmem:[%s5 + $0x2d8] sm:$0xff] %v3086
  %3444 = vst [vmem:[%s5 + $0x2e0] sm:$0xff] %v3088
  %3445 = vst [vmem:[%s5 + $0x2e8] sm:$0xff] %v3090
  %3446 = vst [vmem:[%s5 + $0x2f0] sm:$0xff] %v3092
  %3447 = vst [vmem:[%s5 + $0x2f8] sm:$0xff] %v3094
  %3448 = vst [vmem:[%s5 + $0x300] sm:$0xff] %v3096
  %3449 = vst.msk [vmem:[%s5 + $0x308] sm:$0xff] %vm3357, %v3098
  %3450 = vst [vmem:[%s5 + $0x310] sm:$0xff] %v3100
  %3451 = vst [vmem:[%s5 + $0x318] sm:$0xff] %v3102
  %3452 = vst [vmem:[%s5 + $0x320] sm:$0xff] %v3104
  %3453 = vst [vmem:[%s5 + $0x328] sm:$0xff] %v3106
  %3454 = vst [vmem:[%s5 + $0x330] sm:$0xff] %v3108
  %3455 = vst [vmem:[%s5 + $0x338] sm:$0xff] %v3110
  %3456 = vst.msk [vmem:[%s5 + $0x340] sm:$0xff] %vm3357, %v3112
  %3457 = vst [vmem:[%s5 + $0x348] sm:$0xff] %v3114
  %3458 = vst [vmem:[%s5 + $0x350] sm:$0xff] %v3116
  %3459 = vst [vmem:[%s5 + $0x358] sm:$0xff] %v3118
  %3460 = vst [vmem:[%s5 + $0x360] sm:$0xff] %v3120
  %3461 = vst [vmem:[%s5 + $0x368] sm:$0xff] %v3122
  %3462 = vst [vmem:[%s5 + $0x370] sm:$0xff] %v3124
  %3463 = vst.msk [vmem:[%s5 + $0x378] sm:$0xff] %vm3357, %v3126
  %3464 = vst [vmem:[%s5 + $0x380] sm:$0xff] %v3128
  %3465 = vst [vmem:[%s5 + $0x388] sm:$0xff] %v3130
  %3466 = vst [vmem:[%s5 + $0x390] sm:$0xff] %v3132
  %3467 = vst [vmem:[%s5 + $0x398] sm:$0xff] %v3134
  %3468 = vst [vmem:[%s5 + $0x3a0] sm:$0xff] %v3136
  %3469 = vst [vmem:[%s5 + $0x3a8] sm:$0xff] %v3138
  %3470 = vst.msk [vmem:[%s5 + $0x3b0] sm:$0xff] %vm3357, %v3140
  %3471 = vst [vmem:[%s5 + $0x3b8] sm:$0xff] %v3142
  %3472 = vst [vmem:[%s5 + $0x3c0] sm:$0xff] %v3144
  %3473 = vst [vmem:[%s5 + $0x3c8] sm:$0xff] %v3146
  %3474 = vst [vmem:[%s5 + $0x3d0] sm:$0xff] %v3148
  %3475 = vst [vmem:[%s5 + $0x3d8] sm:$0xff] %v3150
  %3476 = vst [vmem:[%s5 + $0x3e0] sm:$0xff] %v3152
  %3477 = vst.msk [vmem:[%s5 + $0x3e8] sm:$0xff] %vm3357, %v3154
  %3478 = vst [vmem:[%s5 + $0x3f0] sm:$0xff] %v3156
  %3479 = vst [vmem:[%s5 + $0x3f8] sm:$0xff] %v3158
  %3480 = vst [vmem:[%s5 + $0x400] sm:$0xff] %v3160
  %3481 = vst [vmem:[%s5 + $0x408] sm:$0xff] %v3162
  %3482 = vst [vmem:[%s5 + $0x410] sm:$0xff] %v3164
  %3483 = vst [vmem:[%s5 + $0x418] sm:$0xff] %v3166
  %3484 = vst.msk [vmem:[%s5 + $0x420] sm:$0xff] %vm3357, %v3168
  %3485 = vst [vmem:[%s5 + $0x428] sm:$0xff] %v3170
  %3486 = vst [vmem:[%s5 + $0x430] sm:$0xff] %v3172
  %3487 = vst [vmem:[%s5 + $0x438] sm:$0xff] %v3174
  %3488 = vst [vmem:[%s5 + $0x440] sm:$0xff] %v3176
  %3489 = vst [vmem:[%s5 + $0x448] sm:$0xff] %v3178
  %3490 = vst [vmem:[%s5 + $0x450] sm:$0xff] %v3180
  %3491 = vst.msk [vmem:[%s5 + $0x458] sm:$0xff] %vm3357, %v3182
  %3492 = vst [vmem:[%s5 + $0x460] sm:$0xff] %v3184
  %3493 = vst [vmem:[%s5 + $0x468] sm:$0xff] %v3186
  %3494 = vst [vmem:[%s5 + $0x470] sm:$0xff] %v3188
  %3495 = vst [vmem:[%s5 + $0x478] sm:$0xff] %v3190
  %3496 = vst [vmem:[%s5 + $0x480] sm:$0xff] %v3192
  %3497 = vst [vmem:[%s5 + $0x488] sm:$0xff] %v3194
  %3498 = vst.msk [vmem:[%s5 + $0x490] sm:$0xff] %vm3357, %v3196
  %3499 = vst [vmem:[%s5 + $0x498] sm:$0xff] %v3198
  %3500 = vst [vmem:[%s5 + $0x4a0] sm:$0xff] %v3200
  %3501 = vst [vmem:[%s5 + $0x4a8] sm:$0xff] %v3202
  %3502 = vst [vmem:[%s5 + $0x4b0] sm:$0xff] %v3204
  %3503 = vst [vmem:[%s5 + $0x4b8] sm:$0xff] %v3206
  %3504 = vst [vmem:[%s5 + $0x4c0] sm:$0xff] %v3208
  %3505 = vst.msk [vmem:[%s5 + $0x4c8] sm:$0xff] %vm3357, %v3210
  %3506 = vst [vmem:[%s5 + $0x4d0] sm:$0xff] %v3212
  %3507 = vst [vmem:[%s5 + $0x4d8] sm:$0xff] %v3214
  %3508 = vst [vmem:[%s5 + $0x4e0] sm:$0xff] %v3216
  %3509 = vst [vmem:[%s5 + $0x4e8] sm:$0xff] %v3218
  %3510 = vst [vmem:[%s5 + $0x4f0] sm:$0xff] %v3220
  %3511 = vst [vmem:[%s5 + $0x4f8] sm:$0xff] %v3222
  %3512 = vst.msk [vmem:[%s5 + $0x500] sm:$0xff] %vm3357, %v3224
  %3513 = vst [vmem:[%s5 + $0x508] sm:$0xff] %v3226
  %3514 = vst [vmem:[%s5 + $0x510] sm:$0xff] %v3228
  %3515 = vst [vmem:[%s5 + $0x518] sm:$0xff] %v3230
  %3516 = vst [vmem:[%s5 + $0x520] sm:$0xff] %v3232
  %3517 = vst [vmem:[%s5 + $0x528] sm:$0xff] %v3234
  %3518 = vst [vmem:[%s5 + $0x530] sm:$0xff] %v3236
  %3519 = vst.msk [vmem:[%s5 + $0x538] sm:$0xff] %vm3357, %v3238
  %3520 = vst [vmem:[%s5 + $0x540] sm:$0xff] %v3240
  %3521 = vst [vmem:[%s5 + $0x548] sm:$0xff] %v3242
  %3522 = vst [vmem:[%s5 + $0x550] sm:$0xff] %v3244
  %3523 = vst [vmem:[%s5 + $0x558] sm:$0xff] %v3246
  %3524 = vst [vmem:[%s5 + $0x560] sm:$0xff] %v3248
  %3525 = vst [vmem:[%s5 + $0x568] sm:$0xff] %v3250
  %3526 = vst.msk [vmem:[%s5 + $0x570] sm:$0xff] %vm3357, %v3252
  %3527 = vst [vmem:[%s5 + $0x578] sm:$0xff] %v3254
  %3528 = vst [vmem:[%s5 + $0x580] sm:$0xff] %v3256
  %3529 = vst [vmem:[%s5 + $0x588] sm:$0xff] %v3258
  %3530 = vst [vmem:[%s5 + $0x590] sm:$0xff] %v3260
  %3531 = vst [vmem:[%s5 + $0x598] sm:$0xff] %v3262
  %3532 = vst [vmem:[%s5 + $0x5a0] sm:$0xff] %v3264
  %3533 = vst.msk [vmem:[%s5 + $0x5a8] sm:$0xff] %vm3357, %v3266
  %3534 = vst [vmem:[%s5 + $0x5b0] sm:$0xff] %v3268
  %3535 = vst [vmem:[%s5 + $0x5b8] sm:$0xff] %v3270
  %3536 = vst [vmem:[%s5 + $0x5c0] sm:$0xff] %v3272
  %3537 = vst [vmem:[%s5 + $0x5c8] sm:$0xff] %v3274
  %3538 = vst [vmem:[%s5 + $0x5d0] sm:$0xff] %v3276
  %3539 = vst [vmem:[%s5 + $0x5d8] sm:$0xff] %v3278
  %3540 = vst.msk [vmem:[%s5 + $0x5e0] sm:$0xff] %vm3357, %v3280
  %3541 = vst [vmem:[%s5 + $0x5e8] sm:$0xff] %v3282
  %3542 = vst [vmem:[%s5 + $0x5f0] sm:$0xff] %v3284
  %3543 = vst [vmem:[%s5 + $0x5f8] sm:$0xff] %v3286
  %3544 = vst [vmem:[%s5 + $0x600] sm:$0xff] %v3288
  %3545 = vst [vmem:[%s5 + $0x608] sm:$0xff] %v3290
  %3546 = vst [vmem:[%s5 + $0x610] sm:$0xff] %v3292
  %3547 = vst.msk [vmem:[%s5 + $0x618] sm:$0xff] %vm3357, %v3294
  %3548 = vst [vmem:[%s5 + $0x620] sm:$0xff] %v3296
  %3549 = vst [vmem:[%s5 + $0x628] sm:$0xff] %v3298
  %3550 = vst [vmem:[%s5 + $0x630] sm:$0xff] %v3300
  %3551 = vst [vmem:[%s5 + $0x638] sm:$0xff] %v3302
  %3552 = vst [vmem:[%s5 + $0x640] sm:$0xff] %v3304
  %3553 = vst [vmem:[%s5 + $0x648] sm:$0xff] %v3306
  %3554 = vst.msk [vmem:[%s5 + $0x650] sm:$0xff] %vm3357, %v3308
  %3555 = vst [vmem:[%s5 + $0x658] sm:$0xff] %v3310
  %3556 = vst [vmem:[%s5 + $0x660] sm:$0xff] %v3312
  %3557 = vst [vmem:[%s5 + $0x668] sm:$0xff] %v3314
  %3558 = vst [vmem:[%s5 + $0x670] sm:$0xff] %v3316
  %3559 = vst [vmem:[%s5 + $0x678] sm:$0xff] %v3318
  %3560 = vst [vmem:[%s5 + $0x680] sm:$0xff] %v3320
  %3561 = vst.msk [vmem:[%s5 + $0x688] sm:$0xff] %vm3357, %v3322
  %3562 = vst [vmem:[%s5 + $0x690] sm:$0xff] %v3324
  %3563 = vst [vmem:[%s5 + $0x698] sm:$0xff] %v3326
  %3564 = vst [vmem:[%s5 + $0x6a0] sm:$0xff] %v3328
  %3565 = vst [vmem:[%s5 + $0x6a8] sm:$0xff] %v3330
  %3566 = vst [vmem:[%s5 + $0x6b0] sm:$0xff] %v3332
  %3567 = vst [vmem:[%s5 + $0x6b8] sm:$0xff] %v3334
  %3568 = vst.msk [vmem:[%s5 + $0x6c0] sm:$0xff] %vm3357, %v3336
  %3569 = vst [vmem:[%s5 + $0x6c8] sm:$0xff] %v3338
  %3570 = vst [vmem:[%s5 + $0x6d0] sm:$0xff] %v3340
  %3571 = vst [vmem:[%s5 + $0x6d8] sm:$0xff] %v3342
  %3572 = vst [vmem:[%s5 + $0x6e0] sm:$0xff] %v3344
  %3573 = vst [vmem:[%s5 + $0x6e8] sm:$0xff] %v3346
  %3574 = vst [vmem:[%s5 + $0x6f0] sm:$0xff] %v3348
  %3575 = vst.msk [vmem:[%s5 + $0x6f8] sm:$0xff] %vm3357, %v3350
  // Predicated region
  $region22: #{_vae_decoder_call.1} parent=0 // pred_check
    _
  $region23: #{_vae_decoder_call.1} parent=0 // pred_check_branch
    %3577 = sbr.rel (0) target = $region25
  $region24: #{_vae_decoder_call.1} parent=0 // pred_region
    _
  $region25: #{_vae_decoder_call.1} parent=0 // pred_fallthru
    _
  // Predicated region
  $region26: #{_vae_decoder_call.1} parent=0 // pred_check
    _
  $region27: #{_vae_decoder_call.1} parent=0 // pred_check_branch
    %3579 = sbr.rel (0) target = $region29
  $region28: #{_vae_decoder_call.1} parent=0 // pred_region
    _
  $region29: #{_vae_decoder_call.1} parent=0 // pred_fallthru
    _

</llo_original>
